<compile_context>
chip_gen: v7x
topology: tpu7x:2x2x1
jax: 0.10.0
libtpu: 0.0.40
codegen_flags: <defaults>
</compile_context>

<pallas_src>
import functools

import jax
import jax.numpy as jnp
from jax.experimental import pallas as pl
from jax.experimental.pallas import tpu as pltpu

# ---- small-scale "bert-base-chinese"-like config (synthetic weights) ----
VOCAB       = 100
TYPE_VOCAB  = 2
MAX_POS     = 64
HIDDEN      = 32
NUM_HEADS   = 2
HEAD_DIM    = HIDDEN // NUM_HEADS
INTER       = 64
NUM_LAYERS  = 2
NUM_CLASSES = 2
LN_EPS      = 1e-12
LANE        = 128       # lane-dense padded logits width; wrapper slices [:, :2]
BATCH_TILE  = 1         # sequences per grid step (raise to >=16 at scale to fill sublanes)


def _layer_norm(x, gamma, beta):
    mu = jnp.mean(x, axis=-1, keepdims=True)
    var = jnp.mean((x - mu) ** 2, axis=-1, keepdims=True)
    return (x - mu) * jax.lax.rsqrt(var + LN_EPS) * gamma + beta


# --------------------------- fused kernel ---------------------------

def bert_fused_kernel(tok_ref, seg_ref, amask_ref,
                      wemb_ref, semb_ref, pos_ref, emb_g_ref, emb_b_ref,
                      wqkv_ref, bqkv_ref, wo_ref, bo_ref, g1_ref, be1_ref,
                      w1_ref, b1_ref, w2_ref, b2_ref, g2_ref, be2_ref,
                      wd_ref, bd_ref,
                      logits_ref,
                      *, batch_tile, seq):
    """One grid step = BATCH_TILE sequences, full BERT forward.

    tok_ref/seg_ref : (BT, S, 1) int32   token / segment ids
    amask_ref       : (BT, 1, S) f32     additive key mask (0 / -10000)
    wemb_ref        : (VOCAB, H) bf16    word-embedding table
    semb_ref        : (2, H) f32, pos_ref: (S, H) f32
    wqkv_ref        : (L, H, 3H) bf16    fused Q|K|V weights, bqkv_ref: (L, 1, 3H) f32
    wo_ref          : (L, NH, H, H) bf16 output projection with non-head rows zeroed
    w1/w2           : (L, H, INTER)/(L, INTER, H) bf16
    wd_ref/bd_ref   : (H, 128) bf16 / (1, 128) f32  lane-dense padded classifier
    logits_ref      : (BT, 1, 128) f32
    """
    BT, S = batch_tile, seq
    H, NH, HD = HIDDEN, NUM_HEADS, HEAD_DIM
    R = BT * S
    scale = 1.0 / (HD ** 0.5)
    bf16 = jnp.bfloat16

    # --- embeddings folded into the kernel (one-hot matmul, no XLA gather) ---
    tok = tok_ref[...].reshape(R, 1)                                       # int32
    onehot = jnp.where(
        tok == jax.lax.broadcasted_iota(jnp.int32, (R, VOCAB), 1), 1.0, 0.0
    ).astype(bf16)                                                         # (R, VOCAB)
    word = jnp.dot(onehot, wemb_ref[...], preferred_element_type=jnp.float32)  # (R, H)

    # TODO(synk): segment lookup specialised to TYPE_VOCAB == 2; general path is a
    # one-hot matmul like the word embedding above.
    segf = seg_ref[...].reshape(R, 1).astype(jnp.float32)
    segv = (1.0 - segf) * semb_ref[0:1, :] + segf * semb_ref[1:2, :]       # (R, H)

    pos = jnp.broadcast_to(pos_ref[...][None, :, :], (BT, S, H)).reshape(R, H)

    x = _layer_norm(word + segv + pos, emb_g_ref[...], emb_b_ref[...])     # (R, H) f32

    # --- hoisted above the layer loop: additive key mask & per-head lane masks ---
    amask = amask_ref[...]                                                 # (BT, 1, S)
    lane = jax.lax.broadcasted_iota(jnp.int32, (1, 1, H), 2)
    head_masks = [jnp.where((lane >= h * HD) & (lane < (h + 1) * HD), 1.0, 0.0)
                  for h in range(NH)]                                      # (1, 1, H) f32

    # --- encoder layers: static unroll, activations stay in vregs/VMEM ---
    for l in range(NUM_LAYERS):
        # fused Q|K|V projection: ONE MXU matmul per layer (bf16 in, f32 accumulate)
        qkv = jnp.dot(x.astype(bf16), wqkv_ref[l],
                      preferred_element_type=jnp.float32) + bqkv_ref[l]    # (R, 3H)
        q3 = qkv[:, 0 * H:1 * H].reshape(BT, S, H)
        k3 = qkv[:, 1 * H:2 * H].reshape(BT, S, H)
        v3 = qkv[:, 2 * H:3 * H].reshape(BT, S, H)
        kb = k3.astype(bf16)
        vb = v3.astype(bf16)

        attn = jnp.zeros((R, H), jnp.float32)
        for h in range(NH):
            # Lane-masking q restricts the contraction to head h's lanes, so the
            # per-head split needs no 16-lane slice/concat relayouts.
            qh = (q3 * head_masks[h]).astype(bf16)
            s = jnp.einsum('bqd,bkd->bqk', qh, kb,
                           preferred_element_type=jnp.float32) * scale     # (BT, S, S)
            s = s + amask
            s = s - jnp.max(s, axis=-1, keepdims=True)
            p = jnp.exp(s)
            # approx reciprocal (EUP slot): ~1e-3 rel. error, harmless for argmax
            p = p * pl.reciprocal(jnp.sum(p, axis=-1, keepdims=True), approx=True)
            ctx = jnp.einsum('bqk,bkd->bqd', p.astype(bf16), vb,
                             preferred_element_type=jnp.float32)           # (BT, S, H)
            # wo_ref[l, h] has rows outside head h zeroed, so projecting the full-H
            # context is exactly ctx_h @ Wo[h]: the head merge needs no concat.
            attn = attn + jnp.dot(ctx.reshape(R, H).astype(bf16), wo_ref[l, h],
                                  preferred_element_type=jnp.float32)
        attn = attn + bo_ref[l]
        x = _layer_norm(x + attn, g1_ref[l], be1_ref[l])

        # --- feed-forward ---
        ff = jnp.dot(x.astype(bf16), w1_ref[l],
                     preferred_element_type=jnp.float32) + b1_ref[l]
        # TODO(synk): bert4torch/HF BERT uses exact erf-GELU; tanh approximation is
        # kept for robust Mosaic lowering (negligible numeric drift).
        ff = jax.nn.gelu(ff, approximate=True)
        ff = jnp.dot(ff.astype(bf16), w2_ref[l],
                     preferred_element_type=jnp.float32) + b2_ref[l]
        x = _layer_norm(x + ff, g2_ref[l], be2_ref[l])

    # pool_method='cls': [CLS] row. Dropout(0.1) is identity at inference; the BERT
    # pooler output is discarded by get_pool_emb(..., 'cls'), so it is not computed.
    cls = x.reshape(BT, S, H)[:, 0, :]                                     # (BT, H)
    logit = jnp.dot(cls.astype(bf16), wd_ref[...],
                    preferred_element_type=jnp.float32) + bd_ref[...]      # (BT, LANE)
    logits_ref[...] = logit[:, None, :]


# --------------------------- wrapper ---------------------------

def _resident(arr):
    """Full-array block with a constant index map: copied into VMEM once and kept
    resident across the batch grid (weights / tables)."""
    ndim = arr.ndim
    return pl.BlockSpec(arr.shape, lambda b, _n=ndim: (0,) * _n)


def bert_forward(packed, token_ids, segment_ids):
    B, S = token_ids.shape
    assert B % BATCH_TILE == 0
    grid = (B // BATCH_TILE,)

    tok_col = token_ids.astype(jnp.int32).reshape(B, S, 1)
    seg_col = segment_ids.astype(jnp.int32).reshape(B, S, 1)
    # Additive key mask (B, 1, S): built once here (one cheap XLA op), broadcast
    # inside the kernel and hoisted above the layer loop.
    amask = ((token_ids <= 0).astype(jnp.float32) * -10000.0).reshape(B, 1, S)

    weights = [packed['word_emb'], packed['seg_emb'], packed['pos_emb'][:S],
               packed['emb_ln_g'], packed['emb_ln_b'],
               packed['wqkv'], packed['bqkv'], packed['wo_head'], packed['bo'],
               packed['g1'], packed['be1'], packed['w1'], packed['b1'],
               packed['w2'], packed['b2'], packed['g2'], packed['be2'],
               packed['cls_w_pad'], packed['cls_b_pad']]

    kernel = functools.partial(bert_fused_kernel, batch_tile=BATCH_TILE, seq=S)
    batched = lambda blk: pl.BlockSpec(blk, lambda b: (b, 0, 0))

    logits_pad = pl.pallas_call(
        kernel,
        grid=grid,
        out_shape=jax.ShapeDtypeStruct((B, 1, LANE), jnp.float32),
        in_specs=[batched((BATCH_TILE, S, 1)),
                  batched((BATCH_TILE, S, 1)),
                  batched((BATCH_TILE, 1, S))]
                 + [_resident(w) for w in weights],
        out_specs=pl.BlockSpec((BATCH_TILE, 1, LANE), lambda b: (b, 0, 0)),
        compiler_params=pltpu.CompilerParams(
            dimension_semantics=("parallel",)),       # both TCs on v7x
    )(tok_col, seg_col, amask, *weights)
    return logits_pad[:, 0, :NUM_CLASSES]                                  # (B, 2)


# --------------------------- params ---------------------------

def init_params(seed=0):
    keys = iter(jax.random.split(jax.random.PRNGKey(seed), 64))

    def nrm(shape, scale=0.02):
        return (scale * jax.random.normal(next(keys), shape)).astype(jnp.float32)

    params = {
        'word_emb': nrm((VOCAB, HIDDEN)),
        'seg_emb':  nrm((TYPE_VOCAB, HIDDEN)),
        'pos_emb':  nrm((MAX_POS, HIDDEN)),
        'emb_ln_g': jnp.ones((1, HIDDEN), jnp.float32),
        'emb_ln_b': jnp.zeros((1, HIDDEN), jnp.float32),
        'layers': [],
        'pool_w': nrm((HIDDEN, HIDDEN)),                 # present in the PyTorch model,
        'pool_b': jnp.zeros((1, HIDDEN), jnp.float32),   # but unused for 'cls' pooling
        'cls_w':  nrm((HIDDEN, NUM_CLASSES)),
        'cls_b':  jnp.zeros((1, NUM_CLASSES), jnp.float32),
    }
    for _ in range(NUM_LAYERS):
        params['layers'].append({
            'wq': nrm((HIDDEN, HIDDEN)), 'bq': jnp.zeros((1, HIDDEN), jnp.float32),
            'wk': nrm((HIDDEN, HIDDEN)), 'bk': jnp.zeros((1, HIDDEN), jnp.float32),
            'wv': nrm((HIDDEN, HIDDEN)), 'bv': jnp.zeros((1, HIDDEN), jnp.float32),
            'wo': nrm((HIDDEN, HIDDEN)), 'bo': jnp.zeros((1, HIDDEN), jnp.float32),
            'g1': jnp.ones((1, HIDDEN), jnp.float32), 'be1': jnp.zeros((1, HIDDEN), jnp.float32),
            'w1': nrm((HIDDEN, INTER)), 'b1': jnp.zeros((1, INTER), jnp.float32),
            'w2': nrm((INTER, HIDDEN)), 'b2': jnp.zeros((1, HIDDEN), jnp.float32),
            'g2': jnp.ones((1, HIDDEN), jnp.float32), 'be2': jnp.zeros((1, HIDDEN), jnp.float32),
        })
    return params


def pack_params(params):
    """Stack per-layer weights along a leading layer axis, fuse Q|K|V, pre-split the
    output projection per head (non-head rows zeroed), cast matmul weights to bf16,
    and zero-pad the classifier to a 128-wide lane-dense output."""
    bf16 = jnp.bfloat16
    layers = params['layers']

    wqkv = jnp.stack([jnp.concatenate([lp['wq'], lp['wk'], lp['wv']], axis=1)
                      for lp in layers]).astype(bf16)                       # (L, H, 3H)
    bqkv = jnp.stack([jnp.concatenate([lp['bq'], lp['bk'], lp['bv']], axis=1)
                      for lp in layers])                                    # (L, 1, 3H)

    row = jnp.arange(HIDDEN)[:, None]
    def head_split(wo):                                                     # (NH, H, H)
        return jnp.stack([jnp.where((row >= h * HEAD_DIM) & (row < (h + 1) * HEAD_DIM),
                                    wo, 0.0) for h in range(NUM_HEADS)])
    wo_head = jnp.stack([head_split(lp['wo']) for lp in layers]).astype(bf16)  # (L, NH, H, H)

    stk = lambda name: jnp.stack([lp[name] for lp in layers])
    return {
        'word_emb': params['word_emb'].astype(bf16),
        'seg_emb':  params['seg_emb'],
        'pos_emb':  params['pos_emb'],
        'emb_ln_g': params['emb_ln_g'],
        'emb_ln_b': params['emb_ln_b'],
        'wqkv': wqkv, 'bqkv': bqkv,
        'wo_head': wo_head, 'bo': stk('bo'),
        'g1': stk('g1'), 'be1': stk('be1'),
        'w1': stk('w1').astype(bf16), 'b1': stk('b1'),
        'w2': stk('w2').astype(bf16), 'b2': stk('b2'),
        'g2': stk('g2'), 'be2': stk('be2'),
        'cls_w_pad': jnp.zeros((HIDDEN, LANE), jnp.float32)
                        .at[:, :NUM_CLASSES].set(params['cls_w']).astype(bf16),
        'cls_b_pad': jnp.zeros((1, LANE), jnp.float32)
                        .at[:, :NUM_CLASSES].set(params['cls_b']),
    }


# --------------------------- main ---------------------------

if __name__ == "__main__":
    B, S = 2, 8
    key = jax.random.PRNGKey(0)
    k_tok, _ = jax.random.split(key)
    token_ids = jax.random.randint(k_tok, (B, S), 1, VOCAB).astype(jnp.int32)
    # pad the tail of the second example with 0 to exercise the attention mask
    token_ids = token_ids.at[1, 6:].set(0)
    segment_ids = jnp.zeros((B, S), dtype=jnp.int32)

    packed = pack_params(init_params(0))

    fwd = jax.jit(lambda t, s: bert_forward(packed, t, s))
    logits = fwd(token_ids, segment_ids)
    jax.block_until_ready(logits)
    assert logits.shape == (B, NUM_CLASSES) and logits.dtype == jnp.float32
    print("KERNEL_OK")
</pallas_src>

<mosaic_0001>
module attributes {stable_mosaic.version = 11 : i64} {
  func.func @bert_fused_kernel(%arg0: i32, %arg1: memref<1x8x1xi32, #tpu.memory_space<vmem>>, %arg2: memref<1x8x1xi32, #tpu.memory_space<vmem>>, %arg3: memref<1x1x8xf32, #tpu.memory_space<vmem>>, %arg4: memref<100x32xbf16, #tpu.memory_space<vmem>>, %arg5: memref<2x32xf32, #tpu.memory_space<vmem>>, %arg6: memref<8x32xf32, #tpu.memory_space<vmem>>, %arg7: memref<1x32xf32, #tpu.memory_space<vmem>>, %arg8: memref<1x32xf32, #tpu.memory_space<vmem>>, %arg9: memref<2x32x96xbf16, #tpu.memory_space<vmem>>, %arg10: memref<2x1x96xf32, #tpu.memory_space<vmem>>, %arg11: memref<2x2x32x32xbf16, #tpu.memory_space<vmem>>, %arg12: memref<2x1x32xf32, #tpu.memory_space<vmem>>, %arg13: memref<2x1x32xf32, #tpu.memory_space<vmem>>, %arg14: memref<2x1x32xf32, #tpu.memory_space<vmem>>, %arg15: memref<2x32x64xbf16, #tpu.memory_space<vmem>>, %arg16: memref<2x1x64xf32, #tpu.memory_space<vmem>>, %arg17: memref<2x64x32xbf16, #tpu.memory_space<vmem>>, %arg18: memref<2x1x32xf32, #tpu.memory_space<vmem>>, %arg19: memref<2x1x32xf32, #tpu.memory_space<vmem>>, %arg20: memref<2x1x32xf32, #tpu.memory_space<vmem>>, %arg21: memref<32x128xbf16, #tpu.memory_space<vmem>>, %arg22: memref<1x128xf32, #tpu.memory_space<vmem>>, %arg23: memref<1x1x128xf32, #tpu.memory_space<vmem>>) attributes {dimension_semantics = [#tpu.dimension_semantics<parallel>], iteration_bounds = array<i64: 2>, scalar_prefetch = 0 : i64, scratch_operands = 0 : i64, tpu.core_type = #tpu.core_type<tc>, window_params = [{transform_indices = @transform_0, window_bounds = array<i64: 1, 8, 1>}, {transform_indices = @transform_1, window_bounds = array<i64: 1, 8, 1>}, {transform_indices = @transform_2, window_bounds = array<i64: 1, 1, 8>}, {pipeline_mode = #tpu.pipeline_mode<synchronous>, transform_indices = @transform_3, window_bounds = array<i64: 100, 32>}, {pipeline_mode = #tpu.pipeline_mode<synchronous>, transform_indices = @transform_4, window_bounds = array<i64: 2, 32>}, {pipeline_mode = #tpu.pipeline_mode<synchronous>, transform_indices = @transform_5, window_bounds = array<i64: 8, 32>}, {pipeline_mode = #tpu.pipeline_mode<synchronous>, transform_indices = @transform_6, window_bounds = array<i64: 1, 32>}, {pipeline_mode = #tpu.pipeline_mode<synchronous>, transform_indices = @transform_7, window_bounds = array<i64: 1, 32>}, {pipeline_mode = #tpu.pipeline_mode<synchronous>, transform_indices = @transform_8, window_bounds = array<i64: 2, 32, 96>}, {pipeline_mode = #tpu.pipeline_mode<synchronous>, transform_indices = @transform_9, window_bounds = array<i64: 2, 1, 96>}, {pipeline_mode = #tpu.pipeline_mode<synchronous>, transform_indices = @transform_10, window_bounds = array<i64: 2, 2, 32, 32>}, {pipeline_mode = #tpu.pipeline_mode<synchronous>, transform_indices = @transform_11, window_bounds = array<i64: 2, 1, 32>}, {pipeline_mode = #tpu.pipeline_mode<synchronous>, transform_indices = @transform_12, window_bounds = array<i64: 2, 1, 32>}, {pipeline_mode = #tpu.pipeline_mode<synchronous>, transform_indices = @transform_13, window_bounds = array<i64: 2, 1, 32>}, {pipeline_mode = #tpu.pipeline_mode<synchronous>, transform_indices = @transform_14, window_bounds = array<i64: 2, 32, 64>}, {pipeline_mode = #tpu.pipeline_mode<synchronous>, transform_indices = @transform_15, window_bounds = array<i64: 2, 1, 64>}, {pipeline_mode = #tpu.pipeline_mode<synchronous>, transform_indices = @transform_16, window_bounds = array<i64: 2, 64, 32>}, {pipeline_mode = #tpu.pipeline_mode<synchronous>, transform_indices = @transform_17, window_bounds = array<i64: 2, 1, 32>}, {pipeline_mode = #tpu.pipeline_mode<synchronous>, transform_indices = @transform_18, window_bounds = array<i64: 2, 1, 32>}, {pipeline_mode = #tpu.pipeline_mode<synchronous>, transform_indices = @transform_19, window_bounds = array<i64: 2, 1, 32>}, {pipeline_mode = #tpu.pipeline_mode<synchronous>, transform_indices = @transform_20, window_bounds = array<i64: 32, 128>}, {pipeline_mode = #tpu.pipeline_mode<synchronous>, transform_indices = @transform_21, window_bounds = array<i64: 1, 128>}, {transform_indices = @transform_22, window_bounds = array<i64: 1, 1, 128>}]} {
    %c0 = arith.constant 0 : index
    %c0_0 = arith.constant 0 : index
    %c0_1 = arith.constant 0 : index
    %0 = vector.load %arg1[%c0, %c0_0, %c0_1] : memref<1x8x1xi32, #tpu.memory_space<vmem>>, vector<1x8x1xi32>
    %1 = vector.shape_cast %0 : vector<1x8x1xi32> to vector<8x1xi32>
    %2 = tpu.iota {dimensions = array<i32: 1>} : vector<8x100xi32>
    %3 = vector.broadcast %1 : vector<8x1xi32> to vector<8x100xi32>
    %4 = arith.cmpi eq, %3, %2 : vector<8x100xi32>
    %cst = arith.constant 1.000000e+00 : f32
    %cst_2 = arith.constant 0.000000e+00 : f32
    %5 = vector.broadcast %cst : f32 to vector<8x100xf32>
    %6 = vector.broadcast %cst_2 : f32 to vector<8x100xf32>
    %7 = arith.select %4, %5, %6 : vector<8x100xi1>, vector<8x100xf32>
    %8 = arith.truncf %7 : vector<8x100xf32> to vector<8x100xbf16>
    %c0_3 = arith.constant 0 : index
    %c0_4 = arith.constant 0 : index
    %9 = vector.load %arg4[%c0_3, %c0_4] : memref<100x32xbf16, #tpu.memory_space<vmem>>, vector<100x32xbf16>
    %cst_5 = arith.constant dense<0.000000e+00> : vector<8x32xf32>
    %10 = tpu.matmul %8, %9, %cst_5 {dimension_numbers = #tpu.dot_dimension_numbers<[1], [0], [0], [1], [0, 0, 1, 1], [], []>} : vector<8x100xbf16>, vector<100x32xbf16>, vector<8x32xf32> -> vector<8x32xf32>
    %c0_6 = arith.constant 0 : index
    %c0_7 = arith.constant 0 : index
    %c0_8 = arith.constant 0 : index
    %11 = vector.load %arg2[%c0_6, %c0_7, %c0_8] : memref<1x8x1xi32, #tpu.memory_space<vmem>>, vector<1x8x1xi32>
    %12 = vector.shape_cast %11 : vector<1x8x1xi32> to vector<8x1xi32>
    %13 = arith.sitofp %12 : vector<8x1xi32> to vector<8x1xf32>
    %cst_9 = arith.constant 1.000000e+00 : f32
    %14 = vector.broadcast %cst_9 : f32 to vector<8x1xf32>
    %15 = arith.subf %14, %13 : vector<8x1xf32>
    %c0_10 = arith.constant 0 : index
    %c0_11 = arith.constant 0 : index
    %16 = vector.load %arg5[%c0_10, %c0_11] : memref<2x32xf32, #tpu.memory_space<vmem>>, vector<1x32xf32>
    %17 = vector.broadcast %15 : vector<8x1xf32> to vector<8x32xf32>
    %18 = vector.broadcast %16 : vector<1x32xf32> to vector<8x32xf32>
    %19 = arith.mulf %17, %18 : vector<8x32xf32>
    %c1 = arith.constant 1 : index
    %c0_12 = arith.constant 0 : index
    %20 = vector.load %arg5[%c1, %c0_12] : memref<2x32xf32, #tpu.memory_space<vmem>>, vector<1x32xf32>
    %21 = vector.broadcast %13 : vector<8x1xf32> to vector<8x32xf32>
    %22 = vector.broadcast %20 : vector<1x32xf32> to vector<8x32xf32>
    %23 = arith.mulf %21, %22 : vector<8x32xf32>
    %24 = arith.addf %19, %23 : vector<8x32xf32>
    %c0_13 = arith.constant 0 : index
    %c0_14 = arith.constant 0 : index
    %25 = vector.load %arg6[%c0_13, %c0_14] : memref<8x32xf32, #tpu.memory_space<vmem>>, vector<8x32xf32>
    %26 = vector.shape_cast %25 : vector<8x32xf32> to vector<1x8x32xf32>
    %27 = vector.shape_cast %26 : vector<1x8x32xf32> to vector<8x32xf32>
    %28 = arith.addf %10, %24 : vector<8x32xf32>
    %29 = arith.addf %28, %27 : vector<8x32xf32>
    %c0_15 = arith.constant 0 : index
    %c0_16 = arith.constant 0 : index
    %30 = vector.load %arg7[%c0_15, %c0_16] : memref<1x32xf32, #tpu.memory_space<vmem>>, vector<1x32xf32>
    %c0_17 = arith.constant 0 : index
    %c0_18 = arith.constant 0 : index
    %31 = vector.load %arg8[%c0_17, %c0_18] : memref<1x32xf32, #tpu.memory_space<vmem>>, vector<1x32xf32>
    %cst_19 = arith.constant dense<0.000000e+00> : vector<8xf32>
    %32 = vector.multi_reduction <add>, %29, %cst_19 [1] : vector<8x32xf32> to vector<8xf32>
    %33 = vector.shape_cast %32 : vector<8xf32> to vector<8x1xf32>
    %cst_20 = arith.constant 3.200000e+01 : f32
    %34 = vector.broadcast %cst_20 : f32 to vector<8x1xf32>
    %35 = arith.divf %33, %34 : vector<8x1xf32>
    %36 = vector.broadcast %35 : vector<8x1xf32> to vector<8x32xf32>
    %37 = arith.subf %29, %36 : vector<8x32xf32>
    %38 = arith.mulf %37, %37 : vector<8x32xf32>
    %cst_21 = arith.constant dense<0.000000e+00> : vector<8xf32>
    %39 = vector.multi_reduction <add>, %38, %cst_21 [1] : vector<8x32xf32> to vector<8xf32>
    %40 = vector.shape_cast %39 : vector<8xf32> to vector<8x1xf32>
    %cst_22 = arith.constant 3.200000e+01 : f32
    %41 = vector.broadcast %cst_22 : f32 to vector<8x1xf32>
    %42 = arith.divf %40, %41 : vector<8x1xf32>
    %43 = vector.broadcast %35 : vector<8x1xf32> to vector<8x32xf32>
    %44 = arith.subf %29, %43 : vector<8x32xf32>
    %cst_23 = arith.constant 9.99999996E-13 : f32
    %45 = vector.broadcast %cst_23 : f32 to vector<8x1xf32>
    %46 = arith.addf %42, %45 : vector<8x1xf32>
    %47 = math.rsqrt %46 : vector<8x1xf32>
    %48 = vector.broadcast %47 : vector<8x1xf32> to vector<8x32xf32>
    %49 = arith.mulf %44, %48 : vector<8x32xf32>
    %50 = vector.broadcast %30 : vector<1x32xf32> to vector<8x32xf32>
    %51 = arith.mulf %49, %50 : vector<8x32xf32>
    %52 = vector.broadcast %31 : vector<1x32xf32> to vector<8x32xf32>
    %53 = arith.addf %51, %52 : vector<8x32xf32>
    %c0_24 = arith.constant 0 : index
    %c0_25 = arith.constant 0 : index
    %c0_26 = arith.constant 0 : index
    %54 = vector.load %arg3[%c0_24, %c0_25, %c0_26] : memref<1x1x8xf32, #tpu.memory_space<vmem>>, vector<1x1x8xf32>
    %55 = tpu.iota {dimensions = array<i32: 2>} : vector<1x1x32xi32>
    %c0_i32 = arith.constant 0 : i32
    %56 = vector.broadcast %c0_i32 : i32 to vector<1x1x32xi32>
    %57 = arith.cmpi sge, %55, %56 : vector<1x1x32xi32>
    %c16_i32 = arith.constant 16 : i32
    %58 = vector.broadcast %c16_i32 : i32 to vector<1x1x32xi32>
    %59 = arith.cmpi slt, %55, %58 : vector<1x1x32xi32>
    %60 = arith.andi %57, %59 : vector<1x1x32xi1>
    %cst_27 = arith.constant 1.000000e+00 : f32
    %cst_28 = arith.constant 0.000000e+00 : f32
    %61 = vector.broadcast %cst_27 : f32 to vector<1x1x32xf32>
    %62 = vector.broadcast %cst_28 : f32 to vector<1x1x32xf32>
    %63 = arith.select %60, %61, %62 : vector<1x1x32xi1>, vector<1x1x32xf32>
    %c16_i32_29 = arith.constant 16 : i32
    %64 = vector.broadcast %c16_i32_29 : i32 to vector<1x1x32xi32>
    %65 = arith.cmpi sge, %55, %64 : vector<1x1x32xi32>
    %c32_i32 = arith.constant 32 : i32
    %66 = vector.broadcast %c32_i32 : i32 to vector<1x1x32xi32>
    %67 = arith.cmpi slt, %55, %66 : vector<1x1x32xi32>
    %68 = arith.andi %65, %67 : vector<1x1x32xi1>
    %cst_30 = arith.constant 1.000000e+00 : f32
    %cst_31 = arith.constant 0.000000e+00 : f32
    %69 = vector.broadcast %cst_30 : f32 to vector<1x1x32xf32>
    %70 = vector.broadcast %cst_31 : f32 to vector<1x1x32xf32>
    %71 = arith.select %68, %69, %70 : vector<1x1x32xi1>, vector<1x1x32xf32>
    %72 = arith.truncf %53 : vector<8x32xf32> to vector<8x32xbf16>
    %c0_32 = arith.constant 0 : index
    %c0_33 = arith.constant 0 : index
    %c0_34 = arith.constant 0 : index
    %73 = vector.load %arg9[%c0_32, %c0_33, %c0_34] : memref<2x32x96xbf16, #tpu.memory_space<vmem>>, vector<1x32x96xbf16>
    %74 = vector.shape_cast %73 : vector<1x32x96xbf16> to vector<32x96xbf16>
    %cst_35 = arith.constant dense<0.000000e+00> : vector<8x96xf32>
    %75 = tpu.matmul %72, %74, %cst_35 {dimension_numbers = #tpu.dot_dimension_numbers<[1], [0], [0], [1], [0, 0, 1, 1], [], []>} : vector<8x32xbf16>, vector<32x96xbf16>, vector<8x96xf32> -> vector<8x96xf32>
    %c0_36 = arith.constant 0 : index
    %c0_37 = arith.constant 0 : index
    %c0_38 = arith.constant 0 : index
    %76 = vector.load %arg10[%c0_36, %c0_37, %c0_38] : memref<2x1x96xf32, #tpu.memory_space<vmem>>, vector<1x1x96xf32>
    %77 = vector.shape_cast %76 : vector<1x1x96xf32> to vector<1x96xf32>
    %78 = vector.broadcast %77 : vector<1x96xf32> to vector<8x96xf32>
    %79 = arith.addf %75, %78 : vector<8x96xf32>
    %80 = vector.extract_strided_slice %79 {offsets = [0, 0], sizes = [8, 32], strides = [1, 1]} : vector<8x96xf32> to vector<8x32xf32>
    %81 = vector.shape_cast %80 : vector<8x32xf32> to vector<1x8x32xf32>
    %82 = vector.extract_strided_slice %79 {offsets = [0, 32], sizes = [8, 32], strides = [1, 1]} : vector<8x96xf32> to vector<8x32xf32>
    %83 = vector.shape_cast %82 : vector<8x32xf32> to vector<1x8x32xf32>
    %84 = vector.extract_strided_slice %79 {offsets = [0, 64], sizes = [8, 32], strides = [1, 1]} : vector<8x96xf32> to vector<8x32xf32>
    %85 = vector.shape_cast %84 : vector<8x32xf32> to vector<1x8x32xf32>
    %86 = arith.truncf %83 : vector<1x8x32xf32> to vector<1x8x32xbf16>
    %87 = arith.truncf %85 : vector<1x8x32xf32> to vector<1x8x32xbf16>
    %cst_39 = arith.constant 0.000000e+00 : f32
    %88 = vector.broadcast %cst_39 : f32 to vector<8x32xf32>
    %89 = vector.broadcast %63 : vector<1x1x32xf32> to vector<1x8x32xf32>
    %90 = arith.mulf %81, %89 : vector<1x8x32xf32>
    %91 = arith.truncf %90 : vector<1x8x32xf32> to vector<1x8x32xbf16>
    "tpu.trace_start"() <{level = 10 : i32, message = "bqd,bkd->bqk"}> : () -> ()
    %cst_40 = arith.constant dense<0.000000e+00> : vector<1x8x8xf32>
    %92 = tpu.matmul %91, %86, %cst_40 {dimension_numbers = #tpu.dot_dimension_numbers<[2], [2], [1], [1], [0, 0, 0, 1, 1, 1], [0], [0]>} : vector<1x8x32xbf16>, vector<1x8x32xbf16>, vector<1x8x8xf32> -> vector<1x8x8xf32>
    "tpu.trace_stop"() : () -> ()
    %cst_41 = arith.constant 2.500000e-01 : f32
    %93 = vector.broadcast %cst_41 : f32 to vector<1x8x8xf32>
    %94 = arith.mulf %92, %93 : vector<1x8x8xf32>
    %95 = vector.broadcast %54 : vector<1x1x8xf32> to vector<1x8x8xf32>
    %96 = arith.addf %94, %95 : vector<1x8x8xf32>
    %cst_42 = arith.constant dense<0xFF800000> : vector<1x8xf32>
    %97 = vector.multi_reduction <maximumf>, %96, %cst_42 [2] : vector<1x8x8xf32> to vector<1x8xf32>
    %98 = vector.shape_cast %97 : vector<1x8xf32> to vector<1x8x1xf32>
    %99 = vector.broadcast %98 : vector<1x8x1xf32> to vector<1x8x8xf32>
    %100 = arith.subf %96, %99 : vector<1x8x8xf32>
    %101 = math.exp %100 : vector<1x8x8xf32>
    %cst_43 = arith.constant dense<0.000000e+00> : vector<1x8xf32>
    %102 = vector.multi_reduction <add>, %101, %cst_43 [2] : vector<1x8x8xf32> to vector<1x8xf32>
    %103 = vector.shape_cast %102 : vector<1x8xf32> to vector<1x8x1xf32>
    %104 = tpu.reciprocal %103 {approx = true} : vector<1x8x1xf32> -> vector<1x8x1xf32>
    %105 = vector.broadcast %104 : vector<1x8x1xf32> to vector<1x8x8xf32>
    %106 = arith.mulf %101, %105 : vector<1x8x8xf32>
    %107 = arith.truncf %106 : vector<1x8x8xf32> to vector<1x8x8xbf16>
    "tpu.trace_start"() <{level = 10 : i32, message = "bqk,bkd->bqd"}> : () -> ()
    %cst_44 = arith.constant dense<0.000000e+00> : vector<1x8x32xf32>
    %108 = tpu.matmul %107, %87, %cst_44 {dimension_numbers = #tpu.dot_dimension_numbers<[2], [1], [1], [2], [0, 0, 0, 1, 1, 2], [0], [0]>} : vector<1x8x8xbf16>, vector<1x8x32xbf16>, vector<1x8x32xf32> -> vector<1x8x32xf32>
    "tpu.trace_stop"() : () -> ()
    %109 = vector.shape_cast %108 : vector<1x8x32xf32> to vector<8x32xf32>
    %110 = arith.truncf %109 : vector<8x32xf32> to vector<8x32xbf16>
    %c0_45 = arith.constant 0 : index
    %c0_46 = arith.constant 0 : index
    %c0_47 = arith.constant 0 : index
    %c0_48 = arith.constant 0 : index
    %111 = vector.load %arg11[%c0_45, %c0_46, %c0_47, %c0_48] : memref<2x2x32x32xbf16, #tpu.memory_space<vmem>>, vector<1x1x32x32xbf16>
    %112 = vector.shape_cast %111 : vector<1x1x32x32xbf16> to vector<32x32xbf16>
    %cst_49 = arith.constant dense<0.000000e+00> : vector<8x32xf32>
    %113 = tpu.matmul %110, %112, %cst_49 {dimension_numbers = #tpu.dot_dimension_numbers<[1], [0], [0], [1], [0, 0, 1, 1], [], []>} : vector<8x32xbf16>, vector<32x32xbf16>, vector<8x32xf32> -> vector<8x32xf32>
    %114 = arith.addf %88, %113 : vector<8x32xf32>
    %115 = vector.broadcast %71 : vector<1x1x32xf32> to vector<1x8x32xf32>
    %116 = arith.mulf %81, %115 : vector<1x8x32xf32>
    %117 = arith.truncf %116 : vector<1x8x32xf32> to vector<1x8x32xbf16>
    "tpu.trace_start"() <{level = 10 : i32, message = "bqd,bkd->bqk"}> : () -> ()
    %cst_50 = arith.constant dense<0.000000e+00> : vector<1x8x8xf32>
    %118 = tpu.matmul %117, %86, %cst_50 {dimension_numbers = #tpu.dot_dimension_numbers<[2], [2], [1], [1], [0, 0, 0, 1, 1, 1], [0], [0]>} : vector<1x8x32xbf16>, vector<1x8x32xbf16>, vector<1x8x8xf32> -> vector<1x8x8xf32>
    "tpu.trace_stop"() : () -> ()
    %cst_51 = arith.constant 2.500000e-01 : f32
    %119 = vector.broadcast %cst_51 : f32 to vector<1x8x8xf32>
    %120 = arith.mulf %118, %119 : vector<1x8x8xf32>
    %121 = vector.broadcast %54 : vector<1x1x8xf32> to vector<1x8x8xf32>
    %122 = arith.addf %120, %121 : vector<1x8x8xf32>
    %cst_52 = arith.constant dense<0xFF800000> : vector<1x8xf32>
    %123 = vector.multi_reduction <maximumf>, %122, %cst_52 [2] : vector<1x8x8xf32> to vector<1x8xf32>
    %124 = vector.shape_cast %123 : vector<1x8xf32> to vector<1x8x1xf32>
    %125 = vector.broadcast %124 : vector<1x8x1xf32> to vector<1x8x8xf32>
    %126 = arith.subf %122, %125 : vector<1x8x8xf32>
    %127 = math.exp %126 : vector<1x8x8xf32>
    %cst_53 = arith.constant dense<0.000000e+00> : vector<1x8xf32>
    %128 = vector.multi_reduction <add>, %127, %cst_53 [2] : vector<1x8x8xf32> to vector<1x8xf32>
    %129 = vector.shape_cast %128 : vector<1x8xf32> to vector<1x8x1xf32>
    %130 = tpu.reciprocal %129 {approx = true} : vector<1x8x1xf32> -> vector<1x8x1xf32>
    %131 = vector.broadcast %130 : vector<1x8x1xf32> to vector<1x8x8xf32>
    %132 = arith.mulf %127, %131 : vector<1x8x8xf32>
    %133 = arith.truncf %132 : vector<1x8x8xf32> to vector<1x8x8xbf16>
    "tpu.trace_start"() <{level = 10 : i32, message = "bqk,bkd->bqd"}> : () -> ()
    %cst_54 = arith.constant dense<0.000000e+00> : vector<1x8x32xf32>
    %134 = tpu.matmul %133, %87, %cst_54 {dimension_numbers = #tpu.dot_dimension_numbers<[2], [1], [1], [2], [0, 0, 0, 1, 1, 2], [0], [0]>} : vector<1x8x8xbf16>, vector<1x8x32xbf16>, vector<1x8x32xf32> -> vector<1x8x32xf32>
    "tpu.trace_stop"() : () -> ()
    %135 = vector.shape_cast %134 : vector<1x8x32xf32> to vector<8x32xf32>
    %136 = arith.truncf %135 : vector<8x32xf32> to vector<8x32xbf16>
    %c0_55 = arith.constant 0 : index
    %c1_56 = arith.constant 1 : index
    %c0_57 = arith.constant 0 : index
    %c0_58 = arith.constant 0 : index
    %137 = vector.load %arg11[%c0_55, %c1_56, %c0_57, %c0_58] : memref<2x2x32x32xbf16, #tpu.memory_space<vmem>>, vector<1x1x32x32xbf16>
    %138 = vector.shape_cast %137 : vector<1x1x32x32xbf16> to vector<32x32xbf16>
    %cst_59 = arith.constant dense<0.000000e+00> : vector<8x32xf32>
    %139 = tpu.matmul %136, %138, %cst_59 {dimension_numbers = #tpu.dot_dimension_numbers<[1], [0], [0], [1], [0, 0, 1, 1], [], []>} : vector<8x32xbf16>, vector<32x32xbf16>, vector<8x32xf32> -> vector<8x32xf32>
    %140 = arith.addf %114, %139 : vector<8x32xf32>
    %c0_60 = arith.constant 0 : index
    %c0_61 = arith.constant 0 : index
    %c0_62 = arith.constant 0 : index
    %141 = vector.load %arg12[%c0_60, %c0_61, %c0_62] : memref<2x1x32xf32, #tpu.memory_space<vmem>>, vector<1x1x32xf32>
    %142 = vector.shape_cast %141 : vector<1x1x32xf32> to vector<1x32xf32>
    %143 = vector.broadcast %142 : vector<1x32xf32> to vector<8x32xf32>
    %144 = arith.addf %140, %143 : vector<8x32xf32>
    %145 = arith.addf %53, %144 : vector<8x32xf32>
    %c0_63 = arith.constant 0 : index
    %c0_64 = arith.constant 0 : index
    %c0_65 = arith.constant 0 : index
    %146 = vector.load %arg13[%c0_63, %c0_64, %c0_65] : memref<2x1x32xf32, #tpu.memory_space<vmem>>, vector<1x1x32xf32>
    %147 = vector.shape_cast %146 : vector<1x1x32xf32> to vector<1x32xf32>
    %c0_66 = arith.constant 0 : index
    %c0_67 = arith.constant 0 : index
    %c0_68 = arith.constant 0 : index
    %148 = vector.load %arg14[%c0_66, %c0_67, %c0_68] : memref<2x1x32xf32, #tpu.memory_space<vmem>>, vector<1x1x32xf32>
    %149 = vector.shape_cast %148 : vector<1x1x32xf32> to vector<1x32xf32>
    %cst_69 = arith.constant dense<0.000000e+00> : vector<8xf32>
    %150 = vector.multi_reduction <add>, %145, %cst_69 [1] : vector<8x32xf32> to vector<8xf32>
    %151 = vector.shape_cast %150 : vector<8xf32> to vector<8x1xf32>
    %cst_70 = arith.constant 3.200000e+01 : f32
    %152 = vector.broadcast %cst_70 : f32 to vector<8x1xf32>
    %153 = arith.divf %151, %152 : vector<8x1xf32>
    %154 = vector.broadcast %153 : vector<8x1xf32> to vector<8x32xf32>
    %155 = arith.subf %145, %154 : vector<8x32xf32>
    %156 = arith.mulf %155, %155 : vector<8x32xf32>
    %cst_71 = arith.constant dense<0.000000e+00> : vector<8xf32>
    %157 = vector.multi_reduction <add>, %156, %cst_71 [1] : vector<8x32xf32> to vector<8xf32>
    %158 = vector.shape_cast %157 : vector<8xf32> to vector<8x1xf32>
    %cst_72 = arith.constant 3.200000e+01 : f32
    %159 = vector.broadcast %cst_72 : f32 to vector<8x1xf32>
    %160 = arith.divf %158, %159 : vector<8x1xf32>
    %161 = vector.broadcast %153 : vector<8x1xf32> to vector<8x32xf32>
    %162 = arith.subf %145, %161 : vector<8x32xf32>
    %cst_73 = arith.constant 9.99999996E-13 : f32
    %163 = vector.broadcast %cst_73 : f32 to vector<8x1xf32>
    %164 = arith.addf %160, %163 : vector<8x1xf32>
    %165 = math.rsqrt %164 : vector<8x1xf32>
    %166 = vector.broadcast %165 : vector<8x1xf32> to vector<8x32xf32>
    %167 = arith.mulf %162, %166 : vector<8x32xf32>
    %168 = vector.broadcast %147 : vector<1x32xf32> to vector<8x32xf32>
    %169 = arith.mulf %167, %168 : vector<8x32xf32>
    %170 = vector.broadcast %149 : vector<1x32xf32> to vector<8x32xf32>
    %171 = arith.addf %169, %170 : vector<8x32xf32>
    %172 = arith.truncf %171 : vector<8x32xf32> to vector<8x32xbf16>
    %c0_74 = arith.constant 0 : index
    %c0_75 = arith.constant 0 : index
    %c0_76 = arith.constant 0 : index
    %173 = vector.load %arg15[%c0_74, %c0_75, %c0_76] : memref<2x32x64xbf16, #tpu.memory_space<vmem>>, vector<1x32x64xbf16>
    %174 = vector.shape_cast %173 : vector<1x32x64xbf16> to vector<32x64xbf16>
    %cst_77 = arith.constant dense<0.000000e+00> : vector<8x64xf32>
    %175 = tpu.matmul %172, %174, %cst_77 {dimension_numbers = #tpu.dot_dimension_numbers<[1], [0], [0], [1], [0, 0, 1, 1], [], []>} : vector<8x32xbf16>, vector<32x64xbf16>, vector<8x64xf32> -> vector<8x64xf32>
    %c0_78 = arith.constant 0 : index
    %c0_79 = arith.constant 0 : index
    %c0_80 = arith.constant 0 : index
    %176 = vector.load %arg16[%c0_78, %c0_79, %c0_80] : memref<2x1x64xf32, #tpu.memory_space<vmem>>, vector<1x1x64xf32>
    %177 = vector.shape_cast %176 : vector<1x1x64xf32> to vector<1x64xf32>
    %178 = vector.broadcast %177 : vector<1x64xf32> to vector<8x64xf32>
    %179 = arith.addf %175, %178 : vector<8x64xf32>
    %180 = arith.mulf %179, %179 : vector<8x64xf32>
    %181 = arith.mulf %179, %180 : vector<8x64xf32>
    %cst_81 = arith.constant 4.471500e-02 : f32
    %182 = vector.broadcast %cst_81 : f32 to vector<8x64xf32>
    %183 = arith.mulf %182, %181 : vector<8x64xf32>
    %184 = arith.addf %179, %183 : vector<8x64xf32>
    %cst_82 = arith.constant 0.797884583 : f32
    %185 = vector.broadcast %cst_82 : f32 to vector<8x64xf32>
    %186 = arith.mulf %185, %184 : vector<8x64xf32>
    %187 = math.tanh %186 : vector<8x64xf32>
    %cst_83 = arith.constant 1.000000e+00 : f32
    %188 = vector.broadcast %cst_83 : f32 to vector<8x64xf32>
    %189 = arith.addf %188, %187 : vector<8x64xf32>
    %cst_84 = arith.constant 5.000000e-01 : f32
    %190 = vector.broadcast %cst_84 : f32 to vector<8x64xf32>
    %191 = arith.mulf %190, %189 : vector<8x64xf32>
    %192 = arith.mulf %179, %191 : vector<8x64xf32>
    %193 = arith.truncf %192 : vector<8x64xf32> to vector<8x64xbf16>
    %c0_85 = arith.constant 0 : index
    %c0_86 = arith.constant 0 : index
    %c0_87 = arith.constant 0 : index
    %194 = vector.load %arg17[%c0_85, %c0_86, %c0_87] : memref<2x64x32xbf16, #tpu.memory_space<vmem>>, vector<1x64x32xbf16>
    %195 = vector.shape_cast %194 : vector<1x64x32xbf16> to vector<64x32xbf16>
    %cst_88 = arith.constant dense<0.000000e+00> : vector<8x32xf32>
    %196 = tpu.matmul %193, %195, %cst_88 {dimension_numbers = #tpu.dot_dimension_numbers<[1], [0], [0], [1], [0, 0, 1, 1], [], []>} : vector<8x64xbf16>, vector<64x32xbf16>, vector<8x32xf32> -> vector<8x32xf32>
    %c0_89 = arith.constant 0 : index
    %c0_90 = arith.constant 0 : index
    %c0_91 = arith.constant 0 : index
    %197 = vector.load %arg18[%c0_89, %c0_90, %c0_91] : memref<2x1x32xf32, #tpu.memory_space<vmem>>, vector<1x1x32xf32>
    %198 = vector.shape_cast %197 : vector<1x1x32xf32> to vector<1x32xf32>
    %199 = vector.broadcast %198 : vector<1x32xf32> to vector<8x32xf32>
    %200 = arith.addf %196, %199 : vector<8x32xf32>
    %201 = arith.addf %171, %200 : vector<8x32xf32>
    %c0_92 = arith.constant 0 : index
    %c0_93 = arith.constant 0 : index
    %c0_94 = arith.constant 0 : index
    %202 = vector.load %arg19[%c0_92, %c0_93, %c0_94] : memref<2x1x32xf32, #tpu.memory_space<vmem>>, vector<1x1x32xf32>
    %203 = vector.shape_cast %202 : vector<1x1x32xf32> to vector<1x32xf32>
    %c0_95 = arith.constant 0 : index
    %c0_96 = arith.constant 0 : index
    %c0_97 = arith.constant 0 : index
    %204 = vector.load %arg20[%c0_95, %c0_96, %c0_97] : memref<2x1x32xf32, #tpu.memory_space<vmem>>, vector<1x1x32xf32>
    %205 = vector.shape_cast %204 : vector<1x1x32xf32> to vector<1x32xf32>
    %cst_98 = arith.constant dense<0.000000e+00> : vector<8xf32>
    %206 = vector.multi_reduction <add>, %201, %cst_98 [1] : vector<8x32xf32> to vector<8xf32>
    %207 = vector.shape_cast %206 : vector<8xf32> to vector<8x1xf32>
    %cst_99 = arith.constant 3.200000e+01 : f32
    %208 = vector.broadcast %cst_99 : f32 to vector<8x1xf32>
    %209 = arith.divf %207, %208 : vector<8x1xf32>
    %210 = vector.broadcast %209 : vector<8x1xf32> to vector<8x32xf32>
    %211 = arith.subf %201, %210 : vector<8x32xf32>
    %212 = arith.mulf %211, %211 : vector<8x32xf32>
    %cst_100 = arith.constant dense<0.000000e+00> : vector<8xf32>
    %213 = vector.multi_reduction <add>, %212, %cst_100 [1] : vector<8x32xf32> to vector<8xf32>
    %214 = vector.shape_cast %213 : vector<8xf32> to vector<8x1xf32>
    %cst_101 = arith.constant 3.200000e+01 : f32
    %215 = vector.broadcast %cst_101 : f32 to vector<8x1xf32>
    %216 = arith.divf %214, %215 : vector<8x1xf32>
    %217 = vector.broadcast %209 : vector<8x1xf32> to vector<8x32xf32>
    %218 = arith.subf %201, %217 : vector<8x32xf32>
    %cst_102 = arith.constant 9.99999996E-13 : f32
    %219 = vector.broadcast %cst_102 : f32 to vector<8x1xf32>
    %220 = arith.addf %216, %219 : vector<8x1xf32>
    %221 = math.rsqrt %220 : vector<8x1xf32>
    %222 = vector.broadcast %221 : vector<8x1xf32> to vector<8x32xf32>
    %223 = arith.mulf %218, %222 : vector<8x32xf32>
    %224 = vector.broadcast %203 : vector<1x32xf32> to vector<8x32xf32>
    %225 = arith.mulf %223, %224 : vector<8x32xf32>
    %226 = vector.broadcast %205 : vector<1x32xf32> to vector<8x32xf32>
    %227 = arith.addf %225, %226 : vector<8x32xf32>
    %228 = arith.truncf %227 : vector<8x32xf32> to vector<8x32xbf16>
    %c1_103 = arith.constant 1 : index
    %c0_104 = arith.constant 0 : index
    %c0_105 = arith.constant 0 : index
    %229 = vector.load %arg9[%c1_103, %c0_104, %c0_105] : memref<2x32x96xbf16, #tpu.memory_space<vmem>>, vector<1x32x96xbf16>
    %230 = vector.shape_cast %229 : vector<1x32x96xbf16> to vector<32x96xbf16>
    %cst_106 = arith.constant dense<0.000000e+00> : vector<8x96xf32>
    %231 = tpu.matmul %228, %230, %cst_106 {dimension_numbers = #tpu.dot_dimension_numbers<[1], [0], [0], [1], [0, 0, 1, 1], [], []>} : vector<8x32xbf16>, vector<32x96xbf16>, vector<8x96xf32> -> vector<8x96xf32>
    %c1_107 = arith.constant 1 : index
    %c0_108 = arith.constant 0 : index
    %c0_109 = arith.constant 0 : index
    %232 = vector.load %arg10[%c1_107, %c0_108, %c0_109] : memref<2x1x96xf32, #tpu.memory_space<vmem>>, vector<1x1x96xf32>
    %233 = vector.shape_cast %232 : vector<1x1x96xf32> to vector<1x96xf32>
    %234 = vector.broadcast %233 : vector<1x96xf32> to vector<8x96xf32>
    %235 = arith.addf %231, %234 : vector<8x96xf32>
    %236 = vector.extract_strided_slice %235 {offsets = [0, 0], sizes = [8, 32], strides = [1, 1]} : vector<8x96xf32> to vector<8x32xf32>
    %237 = vector.shape_cast %236 : vector<8x32xf32> to vector<1x8x32xf32>
    %238 = vector.extract_strided_slice %235 {offsets = [0, 32], sizes = [8, 32], strides = [1, 1]} : vector<8x96xf32> to vector<8x32xf32>
    %239 = vector.shape_cast %238 : vector<8x32xf32> to vector<1x8x32xf32>
    %240 = vector.extract_strided_slice %235 {offsets = [0, 64], sizes = [8, 32], strides = [1, 1]} : vector<8x96xf32> to vector<8x32xf32>
    %241 = vector.shape_cast %240 : vector<8x32xf32> to vector<1x8x32xf32>
    %242 = arith.truncf %239 : vector<1x8x32xf32> to vector<1x8x32xbf16>
    %243 = arith.truncf %241 : vector<1x8x32xf32> to vector<1x8x32xbf16>
    %cst_110 = arith.constant 0.000000e+00 : f32
    %244 = vector.broadcast %cst_110 : f32 to vector<8x32xf32>
    %245 = vector.broadcast %63 : vector<1x1x32xf32> to vector<1x8x32xf32>
    %246 = arith.mulf %237, %245 : vector<1x8x32xf32>
    %247 = arith.truncf %246 : vector<1x8x32xf32> to vector<1x8x32xbf16>
    "tpu.trace_start"() <{level = 10 : i32, message = "bqd,bkd->bqk"}> : () -> ()
    %cst_111 = arith.constant dense<0.000000e+00> : vector<1x8x8xf32>
    %248 = tpu.matmul %247, %242, %cst_111 {dimension_numbers = #tpu.dot_dimension_numbers<[2], [2], [1], [1], [0, 0, 0, 1, 1, 1], [0], [0]>} : vector<1x8x32xbf16>, vector<1x8x32xbf16>, vector<1x8x8xf32> -> vector<1x8x8xf32>
    "tpu.trace_stop"() : () -> ()
    %cst_112 = arith.constant 2.500000e-01 : f32
    %249 = vector.broadcast %cst_112 : f32 to vector<1x8x8xf32>
    %250 = arith.mulf %248, %249 : vector<1x8x8xf32>
    %251 = vector.broadcast %54 : vector<1x1x8xf32> to vector<1x8x8xf32>
    %252 = arith.addf %250, %251 : vector<1x8x8xf32>
    %cst_113 = arith.constant dense<0xFF800000> : vector<1x8xf32>
    %253 = vector.multi_reduction <maximumf>, %252, %cst_113 [2] : vector<1x8x8xf32> to vector<1x8xf32>
    %254 = vector.shape_cast %253 : vector<1x8xf32> to vector<1x8x1xf32>
    %255 = vector.broadcast %254 : vector<1x8x1xf32> to vector<1x8x8xf32>
    %256 = arith.subf %252, %255 : vector<1x8x8xf32>
    %257 = math.exp %256 : vector<1x8x8xf32>
    %cst_114 = arith.constant dense<0.000000e+00> : vector<1x8xf32>
    %258 = vector.multi_reduction <add>, %257, %cst_114 [2] : vector<1x8x8xf32> to vector<1x8xf32>
    %259 = vector.shape_cast %258 : vector<1x8xf32> to vector<1x8x1xf32>
    %260 = tpu.reciprocal %259 {approx = true} : vector<1x8x1xf32> -> vector<1x8x1xf32>
    %261 = vector.broadcast %260 : vector<1x8x1xf32> to vector<1x8x8xf32>
    %262 = arith.mulf %257, %261 : vector<1x8x8xf32>
    %263 = arith.truncf %262 : vector<1x8x8xf32> to vector<1x8x8xbf16>
    "tpu.trace_start"() <{level = 10 : i32, message = "bqk,bkd->bqd"}> : () -> ()
    %cst_115 = arith.constant dense<0.000000e+00> : vector<1x8x32xf32>
    %264 = tpu.matmul %263, %243, %cst_115 {dimension_numbers = #tpu.dot_dimension_numbers<[2], [1], [1], [2], [0, 0, 0, 1, 1, 2], [0], [0]>} : vector<1x8x8xbf16>, vector<1x8x32xbf16>, vector<1x8x32xf32> -> vector<1x8x32xf32>
    "tpu.trace_stop"() : () -> ()
    %265 = vector.shape_cast %264 : vector<1x8x32xf32> to vector<8x32xf32>
    %266 = arith.truncf %265 : vector<8x32xf32> to vector<8x32xbf16>
    %c1_116 = arith.constant 1 : index
    %c0_117 = arith.constant 0 : index
    %c0_118 = arith.constant 0 : index
    %c0_119 = arith.constant 0 : index
    %267 = vector.load %arg11[%c1_116, %c0_117, %c0_118, %c0_119] : memref<2x2x32x32xbf16, #tpu.memory_space<vmem>>, vector<1x1x32x32xbf16>
    %268 = vector.shape_cast %267 : vector<1x1x32x32xbf16> to vector<32x32xbf16>
    %cst_120 = arith.constant dense<0.000000e+00> : vector<8x32xf32>
    %269 = tpu.matmul %266, %268, %cst_120 {dimension_numbers = #tpu.dot_dimension_numbers<[1], [0], [0], [1], [0, 0, 1, 1], [], []>} : vector<8x32xbf16>, vector<32x32xbf16>, vector<8x32xf32> -> vector<8x32xf32>
    %270 = arith.addf %244, %269 : vector<8x32xf32>
    %271 = vector.broadcast %71 : vector<1x1x32xf32> to vector<1x8x32xf32>
    %272 = arith.mulf %237, %271 : vector<1x8x32xf32>
    %273 = arith.truncf %272 : vector<1x8x32xf32> to vector<1x8x32xbf16>
    "tpu.trace_start"() <{level = 10 : i32, message = "bqd,bkd->bqk"}> : () -> ()
    %cst_121 = arith.constant dense<0.000000e+00> : vector<1x8x8xf32>
    %274 = tpu.matmul %273, %242, %cst_121 {dimension_numbers = #tpu.dot_dimension_numbers<[2], [2], [1], [1], [0, 0, 0, 1, 1, 1], [0], [0]>} : vector<1x8x32xbf16>, vector<1x8x32xbf16>, vector<1x8x8xf32> -> vector<1x8x8xf32>
    "tpu.trace_stop"() : () -> ()
    %cst_122 = arith.constant 2.500000e-01 : f32
    %275 = vector.broadcast %cst_122 : f32 to vector<1x8x8xf32>
    %276 = arith.mulf %274, %275 : vector<1x8x8xf32>
    %277 = vector.broadcast %54 : vector<1x1x8xf32> to vector<1x8x8xf32>
    %278 = arith.addf %276, %277 : vector<1x8x8xf32>
    %cst_123 = arith.constant dense<0xFF800000> : vector<1x8xf32>
    %279 = vector.multi_reduction <maximumf>, %278, %cst_123 [2] : vector<1x8x8xf32> to vector<1x8xf32>
    %280 = vector.shape_cast %279 : vector<1x8xf32> to vector<1x8x1xf32>
    %281 = vector.broadcast %280 : vector<1x8x1xf32> to vector<1x8x8xf32>
    %282 = arith.subf %278, %281 : vector<1x8x8xf32>
    %283 = math.exp %282 : vector<1x8x8xf32>
    %cst_124 = arith.constant dense<0.000000e+00> : vector<1x8xf32>
    %284 = vector.multi_reduction <add>, %283, %cst_124 [2] : vector<1x8x8xf32> to vector<1x8xf32>
    %285 = vector.shape_cast %284 : vector<1x8xf32> to vector<1x8x1xf32>
    %286 = tpu.reciprocal %285 {approx = true} : vector<1x8x1xf32> -> vector<1x8x1xf32>
    %287 = vector.broadcast %286 : vector<1x8x1xf32> to vector<1x8x8xf32>
    %288 = arith.mulf %283, %287 : vector<1x8x8xf32>
    %289 = arith.truncf %288 : vector<1x8x8xf32> to vector<1x8x8xbf16>
    "tpu.trace_start"() <{level = 10 : i32, message = "bqk,bkd->bqd"}> : () -> ()
    %cst_125 = arith.constant dense<0.000000e+00> : vector<1x8x32xf32>
    %290 = tpu.matmul %289, %243, %cst_125 {dimension_numbers = #tpu.dot_dimension_numbers<[2], [1], [1], [2], [0, 0, 0, 1, 1, 2], [0], [0]>} : vector<1x8x8xbf16>, vector<1x8x32xbf16>, vector<1x8x32xf32> -> vector<1x8x32xf32>
    "tpu.trace_stop"() : () -> ()
    %291 = vector.shape_cast %290 : vector<1x8x32xf32> to vector<8x32xf32>
    %292 = arith.truncf %291 : vector<8x32xf32> to vector<8x32xbf16>
    %c1_126 = arith.constant 1 : index
    %c1_127 = arith.constant 1 : index
    %c0_128 = arith.constant 0 : index
    %c0_129 = arith.constant 0 : index
    %293 = vector.load %arg11[%c1_126, %c1_127, %c0_128, %c0_129] : memref<2x2x32x32xbf16, #tpu.memory_space<vmem>>, vector<1x1x32x32xbf16>
    %294 = vector.shape_cast %293 : vector<1x1x32x32xbf16> to vector<32x32xbf16>
    %cst_130 = arith.constant dense<0.000000e+00> : vector<8x32xf32>
    %295 = tpu.matmul %292, %294, %cst_130 {dimension_numbers = #tpu.dot_dimension_numbers<[1], [0], [0], [1], [0, 0, 1, 1], [], []>} : vector<8x32xbf16>, vector<32x32xbf16>, vector<8x32xf32> -> vector<8x32xf32>
    %296 = arith.addf %270, %295 : vector<8x32xf32>
    %c1_131 = arith.constant 1 : index
    %c0_132 = arith.constant 0 : index
    %c0_133 = arith.constant 0 : index
    %297 = vector.load %arg12[%c1_131, %c0_132, %c0_133] : memref<2x1x32xf32, #tpu.memory_space<vmem>>, vector<1x1x32xf32>
    %298 = vector.shape_cast %297 : vector<1x1x32xf32> to vector<1x32xf32>
    %299 = vector.broadcast %298 : vector<1x32xf32> to vector<8x32xf32>
    %300 = arith.addf %296, %299 : vector<8x32xf32>
    %301 = arith.addf %227, %300 : vector<8x32xf32>
    %c1_134 = arith.constant 1 : index
    %c0_135 = arith.constant 0 : index
    %c0_136 = arith.constant 0 : index
    %302 = vector.load %arg13[%c1_134, %c0_135, %c0_136] : memref<2x1x32xf32, #tpu.memory_space<vmem>>, vector<1x1x32xf32>
    %303 = vector.shape_cast %302 : vector<1x1x32xf32> to vector<1x32xf32>
    %c1_137 = arith.constant 1 : index
    %c0_138 = arith.constant 0 : index
    %c0_139 = arith.constant 0 : index
    %304 = vector.load %arg14[%c1_137, %c0_138, %c0_139] : memref<2x1x32xf32, #tpu.memory_space<vmem>>, vector<1x1x32xf32>
    %305 = vector.shape_cast %304 : vector<1x1x32xf32> to vector<1x32xf32>
    %cst_140 = arith.constant dense<0.000000e+00> : vector<8xf32>
    %306 = vector.multi_reduction <add>, %301, %cst_140 [1] : vector<8x32xf32> to vector<8xf32>
    %307 = vector.shape_cast %306 : vector<8xf32> to vector<8x1xf32>
    %cst_141 = arith.constant 3.200000e+01 : f32
    %308 = vector.broadcast %cst_141 : f32 to vector<8x1xf32>
    %309 = arith.divf %307, %308 : vector<8x1xf32>
    %310 = vector.broadcast %309 : vector<8x1xf32> to vector<8x32xf32>
    %311 = arith.subf %301, %310 : vector<8x32xf32>
    %312 = arith.mulf %311, %311 : vector<8x32xf32>
    %cst_142 = arith.constant dense<0.000000e+00> : vector<8xf32>
    %313 = vector.multi_reduction <add>, %312, %cst_142 [1] : vector<8x32xf32> to vector<8xf32>
    %314 = vector.shape_cast %313 : vector<8xf32> to vector<8x1xf32>
    %cst_143 = arith.constant 3.200000e+01 : f32
    %315 = vector.broadcast %cst_143 : f32 to vector<8x1xf32>
    %316 = arith.divf %314, %315 : vector<8x1xf32>
    %317 = vector.broadcast %309 : vector<8x1xf32> to vector<8x32xf32>
    %318 = arith.subf %301, %317 : vector<8x32xf32>
    %cst_144 = arith.constant 9.99999996E-13 : f32
    %319 = vector.broadcast %cst_144 : f32 to vector<8x1xf32>
    %320 = arith.addf %316, %319 : vector<8x1xf32>
    %321 = math.rsqrt %320 : vector<8x1xf32>
    %322 = vector.broadcast %321 : vector<8x1xf32> to vector<8x32xf32>
    %323 = arith.mulf %318, %322 : vector<8x32xf32>
    %324 = vector.broadcast %303 : vector<1x32xf32> to vector<8x32xf32>
    %325 = arith.mulf %323, %324 : vector<8x32xf32>
    %326 = vector.broadcast %305 : vector<1x32xf32> to vector<8x32xf32>
    %327 = arith.addf %325, %326 : vector<8x32xf32>
    %328 = arith.truncf %327 : vector<8x32xf32> to vector<8x32xbf16>
    %c1_145 = arith.constant 1 : index
    %c0_146 = arith.constant 0 : index
    %c0_147 = arith.constant 0 : index
    %329 = vector.load %arg15[%c1_145, %c0_146, %c0_147] : memref<2x32x64xbf16, #tpu.memory_space<vmem>>, vector<1x32x64xbf16>
    %330 = vector.shape_cast %329 : vector<1x32x64xbf16> to vector<32x64xbf16>
    %cst_148 = arith.constant dense<0.000000e+00> : vector<8x64xf32>
    %331 = tpu.matmul %328, %330, %cst_148 {dimension_numbers = #tpu.dot_dimension_numbers<[1], [0], [0], [1], [0, 0, 1, 1], [], []>} : vector<8x32xbf16>, vector<32x64xbf16>, vector<8x64xf32> -> vector<8x64xf32>
    %c1_149 = arith.constant 1 : index
    %c0_150 = arith.constant 0 : index
    %c0_151 = arith.constant 0 : index
    %332 = vector.load %arg16[%c1_149, %c0_150, %c0_151] : memref<2x1x64xf32, #tpu.memory_space<vmem>>, vector<1x1x64xf32>
    %333 = vector.shape_cast %332 : vector<1x1x64xf32> to vector<1x64xf32>
    %334 = vector.broadcast %333 : vector<1x64xf32> to vector<8x64xf32>
    %335 = arith.addf %331, %334 : vector<8x64xf32>
    %336 = arith.mulf %335, %335 : vector<8x64xf32>
    %337 = arith.mulf %335, %336 : vector<8x64xf32>
    %cst_152 = arith.constant 4.471500e-02 : f32
    %338 = vector.broadcast %cst_152 : f32 to vector<8x64xf32>
    %339 = arith.mulf %338, %337 : vector<8x64xf32>
    %340 = arith.addf %335, %339 : vector<8x64xf32>
    %cst_153 = arith.constant 0.797884583 : f32
    %341 = vector.broadcast %cst_153 : f32 to vector<8x64xf32>
    %342 = arith.mulf %341, %340 : vector<8x64xf32>
    %343 = math.tanh %342 : vector<8x64xf32>
    %cst_154 = arith.constant 1.000000e+00 : f32
    %344 = vector.broadcast %cst_154 : f32 to vector<8x64xf32>
    %345 = arith.addf %344, %343 : vector<8x64xf32>
    %cst_155 = arith.constant 5.000000e-01 : f32
    %346 = vector.broadcast %cst_155 : f32 to vector<8x64xf32>
    %347 = arith.mulf %346, %345 : vector<8x64xf32>
    %348 = arith.mulf %335, %347 : vector<8x64xf32>
    %349 = arith.truncf %348 : vector<8x64xf32> to vector<8x64xbf16>
    %c1_156 = arith.constant 1 : index
    %c0_157 = arith.constant 0 : index
    %c0_158 = arith.constant 0 : index
    %350 = vector.load %arg17[%c1_156, %c0_157, %c0_158] : memref<2x64x32xbf16, #tpu.memory_space<vmem>>, vector<1x64x32xbf16>
    %351 = vector.shape_cast %350 : vector<1x64x32xbf16> to vector<64x32xbf16>
    %cst_159 = arith.constant dense<0.000000e+00> : vector<8x32xf32>
    %352 = tpu.matmul %349, %351, %cst_159 {dimension_numbers = #tpu.dot_dimension_numbers<[1], [0], [0], [1], [0, 0, 1, 1], [], []>} : vector<8x64xbf16>, vector<64x32xbf16>, vector<8x32xf32> -> vector<8x32xf32>
    %c1_160 = arith.constant 1 : index
    %c0_161 = arith.constant 0 : index
    %c0_162 = arith.constant 0 : index
    %353 = vector.load %arg18[%c1_160, %c0_161, %c0_162] : memref<2x1x32xf32, #tpu.memory_space<vmem>>, vector<1x1x32xf32>
    %354 = vector.shape_cast %353 : vector<1x1x32xf32> to vector<1x32xf32>
    %355 = vector.broadcast %354 : vector<1x32xf32> to vector<8x32xf32>
    %356 = arith.addf %352, %355 : vector<8x32xf32>
    %357 = arith.addf %327, %356 : vector<8x32xf32>
    %c1_163 = arith.constant 1 : index
    %c0_164 = arith.constant 0 : index
    %c0_165 = arith.constant 0 : index
    %358 = vector.load %arg19[%c1_163, %c0_164, %c0_165] : memref<2x1x32xf32, #tpu.memory_space<vmem>>, vector<1x1x32xf32>
    %359 = vector.shape_cast %358 : vector<1x1x32xf32> to vector<1x32xf32>
    %c1_166 = arith.constant 1 : index
    %c0_167 = arith.constant 0 : index
    %c0_168 = arith.constant 0 : index
    %360 = vector.load %arg20[%c1_166, %c0_167, %c0_168] : memref<2x1x32xf32, #tpu.memory_space<vmem>>, vector<1x1x32xf32>
    %361 = vector.shape_cast %360 : vector<1x1x32xf32> to vector<1x32xf32>
    %cst_169 = arith.constant dense<0.000000e+00> : vector<8xf32>
    %362 = vector.multi_reduction <add>, %357, %cst_169 [1] : vector<8x32xf32> to vector<8xf32>
    %363 = vector.shape_cast %362 : vector<8xf32> to vector<8x1xf32>
    %cst_170 = arith.constant 3.200000e+01 : f32
    %364 = vector.broadcast %cst_170 : f32 to vector<8x1xf32>
    %365 = arith.divf %363, %364 : vector<8x1xf32>
    %366 = vector.broadcast %365 : vector<8x1xf32> to vector<8x32xf32>
    %367 = arith.subf %357, %366 : vector<8x32xf32>
    %368 = arith.mulf %367, %367 : vector<8x32xf32>
    %cst_171 = arith.constant dense<0.000000e+00> : vector<8xf32>
    %369 = vector.multi_reduction <add>, %368, %cst_171 [1] : vector<8x32xf32> to vector<8xf32>
    %370 = vector.shape_cast %369 : vector<8xf32> to vector<8x1xf32>
    %cst_172 = arith.constant 3.200000e+01 : f32
    %371 = vector.broadcast %cst_172 : f32 to vector<8x1xf32>
    %372 = arith.divf %370, %371 : vector<8x1xf32>
    %373 = vector.broadcast %365 : vector<8x1xf32> to vector<8x32xf32>
    %374 = arith.subf %357, %373 : vector<8x32xf32>
    %cst_173 = arith.constant 9.99999996E-13 : f32
    %375 = vector.broadcast %cst_173 : f32 to vector<8x1xf32>
    %376 = arith.addf %372, %375 : vector<8x1xf32>
    %377 = math.rsqrt %376 : vector<8x1xf32>
    %378 = vector.broadcast %377 : vector<8x1xf32> to vector<8x32xf32>
    %379 = arith.mulf %374, %378 : vector<8x32xf32>
    %380 = vector.broadcast %359 : vector<1x32xf32> to vector<8x32xf32>
    %381 = arith.mulf %379, %380 : vector<8x32xf32>
    %382 = vector.broadcast %361 : vector<1x32xf32> to vector<8x32xf32>
    %383 = arith.addf %381, %382 : vector<8x32xf32>
    %384 = vector.shape_cast %383 : vector<8x32xf32> to vector<1x8x32xf32>
    %385 = vector.extract_strided_slice %384 {offsets = [0, 0, 0], sizes = [1, 1, 32], strides = [1, 1, 1]} : vector<1x8x32xf32> to vector<1x1x32xf32>
    %386 = vector.shape_cast %385 : vector<1x1x32xf32> to vector<1x32xf32>
    %387 = arith.truncf %386 : vector<1x32xf32> to vector<1x32xbf16>
    %c0_174 = arith.constant 0 : index
    %c0_175 = arith.constant 0 : index
    %388 = vector.load %arg21[%c0_174, %c0_175] : memref<32x128xbf16, #tpu.memory_space<vmem>>, vector<32x128xbf16>
    %cst_176 = arith.constant dense<0.000000e+00> : vector<1x128xf32>
    %389 = tpu.matmul %387, %388, %cst_176 {dimension_numbers = #tpu.dot_dimension_numbers<[1], [0], [0], [1], [0, 0, 1, 1], [], []>} : vector<1x32xbf16>, vector<32x128xbf16>, vector<1x128xf32> -> vector<1x128xf32>
    %c0_177 = arith.constant 0 : index
    %c0_178 = arith.constant 0 : index
    %390 = vector.load %arg22[%c0_177, %c0_178] : memref<1x128xf32, #tpu.memory_space<vmem>>, vector<1x128xf32>
    %391 = arith.addf %389, %390 : vector<1x128xf32>
    %392 = vector.shape_cast %391 : vector<1x128xf32> to vector<1x1x128xf32>
    %c0_179 = arith.constant 0 : index
    %c0_180 = arith.constant 0 : index
    %c0_181 = arith.constant 0 : index
    %393 = vector.load %arg23[%c0_179, %c0_180, %c0_181] : memref<1x1x128xf32, #tpu.memory_space<vmem>>, vector<1x1x128xf32>
    tpu.vector_store %arg23[%c0_179, %c0_180, %c0_181], %392 {strides = array<i32>} : memref<1x1x128xf32, #tpu.memory_space<vmem>>, vector<1x1x128xf32>,
    return
  }
  func.func @transform_0(%arg0: i32) -> (i32, i32, i32) {
    %c0_i32 = arith.constant 0 : i32
    %c0_i32_0 = arith.constant 0 : i32
    %c0_i32_1 = arith.constant 0 : i32
    return %arg0, %c0_i32, %c0_i32_0 : i32, i32, i32
  }
  func.func @transform_1(%arg0: i32) -> (i32, i32, i32) {
    %c0_i32 = arith.constant 0 : i32
    %c0_i32_0 = arith.constant 0 : i32
    %c0_i32_1 = arith.constant 0 : i32
    return %arg0, %c0_i32, %c0_i32_0 : i32, i32, i32
  }
  func.func @transform_2(%arg0: i32) -> (i32, i32, i32) {
    %c0_i32 = arith.constant 0 : i32
    %c0_i32_0 = arith.constant 0 : i32
    %c0_i32_1 = arith.constant 0 : i32
    return %arg0, %c0_i32, %c0_i32_0 : i32, i32, i32
  }
  func.func @transform_3(%arg0: i32) -> (i32, i32) {
    %c0_i32 = arith.constant 0 : i32
    %c0_i32_0 = arith.constant 0 : i32
    %c0_i32_1 = arith.constant 0 : i32
    return %c0_i32, %c0_i32_0 : i32, i32
  }
  func.func @transform_4(%arg0: i32) -> (i32, i32) {
    %c0_i32 = arith.constant 0 : i32
    %c0_i32_0 = arith.constant 0 : i32
    %c0_i32_1 = arith.constant 0 : i32
    return %c0_i32, %c0_i32_0 : i32, i32
  }
  func.func @transform_5(%arg0: i32) -> (i32, i32) {
    %c0_i32 = arith.constant 0 : i32
    %c0_i32_0 = arith.constant 0 : i32
    %c0_i32_1 = arith.constant 0 : i32
    return %c0_i32, %c0_i32_0 : i32, i32
  }
  func.func @transform_6(%arg0: i32) -> (i32, i32) {
    %c0_i32 = arith.constant 0 : i32
    %c0_i32_0 = arith.constant 0 : i32
    %c0_i32_1 = arith.constant 0 : i32
    return %c0_i32, %c0_i32_0 : i32, i32
  }
  func.func @transform_7(%arg0: i32) -> (i32, i32) {
    %c0_i32 = arith.constant 0 : i32
    %c0_i32_0 = arith.constant 0 : i32
    %c0_i32_1 = arith.constant 0 : i32
    return %c0_i32, %c0_i32_0 : i32, i32
  }
  func.func @transform_8(%arg0: i32) -> (i32, i32, i32) {
    %c0_i32 = arith.constant 0 : i32
    %c0_i32_0 = arith.constant 0 : i32
    %c0_i32_1 = arith.constant 0 : i32
    %c0_i32_2 = arith.constant 0 : i32
    return %c0_i32, %c0_i32_0, %c0_i32_1 : i32, i32, i32
  }
  func.func @transform_9(%arg0: i32) -> (i32, i32, i32) {
    %c0_i32 = arith.constant 0 : i32
    %c0_i32_0 = arith.constant 0 : i32
    %c0_i32_1 = arith.constant 0 : i32
    %c0_i32_2 = arith.constant 0 : i32
    return %c0_i32, %c0_i32_0, %c0_i32_1 : i32, i32, i32
  }
  func.func @transform_10(%arg0: i32) -> (i32, i32, i32, i32) {
    %c0_i32 = arith.constant 0 : i32
    %c0_i32_0 = arith.constant 0 : i32
    %c0_i32_1 = arith.constant 0 : i32
    %c0_i32_2 = arith.constant 0 : i32
    %c0_i32_3 = arith.constant 0 : i32
    return %c0_i32, %c0_i32_0, %c0_i32_1, %c0_i32_2 : i32, i32, i32, i32
  }
  func.func @transform_11(%arg0: i32) -> (i32, i32, i32) {
    %c0_i32 = arith.constant 0 : i32
    %c0_i32_0 = arith.constant 0 : i32
    %c0_i32_1 = arith.constant 0 : i32
    %c0_i32_2 = arith.constant 0 : i32
    return %c0_i32, %c0_i32_0, %c0_i32_1 : i32, i32, i32
  }
  func.func @transform_12(%arg0: i32) -> (i32, i32, i32) {
    %c0_i32 = arith.constant 0 : i32
    %c0_i32_0 = arith.constant 0 : i32
    %c0_i32_1 = arith.constant 0 : i32
    %c0_i32_2 = arith.constant 0 : i32
    return %c0_i32, %c0_i32_0, %c0_i32_1 : i32, i32, i32
  }
  func.func @transform_13(%arg0: i32) -> (i32, i32, i32) {
    %c0_i32 = arith.constant 0 : i32
    %c0_i32_0 = arith.constant 0 : i32
    %c0_i32_1 = arith.constant 0 : i32
    %c0_i32_2 = arith.constant 0 : i32
    return %c0_i32, %c0_i32_0, %c0_i32_1 : i32, i32, i32
  }
  func.func @transform_14(%arg0: i32) -> (i32, i32, i32) {
    %c0_i32 = arith.constant 0 : i32
    %c0_i32_0 = arith.constant 0 : i32
    %c0_i32_1 = arith.constant 0 : i32
    %c0_i32_2 = arith.constant 0 : i32
    return %c0_i32, %c0_i32_0, %c0_i32_1 : i32, i32, i32
  }
  func.func @transform_15(%arg0: i32) -> (i32, i32, i32) {
    %c0_i32 = arith.constant 0 : i32
    %c0_i32_0 = arith.constant 0 : i32
    %c0_i32_1 = arith.constant 0 : i32
    %c0_i32_2 = arith.constant 0 : i32
    return %c0_i32, %c0_i32_0, %c0_i32_1 : i32, i32, i32
  }
  func.func @transform_16(%arg0: i32) -> (i32, i32, i32) {
    %c0_i32 = arith.constant 0 : i32
    %c0_i32_0 = arith.constant 0 : i32
    %c0_i32_1 = arith.constant 0 : i32
    %c0_i32_2 = arith.constant 0 : i32
    return %c0_i32, %c0_i32_0, %c0_i32_1 : i32, i32, i32
  }
  func.func @transform_17(%arg0: i32) -> (i32, i32, i32) {
    %c0_i32 = arith.constant 0 : i32
    %c0_i32_0 = arith.constant 0 : i32
    %c0_i32_1 = arith.constant 0 : i32
    %c0_i32_2 = arith.constant 0 : i32
    return %c0_i32, %c0_i32_0, %c0_i32_1 : i32, i32, i32
  }
  func.func @transform_18(%arg0: i32) -> (i32, i32, i32) {
    %c0_i32 = arith.constant 0 : i32
    %c0_i32_0 = arith.constant 0 : i32
    %c0_i32_1 = arith.constant 0 : i32
    %c0_i32_2 = arith.constant 0 : i32
    return %c0_i32, %c0_i32_0, %c0_i32_1 : i32, i32, i32
  }
  func.func @transform_19(%arg0: i32) -> (i32, i32, i32) {
    %c0_i32 = arith.constant 0 : i32
    %c0_i32_0 = arith.constant 0 : i32
    %c0_i32_1 = arith.constant 0 : i32
    %c0_i32_2 = arith.constant 0 : i32
    return %c0_i32, %c0_i32_0, %c0_i32_1 : i32, i32, i32
  }
  func.func @transform_20(%arg0: i32) -> (i32, i32) {
    %c0_i32 = arith.constant 0 : i32
    %c0_i32_0 = arith.constant 0 : i32
    %c0_i32_1 = arith.constant 0 : i32
    return %c0_i32, %c0_i32_0 : i32, i32
  }
  func.func @transform_21(%arg0: i32) -> (i32, i32) {
    %c0_i32 = arith.constant 0 : i32
    %c0_i32_0 = arith.constant 0 : i32
    %c0_i32_1 = arith.constant 0 : i32
    return %c0_i32, %c0_i32_0 : i32, i32
  }
  func.func @transform_22(%arg0: i32) -> (i32, i32, i32) {
    %c0_i32 = arith.constant 0 : i32
    %c0_i32_0 = arith.constant 0 : i32
    %c0_i32_1 = arith.constant 0 : i32
    return %arg0, %c0_i32, %c0_i32_0 : i32, i32, i32
  }
}

</mosaic_0001>

<llo_original>
// kernel: _lambda_.1
$region0: #{_lambda_.1}
  #allocation0 [shape = 'u32[]', space=smem, size = 0x4, offset = 0x4, fixed_abs, tag = 'smem constant byte address 0x4 - core index']
  #allocation1 [shape = 'u32[144,128]{1,0:T(1,128)}', space=vmem, size = 0x12000, scoped, tag = 'internal scratch']
  %s0 = inlined_call_operand.vmem [shape: s32[2,8,1], index: 0, kind: input, shape index: {}]
  %s1 = inlined_call_operand.vmem [shape: s32[2,8,1], index: 1, kind: input, shape index: {}]
  %s2 = inlined_call_operand.vmem [shape: f32[2,1,8], index: 2, kind: input, shape index: {}]
  %s3 = inlined_call_operand.vmem [shape: bf16[100,32], index: 3, kind: input, shape index: {}]
  %s4 = inlined_call_operand.vmem [shape: f32[2,32], index: 4, kind: input, shape index: {}]
  %s5 = inlined_call_operand.hbm [shape: f32[8,32], index: 5, kind: input, shape index: {}]
  %s6 = inlined_call_operand.vmem [shape: f32[1,32], index: 6, kind: input, shape index: {}]
  %s7 = inlined_call_operand.vmem [shape: f32[1,32], index: 7, kind: input, shape index: {}]
  %s8 = inlined_call_operand.hbm [shape: bf16[2,32,96], index: 8, kind: input, shape index: {}]
  %s9 = inlined_call_operand.vmem [shape: f32[2,1,96], index: 9, kind: input, shape index: {}]
  %s10 = inlined_call_operand.hbm [shape: bf16[2,2,32,32], index: 10, kind: input, shape index: {}]
  %s11 = inlined_call_operand.vmem [shape: f32[2,1,32], index: 11, kind: input, shape index: {}, may-alias: {11,13,17,19}]
  %s12 = inlined_call_operand.vmem [shape: f32[2,1,32], index: 12, kind: input, shape index: {}, may-alias: {12,18}]
  %s13 = inlined_call_operand.vmem [shape: f32[2,1,32], index: 13, kind: input, shape index: {}, may-alias: {11,13,17,19}]
  %s14 = inlined_call_operand.hbm [shape: bf16[2,32,64], index: 14, kind: input, shape index: {}]
  %s15 = inlined_call_operand.vmem [shape: f32[2,1,64], index: 15, kind: input, shape index: {}]
  %s16 = inlined_call_operand.vmem [shape: bf16[2,64,32], index: 16, kind: input, shape index: {}]
  %s17 = inlined_call_operand.vmem [shape: f32[2,1,32], index: 17, kind: input, shape index: {}, may-alias: {11,13,17,19}]
  %s18 = inlined_call_operand.vmem [shape: f32[2,1,32], index: 18, kind: input, shape index: {}, may-alias: {12,18}]
  %s19 = inlined_call_operand.vmem [shape: f32[2,1,32], index: 19, kind: input, shape index: {}, may-alias: {11,13,17,19}]
  %s20 = inlined_call_operand.vmem [shape: bf16[32,128], index: 20, kind: input, shape index: {}]
  %s21 = inlined_call_operand.vmem [shape: f32[1,128], index: 21, kind: input, shape index: {}]
  %s22 = inlined_call_operand.hbm [shape: f32[2,1,128], index: 22, kind: output, shape index: {}]
  %s23 = sld [smem:[#allocation0]]
  $region137: #{_lambda_.1} parent=0
    _
  %s25 = ssub.s32 1, %s23
  %s26 = scalar_select 0, %s25, %s23
  $region1: #{_lambda_.1} parent=0
    #allocation2 [shape = 'u8[4096]{0}', space=vmem, size = 0x1000, scoped, tag = 'input window, operand 5, single buffered']
    #allocation3 [shape = 's32[2]{0}', space=sflag, size = 0x8, scoped, tag = 'scoped memory for _lambda_.1']
    #allocation4 [shape = 's32[2]{0}', space=sflag, size = 0x8, scoped, tag = 'scoped memory for _lambda_.1']
    #allocation5 [shape = 'u8[16384]{0}', space=vmem, size = 0x4000, scoped, tag = 'input window, operand 8, single buffered']
    #allocation6 [shape = 's32[1]{0}', space=sflag, size = 0x4, scoped, tag = 'scoped memory for _lambda_.1']
    #allocation7 [shape = 'u8[32768]{0}', space=vmem, size = 0x8000, scoped, tag = 'input window, operand 10, single buffered']
    #allocation8 [shape = 'u8[16384]{0}', space=vmem, size = 0x4000, scoped, tag = 'input window, operand 14, single buffered']
    #allocation9 [shape = 's32[1]{0}', space=sflag, size = 0x4, scoped, tag = 'scoped memory for _lambda_.1']
    #allocation10 [shape = 'u8[1024]{0}', space=vmem, size = 0x400, scoped, tag = 'output window, operand 0']
    %27 = vsyncpa [#allocation3], 0
    %28 = vsyncpa [#allocation6], 0
    %29 = vsyncpa [#allocation9], 0
    %30 = vsyncpa [#allocation4], 0
    %s31 = scalar_lea.sflag [#allocation4], 1
    %32 = vsyncpa %s31, 0
    loop: start=0, step=1, limit=4
    $region2: #{_lambda_.1} parent=1 // loop_pre_header
      _
    $region3: #{_lambda_.1} parent=1 // loop_header
      %s34 = sphi 0, %s38
      %p35 = scmp.ge.s32.totalorder %s34, 4
      %s44 = sphi 0, %s46
      %s47 = sphi 0, %s44
      %s48 = sphi 0, %s47
      %s64 = sphi 0, %s48
      %s70 = sphi 0, %s72
      %s73 = sphi 0, %s70
      %s74 = sphi 0, %s73
      %s90 = sphi 0, %s74
      %s96 = sphi 0, %s98
      %s99 = sphi 0, %s96
      %s100 = sphi 0, %s99
      %s116 = sphi 0, %s100
      %s120 = sphi 0, %s120
      %s122 = sphi 0, %s120
      %s123 = sphi 0, %s122
      %s137 = sphi 0, %s123
      %s141 = sphi 0, %s141
      %s143 = sphi 0, %s141
      %s144 = sphi 0, %s143
      %s158 = sphi 0, %s144
      %s162 = sphi 0, %s162
      %s164 = sphi 0, %s162
      %s165 = sphi 0, %s164
      %s179 = sphi 0, %s165
      %s183 = sphi 0, %s183
      %s185 = sphi 0, %s183
      %s186 = sphi 0, %s185
      %s200 = sphi 0, %s186
      %s204 = sphi 0, %s204
      %s206 = sphi 0, %s204
      %s207 = sphi 0, %s206
      %s221 = sphi 0, %s207
      %s225 = sphi 0, %s225
      %s227 = sphi 0, %s225
      %s228 = sphi 0, %s227
      %s242 = sphi 0, %s228
      %s246 = sphi 0, %s246
      %s248 = sphi 0, %s246
      %s249 = sphi 0, %s248
      %s263 = sphi 0, %s249
      %s267 = sphi 0, %s267
      %s269 = sphi 0, %s267
      %s270 = sphi 0, %s269
      %s284 = sphi 0, %s270
      %s288 = sphi 0, %s288
      %s290 = sphi 0, %s288
      %s291 = sphi 0, %s290
      %s305 = sphi 0, %s291
      %s309 = sphi 0, %s309
      %s311 = sphi 0, %s309
      %s312 = sphi 0, %s311
      %s326 = sphi 0, %s312
      %s330 = sphi 0, %s330
      %s332 = sphi 0, %s330
      %s333 = sphi 0, %s332
      %s347 = sphi 0, %s333
      %s351 = sphi 0, %s351
      %s353 = sphi 0, %s351
      %s354 = sphi 0, %s353
      %s368 = sphi 0, %s354
      %s372 = sphi 0, %s372
      %s374 = sphi 0, %s372
      %s375 = sphi 0, %s374
      %s389 = sphi 0, %s375
      %s393 = sphi 0, %s393
      %s395 = sphi 0, %s393
      %s396 = sphi 0, %s395
      %s410 = sphi 0, %s396
      %s414 = sphi 0, %s414
      %s416 = sphi 0, %s414
      %s417 = sphi 0, %s416
      %s431 = sphi 0, %s417
      %s435 = sphi 0, %s435
      %s437 = sphi 0, %s435
      %s438 = sphi 0, %s437
      %s452 = sphi 0, %s438
      %s456 = sphi 0, %s456
      %s458 = sphi 0, %s456
      %s459 = sphi 0, %s458
      %s473 = sphi 0, %s459
      %s477 = sphi 0, %s477
      %s479 = sphi 0, %s477
      %s480 = sphi 0, %s479
      %s494 = sphi 0, %s480
      %s498 = sphi 0, %s498
      %s500 = sphi 0, %s498
      %s501 = sphi 0, %s500
      %s515 = sphi 0, %s501
      %s521 = sphi 0, %s523
      %s524 = sphi 0, %s521
      %s525 = sphi 0, %s524
      %s541 = sphi 0, %s525
    $region4: #{_lambda_.1} parent=1 // loop_header_branch
      %37 = sbr.rel (%p35) target = $region8
    $region5: #{_lambda_.1} parent=1 // loop_body
      %s39 = ssub.s32 %s34, 1
      %s40 = ssub.s32 %s34, 2
      %s41 = sadd.s32 %s34, 1
      %s42 = ssub.s32 %s34, %s41
      %p43 = scmp.eq.s32.totalorder %s42, 0
      %s45 = sadd.s32 %s44, 1
      %s46 = scalar_select %p43, %s44, %s45
      %p49 = pneg %p43
      %p50 = scmp.eq.s32.totalorder %s34, 1
      %p51 = por %p49, %p50
      %p52 = scmp.ne.s32.totalorder %s44, %s47
      %p53 = scmp.eq.s32.totalorder %s34, 0
      %p54 = por %p52, %p53
      %p55 = scmp.ne.s32.totalorder %s44, %s47
      %p56 = scmp.eq.s32.totalorder %s39, 1
      %p57 = por %p55, %p56
      %p58 = scmp.ne.s32.totalorder %s47, %s48
      %p59 = scmp.eq.s32.totalorder %s39, 0
      %p60 = por %p58, %p59
      %p61 = scmp.ne.s32.totalorder %s47, %s48
      %p62 = scmp.eq.s32.totalorder %s40, 1
      %p63 = por %p61, %p62
      %p65 = scmp.ne.s32.totalorder %s48, %s64
      %p66 = scmp.eq.s32.totalorder %s40, 0
      %p67 = por %p65, %p66
      %s68 = ssub.s32 %s34, %s41
      %p69 = scmp.eq.s32.totalorder %s68, 0
      %s71 = sadd.s32 %s70, 1
      %s72 = scalar_select %p69, %s70, %s71
      %p75 = pneg %p69
      %p76 = scmp.eq.s32.totalorder %s34, 1
      %p77 = por %p75, %p76
      %p78 = scmp.ne.s32.totalorder %s70, %s73
      %p79 = scmp.eq.s32.totalorder %s34, 0
      %p80 = por %p78, %p79
      %p81 = scmp.ne.s32.totalorder %s70, %s73
      %p82 = scmp.eq.s32.totalorder %s39, 1
      %p83 = por %p81, %p82
      %p84 = scmp.ne.s32.totalorder %s73, %s74
      %p85 = scmp.eq.s32.totalorder %s39, 0
      %p86 = por %p84, %p85
      %p87 = scmp.ne.s32.totalorder %s73, %s74
      %p88 = scmp.eq.s32.totalorder %s40, 1
      %p89 = por %p87, %p88
      %p91 = scmp.ne.s32.totalorder %s74, %s90
      %p92 = scmp.eq.s32.totalorder %s40, 0
      %p93 = por %p91, %p92
      %s94 = ssub.s32 %s34, %s41
      %p95 = scmp.eq.s32.totalorder %s94, 0
      %s97 = sadd.s32 %s96, 1
      %s98 = scalar_select %p95, %s96, %s97
      %p101 = pneg %p95
      %p102 = scmp.eq.s32.totalorder %s34, 1
      %p103 = por %p101, %p102
      %p104 = scmp.ne.s32.totalorder %s96, %s99
      %p105 = scmp.eq.s32.totalorder %s34, 0
      %p106 = por %p104, %p105
      %p107 = scmp.ne.s32.totalorder %s96, %s99
      %p108 = scmp.eq.s32.totalorder %s39, 1
      %p109 = por %p107, %p108
      %p110 = scmp.ne.s32.totalorder %s99, %s100
      %p111 = scmp.eq.s32.totalorder %s39, 0
      %p112 = por %p110, %p111
      %p113 = scmp.ne.s32.totalorder %s99, %s100
      %p114 = scmp.eq.s32.totalorder %s40, 1
      %p115 = por %p113, %p114
      %p117 = scmp.ne.s32.totalorder %s100, %s116
      %p118 = scmp.eq.s32.totalorder %s40, 0
      %p119 = por %p117, %p118
      %s121 = sadd.s32 %s120, 1
      %p124 = scmp.eq.s32.totalorder %s34, 1
      %p125 = scmp.ne.s32.totalorder %s120, %s122
      %p126 = scmp.eq.s32.totalorder %s34, 0
      %p127 = por %p125, %p126
      %p128 = scmp.ne.s32.totalorder %s120, %s122
      %p129 = scmp.eq.s32.totalorder %s39, 1
      %p130 = por %p128, %p129
      %p131 = scmp.ne.s32.totalorder %s122, %s123
      %p132 = scmp.eq.s32.totalorder %s39, 0
      %p133 = por %p131, %p132
      %p134 = scmp.ne.s32.totalorder %s122, %s123
      %p135 = scmp.eq.s32.totalorder %s40, 1
      %p136 = por %p134, %p135
      %p138 = scmp.ne.s32.totalorder %s123, %s137
      %p139 = scmp.eq.s32.totalorder %s40, 0
      %p140 = por %p138, %p139
      %s142 = sadd.s32 %s141, 1
      %p145 = scmp.eq.s32.totalorder %s34, 1
      %p146 = scmp.ne.s32.totalorder %s141, %s143
      %p147 = scmp.eq.s32.totalorder %s34, 0
      %p148 = por %p146, %p147
      %p149 = scmp.ne.s32.totalorder %s141, %s143
      %p150 = scmp.eq.s32.totalorder %s39, 1
      %p151 = por %p149, %p150
      %p152 = scmp.ne.s32.totalorder %s143, %s144
      %p153 = scmp.eq.s32.totalorder %s39, 0
      %p154 = por %p152, %p153
      %p155 = scmp.ne.s32.totalorder %s143, %s144
      %p156 = scmp.eq.s32.totalorder %s40, 1
      %p157 = por %p155, %p156
      %p159 = scmp.ne.s32.totalorder %s144, %s158
      %p160 = scmp.eq.s32.totalorder %s40, 0
      %p161 = por %p159, %p160
      %s163 = sadd.s32 %s162, 1
      %p166 = scmp.eq.s32.totalorder %s34, 1
      %p167 = scmp.ne.s32.totalorder %s162, %s164
      %p168 = scmp.eq.s32.totalorder %s34, 0
      %p169 = por %p167, %p168
      %p170 = scmp.ne.s32.totalorder %s162, %s164
      %p171 = scmp.eq.s32.totalorder %s39, 1
      %p172 = por %p170, %p171
      %p173 = scmp.ne.s32.totalorder %s164, %s165
      %p174 = scmp.eq.s32.totalorder %s39, 0
      %p175 = por %p173, %p174
      %p176 = scmp.ne.s32.totalorder %s164, %s165
      %p177 = scmp.eq.s32.totalorder %s40, 1
      %p178 = por %p176, %p177
      %p180 = scmp.ne.s32.totalorder %s165, %s179
      %p181 = scmp.eq.s32.totalorder %s40, 0
      %p182 = por %p180, %p181
      %s184 = sadd.s32 %s183, 1
      %p187 = scmp.eq.s32.totalorder %s34, 1
      %p188 = scmp.ne.s32.totalorder %s183, %s185
      %p189 = scmp.eq.s32.totalorder %s34, 0
      %p190 = por %p188, %p189
      %p191 = scmp.ne.s32.totalorder %s183, %s185
      %p192 = scmp.eq.s32.totalorder %s39, 1
      %p193 = por %p191, %p192
      %p194 = scmp.ne.s32.totalorder %s185, %s186
      %p195 = scmp.eq.s32.totalorder %s39, 0
      %p196 = por %p194, %p195
      %p197 = scmp.ne.s32.totalorder %s185, %s186
      %p198 = scmp.eq.s32.totalorder %s40, 1
      %p199 = por %p197, %p198
      %p201 = scmp.ne.s32.totalorder %s186, %s200
      %p202 = scmp.eq.s32.totalorder %s40, 0
      %p203 = por %p201, %p202
      %s205 = sadd.s32 %s204, 1
      %p208 = scmp.eq.s32.totalorder %s34, 1
      %p209 = scmp.ne.s32.totalorder %s204, %s206
      %p210 = scmp.eq.s32.totalorder %s34, 0
      %p211 = por %p209, %p210
      %p212 = scmp.ne.s32.totalorder %s204, %s206
      %p213 = scmp.eq.s32.totalorder %s39, 1
      %p214 = por %p212, %p213
      %p215 = scmp.ne.s32.totalorder %s206, %s207
      %p216 = scmp.eq.s32.totalorder %s39, 0
      %p217 = por %p215, %p216
      %p218 = scmp.ne.s32.totalorder %s206, %s207
      %p219 = scmp.eq.s32.totalorder %s40, 1
      %p220 = por %p218, %p219
      %p222 = scmp.ne.s32.totalorder %s207, %s221
      %p223 = scmp.eq.s32.totalorder %s40, 0
      %p224 = por %p222, %p223
      %s226 = sadd.s32 %s225, 1
      %p229 = scmp.eq.s32.totalorder %s34, 1
      %p230 = scmp.ne.s32.totalorder %s225, %s227
      %p231 = scmp.eq.s32.totalorder %s34, 0
      %p232 = por %p230, %p231
      %p233 = scmp.ne.s32.totalorder %s225, %s227
      %p234 = scmp.eq.s32.totalorder %s39, 1
      %p235 = por %p233, %p234
      %p236 = scmp.ne.s32.totalorder %s227, %s228
      %p237 = scmp.eq.s32.totalorder %s39, 0
      %p238 = por %p236, %p237
      %p239 = scmp.ne.s32.totalorder %s227, %s228
      %p240 = scmp.eq.s32.totalorder %s40, 1
      %p241 = por %p239, %p240
      %p243 = scmp.ne.s32.totalorder %s228, %s242
      %p244 = scmp.eq.s32.totalorder %s40, 0
      %p245 = por %p243, %p244
      %s247 = sadd.s32 %s246, 1
      %p250 = scmp.eq.s32.totalorder %s34, 1
      %p251 = scmp.ne.s32.totalorder %s246, %s248
      %p252 = scmp.eq.s32.totalorder %s34, 0
      %p253 = por %p251, %p252
      %p254 = scmp.ne.s32.totalorder %s246, %s248
      %p255 = scmp.eq.s32.totalorder %s39, 1
      %p256 = por %p254, %p255
      %p257 = scmp.ne.s32.totalorder %s248, %s249
      %p258 = scmp.eq.s32.totalorder %s39, 0
      %p259 = por %p257, %p258
      %p260 = scmp.ne.s32.totalorder %s248, %s249
      %p261 = scmp.eq.s32.totalorder %s40, 1
      %p262 = por %p260, %p261
      %p264 = scmp.ne.s32.totalorder %s249, %s263
      %p265 = scmp.eq.s32.totalorder %s40, 0
      %p266 = por %p264, %p265
      %s268 = sadd.s32 %s267, 1
      %p271 = scmp.eq.s32.totalorder %s34, 1
      %p272 = scmp.ne.s32.totalorder %s267, %s269
      %p273 = scmp.eq.s32.totalorder %s34, 0
      %p274 = por %p272, %p273
      %p275 = scmp.ne.s32.totalorder %s267, %s269
      %p276 = scmp.eq.s32.totalorder %s39, 1
      %p277 = por %p275, %p276
      %p278 = scmp.ne.s32.totalorder %s269, %s270
      %p279 = scmp.eq.s32.totalorder %s39, 0
      %p280 = por %p278, %p279
      %p281 = scmp.ne.s32.totalorder %s269, %s270
      %p282 = scmp.eq.s32.totalorder %s40, 1
      %p283 = por %p281, %p282
      %p285 = scmp.ne.s32.totalorder %s270, %s284
      %p286 = scmp.eq.s32.totalorder %s40, 0
      %p287 = por %p285, %p286
      %s289 = sadd.s32 %s288, 1
      %p292 = scmp.eq.s32.totalorder %s34, 1
      %p293 = scmp.ne.s32.totalorder %s288, %s290
      %p294 = scmp.eq.s32.totalorder %s34, 0
      %p295 = por %p293, %p294
      %p296 = scmp.ne.s32.totalorder %s288, %s290
      %p297 = scmp.eq.s32.totalorder %s39, 1
      %p298 = por %p296, %p297
      %p299 = scmp.ne.s32.totalorder %s290, %s291
      %p300 = scmp.eq.s32.totalorder %s39, 0
      %p301 = por %p299, %p300
      %p302 = scmp.ne.s32.totalorder %s290, %s291
      %p303 = scmp.eq.s32.totalorder %s40, 1
      %p304 = por %p302, %p303
      %p306 = scmp.ne.s32.totalorder %s291, %s305
      %p307 = scmp.eq.s32.totalorder %s40, 0
      %p308 = por %p306, %p307
      %s310 = sadd.s32 %s309, 1
      %p313 = scmp.eq.s32.totalorder %s34, 1
      %p314 = scmp.ne.s32.totalorder %s309, %s311
      %p315 = scmp.eq.s32.totalorder %s34, 0
      %p316 = por %p314, %p315
      %p317 = scmp.ne.s32.totalorder %s309, %s311
      %p318 = scmp.eq.s32.totalorder %s39, 1
      %p319 = por %p317, %p318
      %p320 = scmp.ne.s32.totalorder %s311, %s312
      %p321 = scmp.eq.s32.totalorder %s39, 0
      %p322 = por %p320, %p321
      %p323 = scmp.ne.s32.totalorder %s311, %s312
      %p324 = scmp.eq.s32.totalorder %s40, 1
      %p325 = por %p323, %p324
      %p327 = scmp.ne.s32.totalorder %s312, %s326
      %p328 = scmp.eq.s32.totalorder %s40, 0
      %p329 = por %p327, %p328
      %s331 = sadd.s32 %s330, 1
      %p334 = scmp.eq.s32.totalorder %s34, 1
      %p335 = scmp.ne.s32.totalorder %s330, %s332
      %p336 = scmp.eq.s32.totalorder %s34, 0
      %p337 = por %p335, %p336
      %p338 = scmp.ne.s32.totalorder %s330, %s332
      %p339 = scmp.eq.s32.totalorder %s39, 1
      %p340 = por %p338, %p339
      %p341 = scmp.ne.s32.totalorder %s332, %s333
      %p342 = scmp.eq.s32.totalorder %s39, 0
      %p343 = por %p341, %p342
      %p344 = scmp.ne.s32.totalorder %s332, %s333
      %p345 = scmp.eq.s32.totalorder %s40, 1
      %p346 = por %p344, %p345
      %p348 = scmp.ne.s32.totalorder %s333, %s347
      %p349 = scmp.eq.s32.totalorder %s40, 0
      %p350 = por %p348, %p349
      %s352 = sadd.s32 %s351, 1
      %p355 = scmp.eq.s32.totalorder %s34, 1
      %p356 = scmp.ne.s32.totalorder %s351, %s353
      %p357 = scmp.eq.s32.totalorder %s34, 0
      %p358 = por %p356, %p357
      %p359 = scmp.ne.s32.totalorder %s351, %s353
      %p360 = scmp.eq.s32.totalorder %s39, 1
      %p361 = por %p359, %p360
      %p362 = scmp.ne.s32.totalorder %s353, %s354
      %p363 = scmp.eq.s32.totalorder %s39, 0
      %p364 = por %p362, %p363
      %p365 = scmp.ne.s32.totalorder %s353, %s354
      %p366 = scmp.eq.s32.totalorder %s40, 1
      %p367 = por %p365, %p366
      %p369 = scmp.ne.s32.totalorder %s354, %s368
      %p370 = scmp.eq.s32.totalorder %s40, 0
      %p371 = por %p369, %p370
      %s373 = sadd.s32 %s372, 1
      %p376 = scmp.eq.s32.totalorder %s34, 1
      %p377 = scmp.ne.s32.totalorder %s372, %s374
      %p378 = scmp.eq.s32.totalorder %s34, 0
      %p379 = por %p377, %p378
      %p380 = scmp.ne.s32.totalorder %s372, %s374
      %p381 = scmp.eq.s32.totalorder %s39, 1
      %p382 = por %p380, %p381
      %p383 = scmp.ne.s32.totalorder %s374, %s375
      %p384 = scmp.eq.s32.totalorder %s39, 0
      %p385 = por %p383, %p384
      %p386 = scmp.ne.s32.totalorder %s374, %s375
      %p387 = scmp.eq.s32.totalorder %s40, 1
      %p388 = por %p386, %p387
      %p390 = scmp.ne.s32.totalorder %s375, %s389
      %p391 = scmp.eq.s32.totalorder %s40, 0
      %p392 = por %p390, %p391
      %s394 = sadd.s32 %s393, 1
      %p397 = scmp.eq.s32.totalorder %s34, 1
      %p398 = scmp.ne.s32.totalorder %s393, %s395
      %p399 = scmp.eq.s32.totalorder %s34, 0
      %p400 = por %p398, %p399
      %p401 = scmp.ne.s32.totalorder %s393, %s395
      %p402 = scmp.eq.s32.totalorder %s39, 1
      %p403 = por %p401, %p402
      %p404 = scmp.ne.s32.totalorder %s395, %s396
      %p405 = scmp.eq.s32.totalorder %s39, 0
      %p406 = por %p404, %p405
      %p407 = scmp.ne.s32.totalorder %s395, %s396
      %p408 = scmp.eq.s32.totalorder %s40, 1
      %p409 = por %p407, %p408
      %p411 = scmp.ne.s32.totalorder %s396, %s410
      %p412 = scmp.eq.s32.totalorder %s40, 0
      %p413 = por %p411, %p412
      %s415 = sadd.s32 %s414, 1
      %p418 = scmp.eq.s32.totalorder %s34, 1
      %p419 = scmp.ne.s32.totalorder %s414, %s416
      %p420 = scmp.eq.s32.totalorder %s34, 0
      %p421 = por %p419, %p420
      %p422 = scmp.ne.s32.totalorder %s414, %s416
      %p423 = scmp.eq.s32.totalorder %s39, 1
      %p424 = por %p422, %p423
      %p425 = scmp.ne.s32.totalorder %s416, %s417
      %p426 = scmp.eq.s32.totalorder %s39, 0
      %p427 = por %p425, %p426
      %p428 = scmp.ne.s32.totalorder %s416, %s417
      %p429 = scmp.eq.s32.totalorder %s40, 1
      %p430 = por %p428, %p429
      %p432 = scmp.ne.s32.totalorder %s417, %s431
      %p433 = scmp.eq.s32.totalorder %s40, 0
      %p434 = por %p432, %p433
      %s436 = sadd.s32 %s435, 1
      %p439 = scmp.eq.s32.totalorder %s34, 1
      %p440 = scmp.ne.s32.totalorder %s435, %s437
      %p441 = scmp.eq.s32.totalorder %s34, 0
      %p442 = por %p440, %p441
      %p443 = scmp.ne.s32.totalorder %s435, %s437
      %p444 = scmp.eq.s32.totalorder %s39, 1
      %p445 = por %p443, %p444
      %p446 = scmp.ne.s32.totalorder %s437, %s438
      %p447 = scmp.eq.s32.totalorder %s39, 0
      %p448 = por %p446, %p447
      %p449 = scmp.ne.s32.totalorder %s437, %s438
      %p450 = scmp.eq.s32.totalorder %s40, 1
      %p451 = por %p449, %p450
      %p453 = scmp.ne.s32.totalorder %s438, %s452
      %p454 = scmp.eq.s32.totalorder %s40, 0
      %p455 = por %p453, %p454
      %s457 = sadd.s32 %s456, 1
      %p460 = scmp.eq.s32.totalorder %s34, 1
      %p461 = scmp.ne.s32.totalorder %s456, %s458
      %p462 = scmp.eq.s32.totalorder %s34, 0
      %p463 = por %p461, %p462
      %p464 = scmp.ne.s32.totalorder %s456, %s458
      %p465 = scmp.eq.s32.totalorder %s39, 1
      %p466 = por %p464, %p465
      %p467 = scmp.ne.s32.totalorder %s458, %s459
      %p468 = scmp.eq.s32.totalorder %s39, 0
      %p469 = por %p467, %p468
      %p470 = scmp.ne.s32.totalorder %s458, %s459
      %p471 = scmp.eq.s32.totalorder %s40, 1
      %p472 = por %p470, %p471
      %p474 = scmp.ne.s32.totalorder %s459, %s473
      %p475 = scmp.eq.s32.totalorder %s40, 0
      %p476 = por %p474, %p475
      %s478 = sadd.s32 %s477, 1
      %p481 = scmp.eq.s32.totalorder %s34, 1
      %p482 = scmp.ne.s32.totalorder %s477, %s479
      %p483 = scmp.eq.s32.totalorder %s34, 0
      %p484 = por %p482, %p483
      %p485 = scmp.ne.s32.totalorder %s477, %s479
      %p486 = scmp.eq.s32.totalorder %s39, 1
      %p487 = por %p485, %p486
      %p488 = scmp.ne.s32.totalorder %s479, %s480
      %p489 = scmp.eq.s32.totalorder %s39, 0
      %p490 = por %p488, %p489
      %p491 = scmp.ne.s32.totalorder %s479, %s480
      %p492 = scmp.eq.s32.totalorder %s40, 1
      %p493 = por %p491, %p492
      %p495 = scmp.ne.s32.totalorder %s480, %s494
      %p496 = scmp.eq.s32.totalorder %s40, 0
      %p497 = por %p495, %p496
      %s499 = sadd.s32 %s498, 1
      %p502 = scmp.eq.s32.totalorder %s34, 1
      %p503 = scmp.ne.s32.totalorder %s498, %s500
      %p504 = scmp.eq.s32.totalorder %s34, 0
      %p505 = por %p503, %p504
      %p506 = scmp.ne.s32.totalorder %s498, %s500
      %p507 = scmp.eq.s32.totalorder %s39, 1
      %p508 = por %p506, %p507
      %p509 = scmp.ne.s32.totalorder %s500, %s501
      %p510 = scmp.eq.s32.totalorder %s39, 0
      %p511 = por %p509, %p510
      %p512 = scmp.ne.s32.totalorder %s500, %s501
      %p513 = scmp.eq.s32.totalorder %s40, 1
      %p514 = por %p512, %p513
      %p516 = scmp.ne.s32.totalorder %s501, %s515
      %p517 = scmp.eq.s32.totalorder %s40, 0
      %p518 = por %p516, %p517
      %s519 = ssub.s32 %s34, %s41
      %p520 = scmp.eq.s32.totalorder %s519, 0
      %s522 = sadd.s32 %s521, 1
      %s523 = scalar_select %p520, %s521, %s522
      %p526 = pneg %p520
      %p527 = scmp.eq.s32.totalorder %s34, 1
      %p528 = por %p526, %p527
      %p529 = scmp.ne.s32.totalorder %s521, %s524
      %p530 = scmp.eq.s32.totalorder %s34, 0
      %p531 = por %p529, %p530
      %p532 = scmp.ne.s32.totalorder %s521, %s524
      %p533 = scmp.eq.s32.totalorder %s39, 1
      %p534 = por %p532, %p533
      %p535 = scmp.ne.s32.totalorder %s524, %s525
      %p536 = scmp.eq.s32.totalorder %s39, 0
      %p537 = por %p535, %p536
      %p538 = scmp.ne.s32.totalorder %s524, %s525
      %p539 = scmp.eq.s32.totalorder %s40, 1
      %p540 = por %p538, %p539
      %p542 = scmp.ne.s32.totalorder %s525, %s541
      %p543 = scmp.eq.s32.totalorder %s40, 0
      %p544 = por %p542, %p543
      %p545 = scmp.le.s32.totalorder 1, %s34
      %p546 = scmp.lt.s32.totalorder %s34, 3
      %p547 = pnand %p545, %p546
      %p548 = pneg %p547
      // Predicated region
      $region9: #{_lambda_.1} parent=5 // pred_check
        _
      $region10: #{_lambda_.1} parent=5 // pred_check_branch
        %550 = sbr.rel (%p547) target = $region12
      $region11: #{_lambda_.1} parent=5 // pred_region
        %s551 = ssub.s32 %s34, 1
        // Predicated region
        $region13: #{_lambda_.1} parent=11 // pred_check
          %p552 = pneg %p133
        $region14: #{_lambda_.1} parent=11 // pred_check_branch
          %554 = sbr.rel (%p552) target = $region16
        $region15: #{_lambda_.1} parent=11 // pred_region
          _
        $region16: #{_lambda_.1} parent=11 // pred_fallthru
          _
        // Predicated region
        $region17: #{_lambda_.1} parent=11 // pred_check
          %p555 = pneg %p154
        $region18: #{_lambda_.1} parent=11 // pred_check_branch
          %557 = sbr.rel (%p555) target = $region20
        $region19: #{_lambda_.1} parent=11 // pred_region
          _
        $region20: #{_lambda_.1} parent=11 // pred_fallthru
          _
        // Predicated region
        $region21: #{_lambda_.1} parent=11 // pred_check
          %p558 = pneg %p175
        $region22: #{_lambda_.1} parent=11 // pred_check_branch
          %560 = sbr.rel (%p558) target = $region24
        $region23: #{_lambda_.1} parent=11 // pred_region
          %s562 = ssub.s32 128, 128
          %563 = vsyncadd [#allocation3], %s562
          %s565 = sshll.u32 [#allocation2], 4
          %s566 = int_to_ptr.vmem [resolvable:$true] %s565
          %568 = dma.hbm_to_vmem [thread:$0]  %s5, 128, %s566, [#allocation3]
        $region24: #{_lambda_.1} parent=11 // pred_fallthru
          _
        // Predicated region
        $region25: #{_lambda_.1} parent=11 // pred_check
          %p569 = pneg %p196
        $region26: #{_lambda_.1} parent=11 // pred_check_branch
          %571 = sbr.rel (%p569) target = $region28
        $region27: #{_lambda_.1} parent=11 // pred_region
          _
        $region28: #{_lambda_.1} parent=11 // pred_fallthru
          _
        // Predicated region
        $region29: #{_lambda_.1} parent=11 // pred_check
          %p572 = pneg %p217
        $region30: #{_lambda_.1} parent=11 // pred_check_branch
          %574 = sbr.rel (%p572) target = $region32
        $region31: #{_lambda_.1} parent=11 // pred_region
          _
        $region32: #{_lambda_.1} parent=11 // pred_fallthru
          _
        // Predicated region
        $region33: #{_lambda_.1} parent=11 // pred_check
          %p575 = pneg %p238
        $region34: #{_lambda_.1} parent=11 // pred_check_branch
          %577 = sbr.rel (%p575) target = $region36
        $region35: #{_lambda_.1} parent=11 // pred_region
          %s579 = ssub.s32 512, 512
          %580 = vsyncadd [#allocation6], %s579
          %s581 = sshll.u32 [#allocation5], 4
          %s582 = int_to_ptr.vmem [resolvable:$true] %s581
          %587 = dma.hbm_to_vmem [thread:$0]  %s8, 512, %s582, [#allocation6], 64, 64, 4
        $region36: #{_lambda_.1} parent=11 // pred_fallthru
          _
        // Predicated region
        $region37: #{_lambda_.1} parent=11 // pred_check
          %p588 = pneg %p259
        $region38: #{_lambda_.1} parent=11 // pred_check_branch
          %590 = sbr.rel (%p588) target = $region40
        $region39: #{_lambda_.1} parent=11 // pred_region
          _
        $region40: #{_lambda_.1} parent=11 // pred_fallthru
          _
        // Predicated region
        $region41: #{_lambda_.1} parent=11 // pred_check
          %p591 = pneg %p280
        $region42: #{_lambda_.1} parent=11 // pred_check_branch
          %593 = sbr.rel (%p591) target = $region44
        $region43: #{_lambda_.1} parent=11 // pred_region
          %s595 = ssub.s32 1024, 1024
          %596 = vsyncadd [#allocation6], %s595
          %s597 = sshll.u32 [#allocation7], 4
          %s598 = int_to_ptr.vmem [resolvable:$true] %s597
          %603 = dma.hbm_to_vmem [thread:$0]  %s10, 1024, %s598, [#allocation6], 64, 64, 4
        $region44: #{_lambda_.1} parent=11 // pred_fallthru
          _
        // Predicated region
        $region45: #{_lambda_.1} parent=11 // pred_check
          %p604 = pneg %p301
        $region46: #{_lambda_.1} parent=11 // pred_check_branch
          %606 = sbr.rel (%p604) target = $region48
        $region47: #{_lambda_.1} parent=11 // pred_region
          _
        $region48: #{_lambda_.1} parent=11 // pred_fallthru
          _
        // Predicated region
        $region49: #{_lambda_.1} parent=11 // pred_check
          %p607 = pneg %p322
        $region50: #{_lambda_.1} parent=11 // pred_check_branch
          %609 = sbr.rel (%p607) target = $region52
        $region51: #{_lambda_.1} parent=11 // pred_region
          _
        $region52: #{_lambda_.1} parent=11 // pred_fallthru
          _
        // Predicated region
        $region53: #{_lambda_.1} parent=11 // pred_check
          %p610 = pneg %p343
        $region54: #{_lambda_.1} parent=11 // pred_check_branch
          %612 = sbr.rel (%p610) target = $region56
        $region55: #{_lambda_.1} parent=11 // pred_region
          _
        $region56: #{_lambda_.1} parent=11 // pred_fallthru
          _
        // Predicated region
        $region57: #{_lambda_.1} parent=11 // pred_check
          %p613 = pneg %p364
        $region58: #{_lambda_.1} parent=11 // pred_check_branch
          %615 = sbr.rel (%p613) target = $region60
        $region59: #{_lambda_.1} parent=11 // pred_region
          %s617 = ssub.s32 512, 512
          %618 = vsyncadd [#allocation9], %s617
          %s619 = sshll.u32 [#allocation8], 4
          %s620 = int_to_ptr.vmem [resolvable:$true] %s619
          %625 = dma.hbm_to_vmem [thread:$0]  %s14, 512, %s620, [#allocation9], 64, 64, 4
        $region60: #{_lambda_.1} parent=11 // pred_fallthru
          _
        // Predicated region
        $region61: #{_lambda_.1} parent=11 // pred_check
          %p626 = pneg %p385
        $region62: #{_lambda_.1} parent=11 // pred_check_branch
          %628 = sbr.rel (%p626) target = $region64
        $region63: #{_lambda_.1} parent=11 // pred_region
          _
        $region64: #{_lambda_.1} parent=11 // pred_fallthru
          _
        // Predicated region
        $region65: #{_lambda_.1} parent=11 // pred_check
          %p629 = pneg %p406
        $region66: #{_lambda_.1} parent=11 // pred_check_branch
          %631 = sbr.rel (%p629) target = $region68
        $region67: #{_lambda_.1} parent=11 // pred_region
          _
        $region68: #{_lambda_.1} parent=11 // pred_fallthru
          _
        // Predicated region
        $region69: #{_lambda_.1} parent=11 // pred_check
          %p632 = pneg %p427
        $region70: #{_lambda_.1} parent=11 // pred_check_branch
          %634 = sbr.rel (%p632) target = $region72
        $region71: #{_lambda_.1} parent=11 // pred_region
          _
        $region72: #{_lambda_.1} parent=11 // pred_fallthru
          _
        // Predicated region
        $region73: #{_lambda_.1} parent=11 // pred_check
          %p635 = pneg %p448
        $region74: #{_lambda_.1} parent=11 // pred_check_branch
          %637 = sbr.rel (%p635) target = $region76
        $region75: #{_lambda_.1} parent=11 // pred_region
          _
        $region76: #{_lambda_.1} parent=11 // pred_fallthru
          _
        // Predicated region
        $region77: #{_lambda_.1} parent=11 // pred_check
          %p638 = pneg %p469
        $region78: #{_lambda_.1} parent=11 // pred_check_branch
          %640 = sbr.rel (%p638) target = $region80
        $region79: #{_lambda_.1} parent=11 // pred_region
          _
        $region80: #{_lambda_.1} parent=11 // pred_fallthru
          _
        // Predicated region
        $region81: #{_lambda_.1} parent=11 // pred_check
          %p641 = pneg %p490
        $region82: #{_lambda_.1} parent=11 // pred_check_branch
          %643 = sbr.rel (%p641) target = $region84
        $region83: #{_lambda_.1} parent=11 // pred_region
          _
        $region84: #{_lambda_.1} parent=11 // pred_fallthru
          _
        // Predicated region
        $region85: #{_lambda_.1} parent=11 // pred_check
          %p644 = pneg %p511
        $region86: #{_lambda_.1} parent=11 // pred_check_branch
          %646 = sbr.rel (%p644) target = $region88
        $region87: #{_lambda_.1} parent=11 // pred_region
          _
        $region88: #{_lambda_.1} parent=11 // pred_fallthru
          _
      $region12: #{_lambda_.1} parent=5 // pred_fallthru
        _
      %p647 = scmp.lt.s32.totalorder %s34, 2
      // Predicated region
      $region89: #{_lambda_.1} parent=5 // pred_check
        %p648 = pneg %p647
      $region90: #{_lambda_.1} parent=5 // pred_check_branch
        %650 = sbr.rel (%p648) target = $region92
      $region91: #{_lambda_.1} parent=5 // pred_region
        // Predicated region
        $region93: #{_lambda_.1} parent=91 // pred_check
          %p651 = pneg %p54
        $region94: #{_lambda_.1} parent=91 // pred_check_branch
          %653 = sbr.rel (%p651) target = $region96
        $region95: #{_lambda_.1} parent=91 // pred_region
          %p654 = scmp.lt.s32.totalorder %s34, 1
          %s655 = scalar_select %p654, %s34, 1
          %s656 = smul.addr %s655, 8
          %s657 = scalar_lea.vmem %s0, %s656
        $region96: #{_lambda_.1} parent=91 // pred_fallthru
          _
        // Predicated region
        $region97: #{_lambda_.1} parent=91 // pred_check
          %p658 = pneg %p80
        $region98: #{_lambda_.1} parent=91 // pred_check_branch
          %660 = sbr.rel (%p658) target = $region100
        $region99: #{_lambda_.1} parent=91 // pred_region
          %p661 = scmp.lt.s32.totalorder %s34, 1
          %s662 = scalar_select %p661, %s34, 1
          %s663 = smul.addr %s662, 8
          %s664 = scalar_lea.vmem %s1, %s663
        $region100: #{_lambda_.1} parent=91 // pred_fallthru
          _
        // Predicated region
        $region101: #{_lambda_.1} parent=91 // pred_check
          %p665 = pneg %p106
        $region102: #{_lambda_.1} parent=91 // pred_check_branch
          %667 = sbr.rel (%p665) target = $region104
        $region103: #{_lambda_.1} parent=91 // pred_region
          %p668 = scmp.lt.s32.totalorder %s34, 1
          %s669 = scalar_select %p668, %s34, 1
          %s670 = scalar_lea.vmem %s2, %s669
        $region104: #{_lambda_.1} parent=91 // pred_fallthru
          _
      $region92: #{_lambda_.1} parent=5 // pred_fallthru
        _
      %p671 = scmp.le.s32.totalorder 1, %s34
      %p672 = scmp.lt.s32.totalorder %s34, 3
      %p673 = pnand %p671, %p672
      %p674 = pneg %p673
      // Predicated region
      $region105: #{_lambda_.1} parent=5 // pred_check
        _
      $region106: #{_lambda_.1} parent=5 // pred_check_branch
        %676 = sbr.rel (%p673) target = $region108
      $region107: #{_lambda_.1} parent=5 // pred_region
        %s677 = ssub.s32 %s34, 1
        // Predicated region
        $region109: #{_lambda_.1} parent=107 // pred_check
          %p678 = pneg %p175
        $region110: #{_lambda_.1} parent=107 // pred_check_branch
          %680 = sbr.rel (%p678) target = $region112
        $region111: #{_lambda_.1} parent=107 // pred_region
          %681 = dma.done [#allocation3], 128
        $region112: #{_lambda_.1} parent=107 // pred_fallthru
          _
        // Predicated region
        $region113: #{_lambda_.1} parent=107 // pred_check
          %p682 = pneg %p238
        $region114: #{_lambda_.1} parent=107 // pred_check_branch
          %684 = sbr.rel (%p682) target = $region116
        $region115: #{_lambda_.1} parent=107 // pred_region
          %685 = dma.done [#allocation6], 512
        $region116: #{_lambda_.1} parent=107 // pred_fallthru
          _
        // Predicated region
        $region117: #{_lambda_.1} parent=107 // pred_check
          %p686 = pneg %p280
        $region118: #{_lambda_.1} parent=107 // pred_check_branch
          %688 = sbr.rel (%p686) target = $region120
        $region119: #{_lambda_.1} parent=107 // pred_region
          %689 = dma.done [#allocation6], 1024
        $region120: #{_lambda_.1} parent=107 // pred_fallthru
          _
        // Predicated region
        $region121: #{_lambda_.1} parent=107 // pred_check
          %p690 = pneg %p364
        $region122: #{_lambda_.1} parent=107 // pred_check_branch
          %692 = sbr.rel (%p690) target = $region124
        $region123: #{_lambda_.1} parent=107 // pred_region
          %693 = dma.done [#allocation9], 512
        $region124: #{_lambda_.1} parent=107 // pred_fallthru
          _
        %p694 = scmp.lt.s32.totalorder %s39, 1
        %s695 = scalar_select %p694, %s39, 1
        %s696 = smul.addr %s695, 8
        %s697 = scalar_lea.vmem %s0, %s696
        %p698 = pneg %p60
        %p699 = pneg %p57
        %p700 = scmp.lt.s32.totalorder %s39, 1
        %s701 = scalar_select %p700, %s39, 1
        %s702 = smul.addr %s701, 8
        %s703 = scalar_lea.vmem %s1, %s702
        %p704 = pneg %p86
        %p705 = pneg %p83
        %p706 = scmp.lt.s32.totalorder %s39, 1
        %s707 = scalar_select %p706, %s39, 1
        %s708 = scalar_lea.vmem %s2, %s707
        %p709 = pneg %p112
        %p710 = pneg %p109
        %p711 = pneg %p133
        %p712 = pneg %p130
        %p713 = pneg %p154
        %p714 = pneg %p151
        %p715 = pneg %p175
        %p716 = pneg %p172
        %p717 = pneg %p196
        %p718 = pneg %p193
        %p719 = pneg %p217
        %p720 = pneg %p214
        %p721 = pneg %p238
        %p722 = pneg %p235
        %p723 = pneg %p259
        %p724 = pneg %p256
        %p725 = pneg %p280
        %p726 = pneg %p277
        %p727 = pneg %p301
        %p728 = pneg %p298
        %p729 = pneg %p322
        %p730 = pneg %p319
        %p731 = pneg %p343
        %p732 = pneg %p340
        %p733 = pneg %p364
        %p734 = pneg %p361
        %p735 = pneg %p385
        %p736 = pneg %p382
        %p737 = pneg %p406
        %p738 = pneg %p403
        %p739 = pneg %p427
        %p740 = pneg %p424
        %p741 = pneg %p448
        %p742 = pneg %p445
        %p743 = pneg %p469
        %p744 = pneg %p466
        %p745 = pneg %p490
        %p746 = pneg %p487
        %p747 = pneg %p511
        %p748 = pneg %p508
        %p749 = pneg %p537
        %p750 = pneg %p534
        %s751 = sand.u32 %s524, 1
        %s752 = scalar_lea.sflag [#allocation4], %s751
        %s753 = sand.u32 %s524, 1
        %s754 = scalar_lea.vmem [#allocation10], %s753
        %p755 = scmp.lt.s32.totalorder %s39, 1
        %s756 = scalar_select %p755, %s39, 1
        %s757 = smul.addr %s756, 8
        %s758 = scalar_lea.vmem %s0, %s757
        %p759 = scmp.lt.s32.totalorder %s39, 1
        %s760 = scalar_select %p759, %s39, 1
        %s761 = smul.addr %s760, 8
        %s762 = scalar_lea.vmem %s1, %s761
        %p763 = scmp.lt.s32.totalorder %s39, 1
        %s764 = scalar_select %p763, %s39, 1
        %s765 = scalar_lea.vmem %s2, %s764
        %v767 = vld [vmem:[%s758] sm:$0xff]
        %v768 = vlaneseq
        %v769 = vand.u32 %v768, 127
        %770 = vset.pattern.permute.xlu0 0
        %771 = vperm.xlu0 %770, %v767
        %v772 = vpop.permute.xlu0 %771
        %vm773 = vcmp.eq.s32.totalorder %v772, %v769
        %v774 = vsel %vm773, 1.0, 0.0
        %v775 = vpack.c.bf16 %v774, %v774
        %v776 = vld [vmem:[%s3] sm:$0xf]
        %v777 = vld [vmem:[%s3 + $0x4] sm:$0xf]
        %v778 = vld [vmem:[%s3 + $0x8] sm:$0xf]
        %v779 = vld [vmem:[%s3 + $0xc] sm:$0xf]
        %v780 = vld [vmem:[%s3 + $0x10] sm:$0xf]
        %v781 = vld [vmem:[%s3 + $0x14] sm:$0xf]
        %v782 = vld [vmem:[%s3 + $0x18] sm:$0xf]
        %v783 = vld [vmem:[%s3 + $0x1c] sm:$0xf]
        %v784 = vld [vmem:[%s3 + $0x20] sm:$0xf]
        %v785 = vld [vmem:[%s3 + $0x24] sm:$0xf]
        %v786 = vld [vmem:[%s3 + $0x28] sm:$0xf]
        %v787 = vld [vmem:[%s3 + $0x2c] sm:$0xf]
        %v788 = vld [vmem:[%s3 + $0x30] sm:$0x3]
        %v789 = vld [vmem:[%s762] sm:$0xff]
        %v790 = vcvt.s32.f32 %v789
        %v791 = vsub.f32 1.0, %v790
        %v792 = vld [vmem:[%s4] sm:$0x1]
        %794 = vset.pattern.permute.xlu0 0
        %795 = vperm.xlu0 %794, %v791
        %v796 = vpop.permute.xlu0 %795
        %v798 = vlaneseq
        %v799 = vshrl.u32 %v798, 7
        %v800 = vsub.s32 0, %v799
        %v801 = vrot.slane %v792, %v800
        %v802 = vmul.f32 %v796, %v801
        %v803 = vld [vmem:[%s4 + $0x1] sm:$0x1]
        %805 = vset.pattern.permute.xlu0 0
        %806 = vperm.xlu0 %805, %v790
        %v807 = vpop.permute.xlu0 %806
        %v809 = vlaneseq
        %v810 = vshrl.u32 %v809, 7
        %v811 = vsub.s32 0, %v810
        %v812 = vrot.slane %v803, %v811
        %v813 = vmul.f32 %v807, %v812
        %v814 = vadd.f32 %v802, %v813
        %v815 = vld [vmem:[#allocation2] sm:$0xff]
        %v829 = vunpack.c.l.b16 %v776
        %v830 = vunpack.c.l.b16 %v777
        %v831 = vunpack.c.l.b16 %v778
        %v832 = vunpack.c.l.b16 %v779
        %v833 = vunpack.c.l.b16 %v780
        %v834 = vunpack.c.l.b16 %v781
        %v835 = vunpack.c.l.b16 %v782
        %v836 = vunpack.c.l.b16 %v783
        %v837 = vunpack.c.l.b16 %v784
        %v838 = vunpack.c.l.b16 %v785
        %v839 = vunpack.c.l.b16 %v786
        %v840 = vunpack.c.l.b16 %v787
        %v841 = vunpack.c.l.b16 %v788
        %v842 = vpack.c.b16 %v830, %v829
        %v843 = vpack.c.b16 %v832, %v831
        %v844 = vpack.c.b16 %v834, %v833
        %v845 = vpack.c.b16 %v836, %v835
        %v846 = vpack.c.b16 %v838, %v837
        %v847 = vpack.c.b16 %v840, %v839
        %v848 = vpack.c.b16 %v841, %v841
        %vm855 = vcmask 818176
        %v857 = vsel %vm855, %v775, 0
        %vm859 = vcmask 1041408
        %v861 = vsel %vm859, %v848, 0
        %863 = vmatprep.subr.bf16.mxu0 0
        %864 = vmatpush1.bf16.msra.mxu0 %v842
        %865 = vmatprep.subr.bf16.mxu0 0
        %866 = vmatpush1.bf16.msra.mxu0 %v843
        %867 = vmatprep.subr.bf16.mxu0 0
        %868 = vmatpush1.bf16.msra.mxu0 %v844
        %869 = vmatprep.subr.bf16.mxu0 0
        %870 = vmatpush1.bf16.msra.mxu0 %v845
        %871 = vmatprep.subr.bf16.mxu0 0
        %872 = vmatpush1.bf16.msra.mxu0 %v846
        %873 = vmatprep.subr.bf16.mxu0 0
        %874 = vmatpush1.bf16.msra.mxu0 %v847
        %875 = vmatprep.subr.bf16.mxu0 0
        %876 = vmatpush1.bf16.msra.mxu0 %v861
        %877 = vmatprep.subr.bf16.mxu0 0
        %878 = vmatpush1.bf16.msra.mxu0 0
        %879 = vmatprep.subr.bf16.mxu0 0
        %880 = vmatpush1.bf16.msra.mxu0 0
        %881 = vmatprep.subr.bf16.mxu0 0
        %882 = vmatpush1.bf16.msra.mxu0 0
        %883 = vmatprep.subr.bf16.mxu0 0
        %884 = vmatpush1.bf16.msra.mxu0 0
        %885 = vmatprep.subr.bf16.mxu0 0
        %886 = vmatpush1.bf16.msra.mxu0 0
        %887 = vmatprep.subr.bf16.mxu0 0
        %888 = vmatpush1.bf16.msra.mxu0 0
        %889 = vmatprep.subr.bf16.mxu0 0
        %890 = vmatpush1.bf16.msra.mxu0 0
        %891 = vmatprep.subr.bf16.mxu0 0
        %892 = vmatpush1.bf16.msra.mxu0 0
        %893 = vmatprep.subr.bf16.mxu0 0
        %894 = vmatpush1.bf16.msra.mxu0 0
        %895 = vmatprep.mubr.bf16.mxu0 0
        %896 = vmatmul.mubr.bf16.gmra.mrb[0].mxu0 %v857
        %v897 = vpop.f32.mrb[0].mxu0
        %v898 = vadd.f32 %v814, %v897
        %v899 = vpop.f32.mrb[0].mxu0
        %v900 = vpop.f32.mrb[0].mxu0
        %v901 = vpop.f32.mrb[0].mxu0
        %902 = vdwg.mxu0
        %v903 = vadd.f32 %v898, %v815
        %v904 = vld [vmem:[%s6] sm:$0x1]
        %v905 = vld [vmem:[%s7] sm:$0x1]
        %vm906 = vcmask 261120
        %v907 = vsel %vm906, %v903, 0.0
        %908 = vadd.xlane.f32.xlu0 %v907
        %v909 = vpop.xlane.xlu0 %908
        %v910 = vrcp.pop 32.0
        %v911 = vmul.f32 %v909, %v910
        %v912 = vsub.f32 %v903, %v911
        %v913 = vmul.f32 %v912, %v912
        %v914 = vsel %vm906, %v913, 0.0
        %915 = vadd.xlane.f32.xlu0 %v914
        %v916 = vpop.xlane.xlu0 %915
        %v917 = vmul.f32 %v916, %v910
        %v918 = vadd.f32 %v917, 1e-12
        %v919 = vrsqrt.pop %v918
        %v920 = vmul.f32 %v912, %v919
        %v922 = vlaneseq
        %v923 = vshrl.u32 %v922, 7
        %v924 = vsub.s32 0, %v923
        %v925 = vrot.slane %v904, %v924
        %v927 = vmul.f32 %v920, %v925
        %v929 = vlaneseq
        %v930 = vshrl.u32 %v929, 7
        %v931 = vsub.s32 0, %v930
        %v932 = vrot.slane %v905, %v931
        %v934 = vadd.f32 %v927, %v932
        %v935 = vld [vmem:[%s765] sm:$0x1]
        %vm936 = vcmp.ge.s32.totalorder %v769, 0
        %vm937 = vcmp.lt.s32.totalorder %v769, 16
        %vm938 = vmand %vm936, %vm937
        %v939 = vsel %vm938, 1.0, 0.0
        %vm940 = vcmp.ge.s32.totalorder %v769, 16
        %vm941 = vcmp.lt.s32.totalorder %v769, 32
        %vm942 = vmand %vm940, %vm941
        %v943 = vsel %vm942, 1.0, 0.0
        %v944 = vpack.c.bf16 %v934, %v934
        %v945 = vld [vmem:[#allocation5] sm:$0xf]
        %v946 = vld [vmem:[#allocation5 + $0x4] sm:$0xf]
        %v947 = vld [vmem:[#allocation5 + $0x8] sm:$0xf]
        %v948 = vld [vmem:[#allocation5 + $0xc] sm:$0xf]
        %v949 = vld [vmem:[%s9] sm:$0x1]
        %v951 = vlaneseq
        %v952 = vshrl.u32 %v951, 7
        %v953 = vsub.s32 0, %v952
        %v954 = vrot.slane %v949, %v953
        %v960 = vunpack.c.l.b16 %v945
        %v961 = vunpack.c.l.b16 %v946
        %v962 = vunpack.c.l.b16 %v947
        %v963 = vunpack.c.l.b16 %v948
        %v964 = vpack.c.b16 %v961, %v960
        %v965 = vpack.c.b16 %v963, %v962
        %v969 = vsel %vm906, %v944, 0
        %971 = vmatprep.subr.bf16.mxu0 0
        %972 = vmatpush1.bf16.msra.mxu0 %v964
        %973 = vmatprep.subr.bf16.mxu0 0
        %974 = vmatpush1.bf16.msra.mxu0 %v965
        %975 = vmatprep.subr.bf16.mxu0 0
        %976 = vmatpush1.bf16.msra.mxu0 0
        %977 = vmatprep.subr.bf16.mxu0 0
        %978 = vmatpush1.bf16.msra.mxu0 0
        %979 = vmatprep.subr.bf16.mxu0 0
        %980 = vmatpush1.bf16.msra.mxu0 0
        %981 = vmatprep.subr.bf16.mxu0 0
        %982 = vmatpush1.bf16.msra.mxu0 0
        %983 = vmatprep.subr.bf16.mxu0 0
        %984 = vmatpush1.bf16.msra.mxu0 0
        %985 = vmatprep.subr.bf16.mxu0 0
        %986 = vmatpush1.bf16.msra.mxu0 0
        %987 = vmatprep.subr.bf16.mxu0 0
        %988 = vmatpush1.bf16.msra.mxu0 0
        %989 = vmatprep.subr.bf16.mxu0 0
        %990 = vmatpush1.bf16.msra.mxu0 0
        %991 = vmatprep.subr.bf16.mxu0 0
        %992 = vmatpush1.bf16.msra.mxu0 0
        %993 = vmatprep.subr.bf16.mxu0 0
        %994 = vmatpush1.bf16.msra.mxu0 0
        %995 = vmatprep.subr.bf16.mxu0 0
        %996 = vmatpush1.bf16.msra.mxu0 0
        %997 = vmatprep.subr.bf16.mxu0 0
        %998 = vmatpush1.bf16.msra.mxu0 0
        %999 = vmatprep.subr.bf16.mxu0 0
        %1000 = vmatpush1.bf16.msra.mxu0 0
        %1001 = vmatprep.subr.bf16.mxu0 0
        %1002 = vmatpush1.bf16.msra.mxu0 0
        %1003 = vmatprep.mubr.bf16.mxu0 0
        %1004 = vmatmul.mubr.bf16.gmra.mrb[0].mxu0 %v969
        %v1005 = vpop.f32.mrb[0].mxu0
        %v1006 = vadd.f32 %v954, %v1005
        %v1007 = vpop.f32.mrb[0].mxu0
        %v1008 = vpop.f32.mrb[0].mxu0
        %v1009 = vpop.f32.mrb[0].mxu0
        %1010 = vdwg.mxu0
        %v1011 = vpack.c.bf16 %v1006, %v1006
        %v1012 = vmul.f32 %v1006, %v939
        %v1013 = vpack.c.bf16 %v1012, %v1012
        %1015 = vrot.lane.b32.xlu0 %v1011, 96
        %v1016 = vpop.permute.xlu0 %1015
        %v1018 = vsel %vm906, %v1013, 0
        %v1021 = vsel %vm906, %v1016, 0
        %1023 = vmatprep.subr.bf16.mxu0 0
        %1024 = vmatpush1.bf16.xpose.msra.mxu0 %v1021
        %1025 = vmatprep.subr.bf16.mxu0 0
        %1026 = vmatpush1.bf16.xpose.msra.mxu0 0
        %1027 = vmatprep.subr.bf16.mxu0 0
        %1028 = vmatpush1.bf16.xpose.msra.mxu0 0
        %1029 = vmatprep.subr.bf16.mxu0 0
        %1030 = vmatpush1.bf16.xpose.msra.mxu0 0
        %1031 = vmatprep.subr.bf16.mxu0 0
        %1032 = vmatpush1.bf16.xpose.msra.mxu0 0
        %1033 = vmatprep.subr.bf16.mxu0 0
        %1034 = vmatpush1.bf16.xpose.msra.mxu0 0
        %1035 = vmatprep.subr.bf16.mxu0 0
        %1036 = vmatpush1.bf16.xpose.msra.mxu0 0
        %1037 = vmatprep.subr.bf16.mxu0 0
        %1038 = vmatpush1.bf16.xpose.msra.mxu0 0
        %1039 = vmatprep.subr.bf16.mxu0 0
        %1040 = vmatpush1.bf16.xpose.msra.mxu0 0
        %1041 = vmatprep.subr.bf16.mxu0 0
        %1042 = vmatpush1.bf16.xpose.msra.mxu0 0
        %1043 = vmatprep.subr.bf16.mxu0 0
        %1044 = vmatpush1.bf16.xpose.msra.mxu0 0
        %1045 = vmatprep.subr.bf16.mxu0 0
        %1046 = vmatpush1.bf16.xpose.msra.mxu0 0
        %1047 = vmatprep.subr.bf16.mxu0 0
        %1048 = vmatpush1.bf16.xpose.msra.mxu0 0
        %1049 = vmatprep.subr.bf16.mxu0 0
        %1050 = vmatpush1.bf16.xpose.msra.mxu0 0
        %1051 = vmatprep.subr.bf16.mxu0 0
        %1052 = vmatpush1.bf16.xpose.msra.mxu0 0
        %1053 = vmatprep.subr.bf16.mxu0 0
        %1054 = vmatpush1.bf16.xpose.msra.mxu0 0
        %1055 = vmatprep.mubr.bf16.mxu0 0
        %1056 = vmatmul.mubr.bf16.gmra.mrb[0].mxu0 %v1018
        %v1057 = vpop.f32.mrb[0].mxu0
        %v1058 = vadd.f32 0.0, %v1057
        %v1059 = vpop.f32.mrb[0].mxu0
        %v1060 = vpop.f32.mrb[0].mxu0
        %v1061 = vpop.f32.mrb[0].mxu0
        %1062 = vdwg.mxu0
        %v1063 = vmul.f32 %v1058, 0.25
        %v1065 = vlaneseq
        %v1066 = vshrl.u32 %v1065, 7
        %v1067 = vsub.s32 0, %v1066
        %v1068 = vrot.slane %v935, %v1067
        %v1070 = vadd.f32 %v1063, %v1068
        %vm1071 = vcmask 64512
        %v1072 = vsel %vm1071, %v1070, -inf
        %1073 = vmax.xlane.f32.xlu0 %v1072
        %v1074 = vpop.xlane.xlu0 %1073
        %v1075 = vsub.f32 %v1070, %v1074
        %v1076 = vmul.f32 %v1075, 1.442695
        %v1077 = vpow.pop %v1076
        %v1078 = vsel %vm1071, %v1077, 0.0
        %1079 = vadd.xlane.f32.xlu0 %v1078
        %v1080 = vpop.xlane.xlu0 %1079
        %v1081 = vrcp.pop %v1080
        %v1082 = vmul.f32 %v1077, %v1081
        %v1083 = vpack.c.bf16 %v1082, %v1082
        %1084 = vrot.lane.b32.xlu0 %v1011, 64
        %v1085 = vpop.permute.xlu0 %1084
        %v1087 = vsel %vm1071, %v1083, 0
        %vm1089 = vcmask 1043456
        %v1091 = vsel %vm1089, %v1085, 0
        %1093 = vmatprep.subr.bf16.mxu0 0
        %1094 = vmatpush1.bf16.msra.mxu0 %v1091
        %1095 = vmatprep.subr.bf16.mxu0 0
        %1096 = vmatpush1.bf16.msra.mxu0 0
        %1097 = vmatprep.subr.bf16.mxu0 0
        %1098 = vmatpush1.bf16.msra.mxu0 0
        %1099 = vmatprep.subr.bf16.mxu0 0
        %1100 = vmatpush1.bf16.msra.mxu0 0
        %1101 = vmatprep.subr.bf16.mxu0 0
        %1102 = vmatpush1.bf16.msra.mxu0 0
        %1103 = vmatprep.subr.bf16.mxu0 0
        %1104 = vmatpush1.bf16.msra.mxu0 0
        %1105 = vmatprep.subr.bf16.mxu0 0
        %1106 = vmatpush1.bf16.msra.mxu0 0
        %1107 = vmatprep.subr.bf16.mxu0 0
        %1108 = vmatpush1.bf16.msra.mxu0 0
        %1109 = vmatprep.subr.bf16.mxu0 0
        %1110 = vmatpush1.bf16.msra.mxu0 0
        %1111 = vmatprep.subr.bf16.mxu0 0
        %1112 = vmatpush1.bf16.msra.mxu0 0
        %1113 = vmatprep.subr.bf16.mxu0 0
        %1114 = vmatpush1.bf16.msra.mxu0 0
        %1115 = vmatprep.subr.bf16.mxu0 0
        %1116 = vmatpush1.bf16.msra.mxu0 0
        %1117 = vmatprep.subr.bf16.mxu0 0
        %1118 = vmatpush1.bf16.msra.mxu0 0
        %1119 = vmatprep.subr.bf16.mxu0 0
        %1120 = vmatpush1.bf16.msra.mxu0 0
        %1121 = vmatprep.subr.bf16.mxu0 0
        %1122 = vmatpush1.bf16.msra.mxu0 0
        %1123 = vmatprep.subr.bf16.mxu0 0
        %1124 = vmatpush1.bf16.msra.mxu0 0
        %1125 = vmatprep.mubr.bf16.mxu0 0
        %1126 = vmatmul.mubr.bf16.gmra.mrb[0].mxu0 %v1087
        %v1127 = vpop.f32.mrb[0].mxu0
        %v1128 = vadd.f32 0.0, %v1127
        %v1129 = vpop.f32.mrb[0].mxu0
        %v1130 = vpop.f32.mrb[0].mxu0
        %v1131 = vpop.f32.mrb[0].mxu0
        %1132 = vdwg.mxu0
        %v1133 = vpack.c.bf16 %v1128, %v1128
        %v1134 = vld [vmem:[#allocation7] sm:$0xf]
        %v1135 = vld [vmem:[#allocation7 + $0x4] sm:$0xf]
        %v1136 = vld [vmem:[#allocation7 + $0x8] sm:$0xf]
        %v1137 = vld [vmem:[#allocation7 + $0xc] sm:$0xf]
        %v1138 = vmul.f32 %v1006, %v943
        %v1139 = vpack.c.bf16 %v1138, %v1138
        %v1141 = vsel %vm906, %v1139, 0
        %1143 = vmatprep.subr.bf16.mxu0 0
        %1144 = vmatpush1.bf16.xpose.msra.mxu0 %v1021
        %1145 = vmatprep.subr.bf16.mxu0 0
        %1146 = vmatpush1.bf16.xpose.msra.mxu0 0
        %1147 = vmatprep.subr.bf16.mxu0 0
        %1148 = vmatpush1.bf16.xpose.msra.mxu0 0
        %1149 = vmatprep.subr.bf16.mxu0 0
        %1150 = vmatpush1.bf16.xpose.msra.mxu0 0
        %1151 = vmatprep.subr.bf16.mxu0 0
        %1152 = vmatpush1.bf16.xpose.msra.mxu0 0
        %1153 = vmatprep.subr.bf16.mxu0 0
        %1154 = vmatpush1.bf16.xpose.msra.mxu0 0
        %1155 = vmatprep.subr.bf16.mxu0 0
        %1156 = vmatpush1.bf16.xpose.msra.mxu0 0
        %1157 = vmatprep.subr.bf16.mxu0 0
        %1158 = vmatpush1.bf16.xpose.msra.mxu0 0
        %1159 = vmatprep.subr.bf16.mxu0 0
        %1160 = vmatpush1.bf16.xpose.msra.mxu0 0
        %1161 = vmatprep.subr.bf16.mxu0 0
        %1162 = vmatpush1.bf16.xpose.msra.mxu0 0
        %1163 = vmatprep.subr.bf16.mxu0 0
        %1164 = vmatpush1.bf16.xpose.msra.mxu0 0
        %1165 = vmatprep.subr.bf16.mxu0 0
        %1166 = vmatpush1.bf16.xpose.msra.mxu0 0
        %1167 = vmatprep.subr.bf16.mxu0 0
        %1168 = vmatpush1.bf16.xpose.msra.mxu0 0
        %1169 = vmatprep.subr.bf16.mxu0 0
        %1170 = vmatpush1.bf16.xpose.msra.mxu0 0
        %1171 = vmatprep.subr.bf16.mxu0 0
        %1172 = vmatpush1.bf16.xpose.msra.mxu0 0
        %1173 = vmatprep.subr.bf16.mxu0 0
        %1174 = vmatpush1.bf16.xpose.msra.mxu0 0
        %1175 = vmatprep.mubr.bf16.mxu0 0
        %1176 = vmatmul.mubr.bf16.gmra.mrb[0].mxu0 %v1141
        %v1177 = vpop.f32.mrb[0].mxu0
        %v1178 = vadd.f32 0.0, %v1177
        %v1179 = vpop.f32.mrb[0].mxu0
        %v1180 = vpop.f32.mrb[0].mxu0
        %v1181 = vpop.f32.mrb[0].mxu0
        %1182 = vdwg.mxu0
        %v1183 = vmul.f32 %v1178, 0.25
        %v1184 = vadd.f32 %v1183, %v1068
        %v1185 = vsel %vm1071, %v1184, -inf
        %1186 = vmax.xlane.f32.xlu0 %v1185
        %v1187 = vpop.xlane.xlu0 %1186
        %v1188 = vsub.f32 %v1184, %v1187
        %v1189 = vmul.f32 %v1188, 1.442695
        %v1190 = vpow.pop %v1189
        %v1191 = vsel %vm1071, %v1190, 0.0
        %1192 = vadd.xlane.f32.xlu0 %v1191
        %v1193 = vpop.xlane.xlu0 %1192
        %v1194 = vrcp.pop %v1193
        %v1195 = vmul.f32 %v1190, %v1194
        %v1196 = vpack.c.bf16 %v1195, %v1195
        %v1198 = vsel %vm1071, %v1196, 0
        %1200 = vmatprep.subr.bf16.mxu0 0
        %1201 = vmatpush1.bf16.msra.mxu0 %v1091
        %1202 = vmatprep.subr.bf16.mxu0 0
        %1203 = vmatpush1.bf16.msra.mxu0 0
        %1204 = vmatprep.subr.bf16.mxu0 0
        %1205 = vmatpush1.bf16.msra.mxu0 0
        %1206 = vmatprep.subr.bf16.mxu0 0
        %1207 = vmatpush1.bf16.msra.mxu0 0
        %1208 = vmatprep.subr.bf16.mxu0 0
        %1209 = vmatpush1.bf16.msra.mxu0 0
        %1210 = vmatprep.subr.bf16.mxu0 0
        %1211 = vmatpush1.bf16.msra.mxu0 0
        %1212 = vmatprep.subr.bf16.mxu0 0
        %1213 = vmatpush1.bf16.msra.mxu0 0
        %1214 = vmatprep.subr.bf16.mxu0 0
        %1215 = vmatpush1.bf16.msra.mxu0 0
        %1216 = vmatprep.subr.bf16.mxu0 0
        %1217 = vmatpush1.bf16.msra.mxu0 0
        %1218 = vmatprep.subr.bf16.mxu0 0
        %1219 = vmatpush1.bf16.msra.mxu0 0
        %1220 = vmatprep.subr.bf16.mxu0 0
        %1221 = vmatpush1.bf16.msra.mxu0 0
        %1222 = vmatprep.subr.bf16.mxu0 0
        %1223 = vmatpush1.bf16.msra.mxu0 0
        %1224 = vmatprep.subr.bf16.mxu0 0
        %1225 = vmatpush1.bf16.msra.mxu0 0
        %1226 = vmatprep.subr.bf16.mxu0 0
        %1227 = vmatpush1.bf16.msra.mxu0 0
        %1228 = vmatprep.subr.bf16.mxu0 0
        %1229 = vmatpush1.bf16.msra.mxu0 0
        %1230 = vmatprep.subr.bf16.mxu0 0
        %1231 = vmatpush1.bf16.msra.mxu0 0
        %1232 = vmatprep.mubr.bf16.mxu0 0
        %1233 = vmatmul.mubr.bf16.gmra.mrb[0].mxu0 %v1198
        %v1234 = vpop.f32.mrb[0].mxu0
        %v1235 = vadd.f32 0.0, %v1234
        %v1236 = vpop.f32.mrb[0].mxu0
        %v1237 = vpop.f32.mrb[0].mxu0
        %v1238 = vpop.f32.mrb[0].mxu0
        %1239 = vdwg.mxu0
        %v1240 = vpack.c.bf16 %v1235, %v1235
        %s1241 = scalar_lea.vmem [#allocation7], 16
        %v1242 = vld [vmem:[%s1241] sm:$0xf]
        %v1243 = vld [vmem:[%s1241 + $0x4] sm:$0xf]
        %v1244 = vld [vmem:[%s1241 + $0x8] sm:$0xf]
        %v1245 = vld [vmem:[%s1241 + $0xc] sm:$0xf]
        %v1250 = vunpack.c.l.b16 %v1242
        %v1251 = vunpack.c.l.b16 %v1243
        %v1252 = vunpack.c.l.b16 %v1244
        %v1253 = vunpack.c.l.b16 %v1245
        %v1254 = vpack.c.b16 %v1251, %v1250
        %v1255 = vpack.c.b16 %v1253, %v1252
        %v1259 = vsel %vm906, %v1240, 0
        %1261 = vmatprep.subr.bf16.mxu0 0
        %1262 = vmatpush1.bf16.msra.mxu0 %v1254
        %1263 = vmatprep.subr.bf16.mxu0 0
        %1264 = vmatpush1.bf16.msra.mxu0 %v1255
        %1265 = vmatprep.subr.bf16.mxu0 0
        %1266 = vmatpush1.bf16.msra.mxu0 0
        %1267 = vmatprep.subr.bf16.mxu0 0
        %1268 = vmatpush1.bf16.msra.mxu0 0
        %1269 = vmatprep.subr.bf16.mxu0 0
        %1270 = vmatpush1.bf16.msra.mxu0 0
        %1271 = vmatprep.subr.bf16.mxu0 0
        %1272 = vmatpush1.bf16.msra.mxu0 0
        %1273 = vmatprep.subr.bf16.mxu0 0
        %1274 = vmatpush1.bf16.msra.mxu0 0
        %1275 = vmatprep.subr.bf16.mxu0 0
        %1276 = vmatpush1.bf16.msra.mxu0 0
        %1277 = vmatprep.subr.bf16.mxu0 0
        %1278 = vmatpush1.bf16.msra.mxu0 0
        %1279 = vmatprep.subr.bf16.mxu0 0
        %1280 = vmatpush1.bf16.msra.mxu0 0
        %1281 = vmatprep.subr.bf16.mxu0 0
        %1282 = vmatpush1.bf16.msra.mxu0 0
        %1283 = vmatprep.subr.bf16.mxu0 0
        %1284 = vmatpush1.bf16.msra.mxu0 0
        %1285 = vmatprep.subr.bf16.mxu0 0
        %1286 = vmatpush1.bf16.msra.mxu0 0
        %1287 = vmatprep.subr.bf16.mxu0 0
        %1288 = vmatpush1.bf16.msra.mxu0 0
        %1289 = vmatprep.subr.bf16.mxu0 0
        %1290 = vmatpush1.bf16.msra.mxu0 0
        %1291 = vmatprep.subr.bf16.mxu0 0
        %1292 = vmatpush1.bf16.msra.mxu0 0
        %1293 = vmatprep.mubr.bf16.mxu0 0
        %1294 = vmatmul.mubr.bf16.gmra.mrb[0].mxu0 %v1259
        %v1295 = vpop.f32.mrb[0].mxu0
        %v1296 = vadd.f32 0.0, %v1295
        %v1297 = vpop.f32.mrb[0].mxu0
        %v1298 = vpop.f32.mrb[0].mxu0
        %v1299 = vpop.f32.mrb[0].mxu0
        %1300 = vdwg.mxu0
        %v1305 = vunpack.c.l.b16 %v1134
        %v1306 = vunpack.c.l.b16 %v1135
        %v1307 = vunpack.c.l.b16 %v1136
        %v1308 = vunpack.c.l.b16 %v1137
        %v1309 = vpack.c.b16 %v1306, %v1305
        %v1310 = vpack.c.b16 %v1308, %v1307
        %v1314 = vsel %vm906, %v1133, 0
        %1316 = vmatprep.subr.bf16.mxu0 0
        %1317 = vmatpush1.bf16.msra.mxu0 %v1309
        %1318 = vmatprep.subr.bf16.mxu0 0
        %1319 = vmatpush1.bf16.msra.mxu0 %v1310
        %1320 = vmatprep.subr.bf16.mxu0 0
        %1321 = vmatpush1.bf16.msra.mxu0 0
        %1322 = vmatprep.subr.bf16.mxu0 0
        %1323 = vmatpush1.bf16.msra.mxu0 0
        %1324 = vmatprep.subr.bf16.mxu0 0
        %1325 = vmatpush1.bf16.msra.mxu0 0
        %1326 = vmatprep.subr.bf16.mxu0 0
        %1327 = vmatpush1.bf16.msra.mxu0 0
        %1328 = vmatprep.subr.bf16.mxu0 0
        %1329 = vmatpush1.bf16.msra.mxu0 0
        %1330 = vmatprep.subr.bf16.mxu0 0
        %1331 = vmatpush1.bf16.msra.mxu0 0
        %1332 = vmatprep.subr.bf16.mxu0 0
        %1333 = vmatpush1.bf16.msra.mxu0 0
        %1334 = vmatprep.subr.bf16.mxu0 0
        %1335 = vmatpush1.bf16.msra.mxu0 0
        %1336 = vmatprep.subr.bf16.mxu0 0
        %1337 = vmatpush1.bf16.msra.mxu0 0
        %1338 = vmatprep.subr.bf16.mxu0 0
        %1339 = vmatpush1.bf16.msra.mxu0 0
        %1340 = vmatprep.subr.bf16.mxu0 0
        %1341 = vmatpush1.bf16.msra.mxu0 0
        %1342 = vmatprep.subr.bf16.mxu0 0
        %1343 = vmatpush1.bf16.msra.mxu0 0
        %1344 = vmatprep.subr.bf16.mxu0 0
        %1345 = vmatpush1.bf16.msra.mxu0 0
        %1346 = vmatprep.subr.bf16.mxu0 0
        %1347 = vmatpush1.bf16.msra.mxu0 0
        %1348 = vmatprep.mubr.bf16.mxu0 0
        %1349 = vmatmul.mubr.bf16.gmra.mrb[0].mxu0 %v1314
        %v1350 = vpop.f32.mrb[0].mxu0
        %v1351 = vadd.f32 %v1296, %v1350
        %v1352 = vpop.f32.mrb[0].mxu0
        %v1353 = vpop.f32.mrb[0].mxu0
        %v1354 = vpop.f32.mrb[0].mxu0
        %1355 = vdwg.mxu0
        %v1356 = vld [vmem:[%s11] sm:$0x1]
        %v1358 = vlaneseq
        %v1359 = vshrl.u32 %v1358, 7
        %v1360 = vsub.s32 0, %v1359
        %v1361 = vrot.slane %v1356, %v1360
        %v1363 = vadd.f32 %v1351, %v1361
        %v1364 = vadd.f32 %v934, %v1363
        %v1365 = vld [vmem:[%s12] sm:$0x1]
        %v1366 = vld [vmem:[%s13] sm:$0x1]
        %v1367 = vsel %vm906, %v1364, 0.0
        %1368 = vadd.xlane.f32.xlu0 %v1367
        %v1369 = vpop.xlane.xlu0 %1368
        %v1370 = vmul.f32 %v1369, %v910
        %v1371 = vsub.f32 %v1364, %v1370
        %v1372 = vmul.f32 %v1371, %v1371
        %v1373 = vsel %vm906, %v1372, 0.0
        %1374 = vadd.xlane.f32.xlu0 %v1373
        %v1375 = vpop.xlane.xlu0 %1374
        %v1376 = vmul.f32 %v1375, %v910
        %v1377 = vadd.f32 %v1376, 1e-12
        %v1378 = vrsqrt.pop %v1377
        %v1379 = vmul.f32 %v1371, %v1378
        %v1381 = vlaneseq
        %v1382 = vshrl.u32 %v1381, 7
        %v1383 = vsub.s32 0, %v1382
        %v1384 = vrot.slane %v1365, %v1383
        %v1386 = vmul.f32 %v1379, %v1384
        %v1388 = vlaneseq
        %v1389 = vshrl.u32 %v1388, 7
        %v1390 = vsub.s32 0, %v1389
        %v1391 = vrot.slane %v1366, %v1390
        %v1393 = vadd.f32 %v1386, %v1391
        %v1394 = vpack.c.bf16 %v1393, %v1393
        %v1395 = vld [vmem:[#allocation8] sm:$0xf]
        %v1396 = vld [vmem:[#allocation8 + $0x4] sm:$0xf]
        %v1397 = vld [vmem:[#allocation8 + $0x8] sm:$0xf]
        %v1398 = vld [vmem:[#allocation8 + $0xc] sm:$0xf]
        %v1399 = vld [vmem:[%s15] sm:$0x1]
        %v1401 = vlaneseq
        %v1402 = vshrl.u32 %v1401, 7
        %v1403 = vsub.s32 0, %v1402
        %v1404 = vrot.slane %v1399, %v1403
        %v1410 = vunpack.c.l.b16 %v1395
        %v1411 = vunpack.c.l.b16 %v1396
        %v1412 = vunpack.c.l.b16 %v1397
        %v1413 = vunpack.c.l.b16 %v1398
        %v1414 = vpack.c.b16 %v1411, %v1410
        %v1415 = vpack.c.b16 %v1413, %v1412
        %v1419 = vsel %vm906, %v1394, 0
        %1421 = vmatprep.subr.bf16.mxu0 0
        %1422 = vmatpush1.bf16.msra.mxu0 %v1414
        %1423 = vmatprep.subr.bf16.mxu0 0
        %1424 = vmatpush1.bf16.msra.mxu0 %v1415
        %1425 = vmatprep.subr.bf16.mxu0 0
        %1426 = vmatpush1.bf16.msra.mxu0 0
        %1427 = vmatprep.subr.bf16.mxu0 0
        %1428 = vmatpush1.bf16.msra.mxu0 0
        %1429 = vmatprep.subr.bf16.mxu0 0
        %1430 = vmatpush1.bf16.msra.mxu0 0
        %1431 = vmatprep.subr.bf16.mxu0 0
        %1432 = vmatpush1.bf16.msra.mxu0 0
        %1433 = vmatprep.subr.bf16.mxu0 0
        %1434 = vmatpush1.bf16.msra.mxu0 0
        %1435 = vmatprep.subr.bf16.mxu0 0
        %1436 = vmatpush1.bf16.msra.mxu0 0
        %1437 = vmatprep.subr.bf16.mxu0 0
        %1438 = vmatpush1.bf16.msra.mxu0 0
        %1439 = vmatprep.subr.bf16.mxu0 0
        %1440 = vmatpush1.bf16.msra.mxu0 0
        %1441 = vmatprep.subr.bf16.mxu0 0
        %1442 = vmatpush1.bf16.msra.mxu0 0
        %1443 = vmatprep.subr.bf16.mxu0 0
        %1444 = vmatpush1.bf16.msra.mxu0 0
        %1445 = vmatprep.subr.bf16.mxu0 0
        %1446 = vmatpush1.bf16.msra.mxu0 0
        %1447 = vmatprep.subr.bf16.mxu0 0
        %1448 = vmatpush1.bf16.msra.mxu0 0
        %1449 = vmatprep.subr.bf16.mxu0 0
        %1450 = vmatpush1.bf16.msra.mxu0 0
        %1451 = vmatprep.subr.bf16.mxu0 0
        %1452 = vmatpush1.bf16.msra.mxu0 0
        %1453 = vmatprep.mubr.bf16.mxu0 0
        %1454 = vmatmul.mubr.bf16.gmra.mrb[0].mxu0 %v1419
        %v1455 = vpop.f32.mrb[0].mxu0
        %v1456 = vadd.f32 %v1404, %v1455
        %v1457 = vpop.f32.mrb[0].mxu0
        %v1458 = vpop.f32.mrb[0].mxu0
        %v1459 = vpop.f32.mrb[0].mxu0
        %1460 = vdwg.mxu0
        %v1461 = vmul.f32 %v1456, %v1456
        %v1462 = vmul.f32 %v1456, %v1461
        %v1463 = vmul.f32 %v1462, 0.044715
        %v1464 = vadd.f32 %v1456, %v1463
        %v1465 = vmul.f32 %v1464, 0.7978846
        %v1466 = vtanh.pop %v1465
        %v1467 = vadd.f32 %v1466, 1.0
        %v1468 = vmul.f32 %v1467, 0.5
        %v1469 = vmul.f32 %v1456, %v1468
        %v1470 = vpack.c.bf16 %v1469, %v1469
        %v1471 = vld [vmem:[%s16] sm:$0xf]
        %v1472 = vld [vmem:[%s16 + $0x4] sm:$0xf]
        %v1473 = vld [vmem:[%s16 + $0x8] sm:$0xf]
        %v1474 = vld [vmem:[%s16 + $0xc] sm:$0xf]
        %v1475 = vld [vmem:[%s16 + $0x10] sm:$0xf]
        %v1476 = vld [vmem:[%s16 + $0x14] sm:$0xf]
        %v1477 = vld [vmem:[%s16 + $0x18] sm:$0xf]
        %v1478 = vld [vmem:[%s16 + $0x1c] sm:$0xf]
        %v1479 = vld [vmem:[%s17] sm:$0x1]
        %v1481 = vlaneseq
        %v1482 = vshrl.u32 %v1481, 7
        %v1483 = vsub.s32 0, %v1482
        %v1484 = vrot.slane %v1479, %v1483
        %v1494 = vunpack.c.l.b16 %v1471
        %v1495 = vunpack.c.l.b16 %v1472
        %v1496 = vunpack.c.l.b16 %v1473
        %v1497 = vunpack.c.l.b16 %v1474
        %v1498 = vunpack.c.l.b16 %v1475
        %v1499 = vunpack.c.l.b16 %v1476
        %v1500 = vunpack.c.l.b16 %v1477
        %v1501 = vunpack.c.l.b16 %v1478
        %v1502 = vpack.c.b16 %v1495, %v1494
        %v1503 = vpack.c.b16 %v1497, %v1496
        %v1504 = vpack.c.b16 %v1499, %v1498
        %v1505 = vpack.c.b16 %v1501, %v1500
        %vm1510 = vcmask 523264
        %v1512 = vsel %vm1510, %v1470, 0
        %1514 = vmatprep.subr.bf16.mxu0 0
        %1515 = vmatpush1.bf16.msra.mxu0 %v1502
        %1516 = vmatprep.subr.bf16.mxu0 0
        %1517 = vmatpush1.bf16.msra.mxu0 %v1503
        %1518 = vmatprep.subr.bf16.mxu0 0
        %1519 = vmatpush1.bf16.msra.mxu0 %v1504
        %1520 = vmatprep.subr.bf16.mxu0 0
        %1521 = vmatpush1.bf16.msra.mxu0 %v1505
        %1522 = vmatprep.subr.bf16.mxu0 0
        %1523 = vmatpush1.bf16.msra.mxu0 0
        %1524 = vmatprep.subr.bf16.mxu0 0
        %1525 = vmatpush1.bf16.msra.mxu0 0
        %1526 = vmatprep.subr.bf16.mxu0 0
        %1527 = vmatpush1.bf16.msra.mxu0 0
        %1528 = vmatprep.subr.bf16.mxu0 0
        %1529 = vmatpush1.bf16.msra.mxu0 0
        %1530 = vmatprep.subr.bf16.mxu0 0
        %1531 = vmatpush1.bf16.msra.mxu0 0
        %1532 = vmatprep.subr.bf16.mxu0 0
        %1533 = vmatpush1.bf16.msra.mxu0 0
        %1534 = vmatprep.subr.bf16.mxu0 0
        %1535 = vmatpush1.bf16.msra.mxu0 0
        %1536 = vmatprep.subr.bf16.mxu0 0
        %1537 = vmatpush1.bf16.msra.mxu0 0
        %1538 = vmatprep.subr.bf16.mxu0 0
        %1539 = vmatpush1.bf16.msra.mxu0 0
        %1540 = vmatprep.subr.bf16.mxu0 0
        %1541 = vmatpush1.bf16.msra.mxu0 0
        %1542 = vmatprep.subr.bf16.mxu0 0
        %1543 = vmatpush1.bf16.msra.mxu0 0
        %1544 = vmatprep.subr.bf16.mxu0 0
        %1545 = vmatpush1.bf16.msra.mxu0 0
        %1546 = vmatprep.mubr.bf16.mxu0 0
        %1547 = vmatmul.mubr.bf16.gmra.mrb[0].mxu0 %v1512
        %v1548 = vpop.f32.mrb[0].mxu0
        %v1549 = vadd.f32 %v1484, %v1548
        %v1550 = vpop.f32.mrb[0].mxu0
        %v1551 = vpop.f32.mrb[0].mxu0
        %v1552 = vpop.f32.mrb[0].mxu0
        %1553 = vdwg.mxu0
        %v1554 = vadd.f32 %v1393, %v1549
        %v1555 = vld [vmem:[%s18] sm:$0x1]
        %v1556 = vld [vmem:[%s19] sm:$0x1]
        %v1557 = vsel %vm906, %v1554, 0.0
        %1558 = vadd.xlane.f32.xlu0 %v1557
        %v1559 = vpop.xlane.xlu0 %1558
        %v1560 = vmul.f32 %v1559, %v910
        %v1561 = vsub.f32 %v1554, %v1560
        %v1562 = vmul.f32 %v1561, %v1561
        %v1563 = vsel %vm906, %v1562, 0.0
        %1564 = vadd.xlane.f32.xlu0 %v1563
        %v1565 = vpop.xlane.xlu0 %1564
        %v1566 = vmul.f32 %v1565, %v910
        %v1567 = vadd.f32 %v1566, 1e-12
        %v1568 = vrsqrt.pop %v1567
        %v1569 = vmul.f32 %v1561, %v1568
        %v1571 = vlaneseq
        %v1572 = vshrl.u32 %v1571, 7
        %v1573 = vsub.s32 0, %v1572
        %v1574 = vrot.slane %v1555, %v1573
        %v1576 = vmul.f32 %v1569, %v1574
        %v1578 = vlaneseq
        %v1579 = vshrl.u32 %v1578, 7
        %v1580 = vsub.s32 0, %v1579
        %v1581 = vrot.slane %v1556, %v1580
        %v1583 = vadd.f32 %v1576, %v1581
        %v1584 = vpack.c.bf16 %v1583, %v1583
        %s1585 = scalar_lea.vmem [#allocation5], 16
        %v1586 = vld [vmem:[%s1585] sm:$0xf]
        %v1587 = vld [vmem:[%s1585 + $0x4] sm:$0xf]
        %v1588 = vld [vmem:[%s1585 + $0x8] sm:$0xf]
        %v1589 = vld [vmem:[%s1585 + $0xc] sm:$0xf]
        %s1590 = scalar_lea.vmem %s9, 1
        %v1591 = vld [vmem:[%s1590] sm:$0x1]
        %v1593 = vlaneseq
        %v1594 = vshrl.u32 %v1593, 7
        %v1595 = vsub.s32 0, %v1594
        %v1596 = vrot.slane %v1591, %v1595
        %v1602 = vunpack.c.l.b16 %v1586
        %v1603 = vunpack.c.l.b16 %v1587
        %v1604 = vunpack.c.l.b16 %v1588
        %v1605 = vunpack.c.l.b16 %v1589
        %v1606 = vpack.c.b16 %v1603, %v1602
        %v1607 = vpack.c.b16 %v1605, %v1604
        %v1611 = vsel %vm906, %v1584, 0
        %1613 = vmatprep.subr.bf16.mxu0 0
        %1614 = vmatpush1.bf16.msra.mxu0 %v1606
        %1615 = vmatprep.subr.bf16.mxu0 0
        %1616 = vmatpush1.bf16.msra.mxu0 %v1607
        %1617 = vmatprep.subr.bf16.mxu0 0
        %1618 = vmatpush1.bf16.msra.mxu0 0
        %1619 = vmatprep.subr.bf16.mxu0 0
        %1620 = vmatpush1.bf16.msra.mxu0 0
        %1621 = vmatprep.subr.bf16.mxu0 0
        %1622 = vmatpush1.bf16.msra.mxu0 0
        %1623 = vmatprep.subr.bf16.mxu0 0
        %1624 = vmatpush1.bf16.msra.mxu0 0
        %1625 = vmatprep.subr.bf16.mxu0 0
        %1626 = vmatpush1.bf16.msra.mxu0 0
        %1627 = vmatprep.subr.bf16.mxu0 0
        %1628 = vmatpush1.bf16.msra.mxu0 0
        %1629 = vmatprep.subr.bf16.mxu0 0
        %1630 = vmatpush1.bf16.msra.mxu0 0
        %1631 = vmatprep.subr.bf16.mxu0 0
        %1632 = vmatpush1.bf16.msra.mxu0 0
        %1633 = vmatprep.subr.bf16.mxu0 0
        %1634 = vmatpush1.bf16.msra.mxu0 0
        %1635 = vmatprep.subr.bf16.mxu0 0
        %1636 = vmatpush1.bf16.msra.mxu0 0
        %1637 = vmatprep.subr.bf16.mxu0 0
        %1638 = vmatpush1.bf16.msra.mxu0 0
        %1639 = vmatprep.subr.bf16.mxu0 0
        %1640 = vmatpush1.bf16.msra.mxu0 0
        %1641 = vmatprep.subr.bf16.mxu0 0
        %1642 = vmatpush1.bf16.msra.mxu0 0
        %1643 = vmatprep.subr.bf16.mxu0 0
        %1644 = vmatpush1.bf16.msra.mxu0 0
        %1645 = vmatprep.mubr.bf16.mxu0 0
        %1646 = vmatmul.mubr.bf16.gmra.mrb[0].mxu0 %v1611
        %v1647 = vpop.f32.mrb[0].mxu0
        %v1648 = vadd.f32 %v1596, %v1647
        %v1649 = vpop.f32.mrb[0].mxu0
        %v1650 = vpop.f32.mrb[0].mxu0
        %v1651 = vpop.f32.mrb[0].mxu0
        %1652 = vdwg.mxu0
        %v1653 = vpack.c.bf16 %v1648, %v1648
        %v1654 = vmul.f32 %v1648, %v939
        %v1655 = vpack.c.bf16 %v1654, %v1654
        %1657 = vrot.lane.b32.xlu0 %v1653, 96
        %v1658 = vpop.permute.xlu0 %1657
        %v1660 = vsel %vm906, %v1655, 0
        %v1663 = vsel %vm906, %v1658, 0
        %1665 = vmatprep.subr.bf16.mxu0 0
        %1666 = vmatpush1.bf16.xpose.msra.mxu0 %v1663
        %1667 = vmatprep.subr.bf16.mxu0 0
        %1668 = vmatpush1.bf16.xpose.msra.mxu0 0
        %1669 = vmatprep.subr.bf16.mxu0 0
        %1670 = vmatpush1.bf16.xpose.msra.mxu0 0
        %1671 = vmatprep.subr.bf16.mxu0 0
        %1672 = vmatpush1.bf16.xpose.msra.mxu0 0
        %1673 = vmatprep.subr.bf16.mxu0 0
        %1674 = vmatpush1.bf16.xpose.msra.mxu0 0
        %1675 = vmatprep.subr.bf16.mxu0 0
        %1676 = vmatpush1.bf16.xpose.msra.mxu0 0
        %1677 = vmatprep.subr.bf16.mxu0 0
        %1678 = vmatpush1.bf16.xpose.msra.mxu0 0
        %1679 = vmatprep.subr.bf16.mxu0 0
        %1680 = vmatpush1.bf16.xpose.msra.mxu0 0
        %1681 = vmatprep.subr.bf16.mxu0 0
        %1682 = vmatpush1.bf16.xpose.msra.mxu0 0
        %1683 = vmatprep.subr.bf16.mxu0 0
        %1684 = vmatpush1.bf16.xpose.msra.mxu0 0
        %1685 = vmatprep.subr.bf16.mxu0 0
        %1686 = vmatpush1.bf16.xpose.msra.mxu0 0
        %1687 = vmatprep.subr.bf16.mxu0 0
        %1688 = vmatpush1.bf16.xpose.msra.mxu0 0
        %1689 = vmatprep.subr.bf16.mxu0 0
        %1690 = vmatpush1.bf16.xpose.msra.mxu0 0
        %1691 = vmatprep.subr.bf16.mxu0 0
        %1692 = vmatpush1.bf16.xpose.msra.mxu0 0
        %1693 = vmatprep.subr.bf16.mxu0 0
        %1694 = vmatpush1.bf16.xpose.msra.mxu0 0
        %1695 = vmatprep.subr.bf16.mxu0 0
        %1696 = vmatpush1.bf16.xpose.msra.mxu0 0
        %1697 = vmatprep.mubr.bf16.mxu0 0
        %1698 = vmatmul.mubr.bf16.gmra.mrb[0].mxu0 %v1660
        %v1699 = vpop.f32.mrb[0].mxu0
        %v1700 = vadd.f32 0.0, %v1699
        %v1701 = vpop.f32.mrb[0].mxu0
        %v1702 = vpop.f32.mrb[0].mxu0
        %v1703 = vpop.f32.mrb[0].mxu0
        %1704 = vdwg.mxu0
        %v1705 = vmul.f32 %v1700, 0.25
        %v1706 = vadd.f32 %v1705, %v1068
        %v1707 = vsel %vm1071, %v1706, -inf
        %1708 = vmax.xlane.f32.xlu0 %v1707
        %v1709 = vpop.xlane.xlu0 %1708
        %v1710 = vsub.f32 %v1706, %v1709
        %v1711 = vmul.f32 %v1710, 1.442695
        %v1712 = vpow.pop %v1711
        %v1713 = vsel %vm1071, %v1712, 0.0
        %1714 = vadd.xlane.f32.xlu0 %v1713
        %v1715 = vpop.xlane.xlu0 %1714
        %v1716 = vrcp.pop %v1715
        %v1717 = vmul.f32 %v1712, %v1716
        %v1718 = vpack.c.bf16 %v1717, %v1717
        %1719 = vrot.lane.b32.xlu0 %v1653, 64
        %v1720 = vpop.permute.xlu0 %1719
        %v1722 = vsel %vm1071, %v1718, 0
        %v1725 = vsel %vm1089, %v1720, 0
        %1727 = vmatprep.subr.bf16.mxu0 0
        %1728 = vmatpush1.bf16.msra.mxu0 %v1725
        %1729 = vmatprep.subr.bf16.mxu0 0
        %1730 = vmatpush1.bf16.msra.mxu0 0
        %1731 = vmatprep.subr.bf16.mxu0 0
        %1732 = vmatpush1.bf16.msra.mxu0 0
        %1733 = vmatprep.subr.bf16.mxu0 0
        %1734 = vmatpush1.bf16.msra.mxu0 0
        %1735 = vmatprep.subr.bf16.mxu0 0
        %1736 = vmatpush1.bf16.msra.mxu0 0
        %1737 = vmatprep.subr.bf16.mxu0 0
        %1738 = vmatpush1.bf16.msra.mxu0 0
        %1739 = vmatprep.subr.bf16.mxu0 0
        %1740 = vmatpush1.bf16.msra.mxu0 0
        %1741 = vmatprep.subr.bf16.mxu0 0
        %1742 = vmatpush1.bf16.msra.mxu0 0
        %1743 = vmatprep.subr.bf16.mxu0 0
        %1744 = vmatpush1.bf16.msra.mxu0 0
        %1745 = vmatprep.subr.bf16.mxu0 0
        %1746 = vmatpush1.bf16.msra.mxu0 0
        %1747 = vmatprep.subr.bf16.mxu0 0
        %1748 = vmatpush1.bf16.msra.mxu0 0
        %1749 = vmatprep.subr.bf16.mxu0 0
        %1750 = vmatpush1.bf16.msra.mxu0 0
        %1751 = vmatprep.subr.bf16.mxu0 0
        %1752 = vmatpush1.bf16.msra.mxu0 0
        %1753 = vmatprep.subr.bf16.mxu0 0
        %1754 = vmatpush1.bf16.msra.mxu0 0
        %1755 = vmatprep.subr.bf16.mxu0 0
        %1756 = vmatpush1.bf16.msra.mxu0 0
        %1757 = vmatprep.subr.bf16.mxu0 0
        %1758 = vmatpush1.bf16.msra.mxu0 0
        %1759 = vmatprep.mubr.bf16.mxu0 0
        %1760 = vmatmul.mubr.bf16.gmra.mrb[0].mxu0 %v1722
        %v1761 = vpop.f32.mrb[0].mxu0
        %v1762 = vadd.f32 0.0, %v1761
        %v1763 = vpop.f32.mrb[0].mxu0
        %v1764 = vpop.f32.mrb[0].mxu0
        %v1765 = vpop.f32.mrb[0].mxu0
        %1766 = vdwg.mxu0
        %v1767 = vpack.c.bf16 %v1762, %v1762
        %s1768 = scalar_lea.vmem [#allocation7], 32
        %v1769 = vld [vmem:[%s1768] sm:$0xf]
        %v1770 = vld [vmem:[%s1768 + $0x4] sm:$0xf]
        %v1771 = vld [vmem:[%s1768 + $0x8] sm:$0xf]
        %v1772 = vld [vmem:[%s1768 + $0xc] sm:$0xf]
        %v1773 = vmul.f32 %v1648, %v943
        %v1774 = vpack.c.bf16 %v1773, %v1773
        %v1776 = vsel %vm906, %v1774, 0
        %1778 = vmatprep.subr.bf16.mxu0 0
        %1779 = vmatpush1.bf16.xpose.msra.mxu0 %v1663
        %1780 = vmatprep.subr.bf16.mxu0 0
        %1781 = vmatpush1.bf16.xpose.msra.mxu0 0
        %1782 = vmatprep.subr.bf16.mxu0 0
        %1783 = vmatpush1.bf16.xpose.msra.mxu0 0
        %1784 = vmatprep.subr.bf16.mxu0 0
        %1785 = vmatpush1.bf16.xpose.msra.mxu0 0
        %1786 = vmatprep.subr.bf16.mxu0 0
        %1787 = vmatpush1.bf16.xpose.msra.mxu0 0
        %1788 = vmatprep.subr.bf16.mxu0 0
        %1789 = vmatpush1.bf16.xpose.msra.mxu0 0
        %1790 = vmatprep.subr.bf16.mxu0 0
        %1791 = vmatpush1.bf16.xpose.msra.mxu0 0
        %1792 = vmatprep.subr.bf16.mxu0 0
        %1793 = vmatpush1.bf16.xpose.msra.mxu0 0
        %1794 = vmatprep.subr.bf16.mxu0 0
        %1795 = vmatpush1.bf16.xpose.msra.mxu0 0
        %1796 = vmatprep.subr.bf16.mxu0 0
        %1797 = vmatpush1.bf16.xpose.msra.mxu0 0
        %1798 = vmatprep.subr.bf16.mxu0 0
        %1799 = vmatpush1.bf16.xpose.msra.mxu0 0
        %1800 = vmatprep.subr.bf16.mxu0 0
        %1801 = vmatpush1.bf16.xpose.msra.mxu0 0
        %1802 = vmatprep.subr.bf16.mxu0 0
        %1803 = vmatpush1.bf16.xpose.msra.mxu0 0
        %1804 = vmatprep.subr.bf16.mxu0 0
        %1805 = vmatpush1.bf16.xpose.msra.mxu0 0
        %1806 = vmatprep.subr.bf16.mxu0 0
        %1807 = vmatpush1.bf16.xpose.msra.mxu0 0
        %1808 = vmatprep.subr.bf16.mxu0 0
        %1809 = vmatpush1.bf16.xpose.msra.mxu0 0
        %1810 = vmatprep.mubr.bf16.mxu0 0
        %1811 = vmatmul.mubr.bf16.gmra.mrb[0].mxu0 %v1776
        %v1812 = vpop.f32.mrb[0].mxu0
        %v1813 = vadd.f32 0.0, %v1812
        %v1814 = vpop.f32.mrb[0].mxu0
        %v1815 = vpop.f32.mrb[0].mxu0
        %v1816 = vpop.f32.mrb[0].mxu0
        %1817 = vdwg.mxu0
        %v1818 = vmul.f32 %v1813, 0.25
        %v1819 = vadd.f32 %v1818, %v1068
        %v1820 = vsel %vm1071, %v1819, -inf
        %1821 = vmax.xlane.f32.xlu0 %v1820
        %v1822 = vpop.xlane.xlu0 %1821
        %v1823 = vsub.f32 %v1819, %v1822
        %v1824 = vmul.f32 %v1823, 1.442695
        %v1825 = vpow.pop %v1824
        %v1826 = vsel %vm1071, %v1825, 0.0
        %1827 = vadd.xlane.f32.xlu0 %v1826
        %v1828 = vpop.xlane.xlu0 %1827
        %v1829 = vrcp.pop %v1828
        %v1830 = vmul.f32 %v1825, %v1829
        %v1831 = vpack.c.bf16 %v1830, %v1830
        %v1833 = vsel %vm1071, %v1831, 0
        %1835 = vmatprep.subr.bf16.mxu0 0
        %1836 = vmatpush1.bf16.msra.mxu0 %v1725
        %1837 = vmatprep.subr.bf16.mxu0 0
        %1838 = vmatpush1.bf16.msra.mxu0 0
        %1839 = vmatprep.subr.bf16.mxu0 0
        %1840 = vmatpush1.bf16.msra.mxu0 0
        %1841 = vmatprep.subr.bf16.mxu0 0
        %1842 = vmatpush1.bf16.msra.mxu0 0
        %1843 = vmatprep.subr.bf16.mxu0 0
        %1844 = vmatpush1.bf16.msra.mxu0 0
        %1845 = vmatprep.subr.bf16.mxu0 0
        %1846 = vmatpush1.bf16.msra.mxu0 0
        %1847 = vmatprep.subr.bf16.mxu0 0
        %1848 = vmatpush1.bf16.msra.mxu0 0
        %1849 = vmatprep.subr.bf16.mxu0 0
        %1850 = vmatpush1.bf16.msra.mxu0 0
        %1851 = vmatprep.subr.bf16.mxu0 0
        %1852 = vmatpush1.bf16.msra.mxu0 0
        %1853 = vmatprep.subr.bf16.mxu0 0
        %1854 = vmatpush1.bf16.msra.mxu0 0
        %1855 = vmatprep.subr.bf16.mxu0 0
        %1856 = vmatpush1.bf16.msra.mxu0 0
        %1857 = vmatprep.subr.bf16.mxu0 0
        %1858 = vmatpush1.bf16.msra.mxu0 0
        %1859 = vmatprep.subr.bf16.mxu0 0
        %1860 = vmatpush1.bf16.msra.mxu0 0
        %1861 = vmatprep.subr.bf16.mxu0 0
        %1862 = vmatpush1.bf16.msra.mxu0 0
        %1863 = vmatprep.subr.bf16.mxu0 0
        %1864 = vmatpush1.bf16.msra.mxu0 0
        %1865 = vmatprep.subr.bf16.mxu0 0
        %1866 = vmatpush1.bf16.msra.mxu0 0
        %1867 = vmatprep.mubr.bf16.mxu0 0
        %1868 = vmatmul.mubr.bf16.gmra.mrb[0].mxu0 %v1833
        %v1869 = vpop.f32.mrb[0].mxu0
        %v1870 = vadd.f32 0.0, %v1869
        %v1871 = vpop.f32.mrb[0].mxu0
        %v1872 = vpop.f32.mrb[0].mxu0
        %v1873 = vpop.f32.mrb[0].mxu0
        %1874 = vdwg.mxu0
        %v1875 = vpack.c.bf16 %v1870, %v1870
        %s1876 = scalar_lea.vmem [#allocation7], 48
        %v1877 = vld [vmem:[%s1876] sm:$0xf]
        %v1878 = vld [vmem:[%s1876 + $0x4] sm:$0xf]
        %v1879 = vld [vmem:[%s1876 + $0x8] sm:$0xf]
        %v1880 = vld [vmem:[%s1876 + $0xc] sm:$0xf]
        %v1885 = vunpack.c.l.b16 %v1877
        %v1886 = vunpack.c.l.b16 %v1878
        %v1887 = vunpack.c.l.b16 %v1879
        %v1888 = vunpack.c.l.b16 %v1880
        %v1889 = vpack.c.b16 %v1886, %v1885
        %v1890 = vpack.c.b16 %v1888, %v1887
        %v1894 = vsel %vm906, %v1875, 0
        %1896 = vmatprep.subr.bf16.mxu0 0
        %1897 = vmatpush1.bf16.msra.mxu0 %v1889
        %1898 = vmatprep.subr.bf16.mxu0 0
        %1899 = vmatpush1.bf16.msra.mxu0 %v1890
        %1900 = vmatprep.subr.bf16.mxu0 0
        %1901 = vmatpush1.bf16.msra.mxu0 0
        %1902 = vmatprep.subr.bf16.mxu0 0
        %1903 = vmatpush1.bf16.msra.mxu0 0
        %1904 = vmatprep.subr.bf16.mxu0 0
        %1905 = vmatpush1.bf16.msra.mxu0 0
        %1906 = vmatprep.subr.bf16.mxu0 0
        %1907 = vmatpush1.bf16.msra.mxu0 0
        %1908 = vmatprep.subr.bf16.mxu0 0
        %1909 = vmatpush1.bf16.msra.mxu0 0
        %1910 = vmatprep.subr.bf16.mxu0 0
        %1911 = vmatpush1.bf16.msra.mxu0 0
        %1912 = vmatprep.subr.bf16.mxu0 0
        %1913 = vmatpush1.bf16.msra.mxu0 0
        %1914 = vmatprep.subr.bf16.mxu0 0
        %1915 = vmatpush1.bf16.msra.mxu0 0
        %1916 = vmatprep.subr.bf16.mxu0 0
        %1917 = vmatpush1.bf16.msra.mxu0 0
        %1918 = vmatprep.subr.bf16.mxu0 0
        %1919 = vmatpush1.bf16.msra.mxu0 0
        %1920 = vmatprep.subr.bf16.mxu0 0
        %1921 = vmatpush1.bf16.msra.mxu0 0
        %1922 = vmatprep.subr.bf16.mxu0 0
        %1923 = vmatpush1.bf16.msra.mxu0 0
        %1924 = vmatprep.subr.bf16.mxu0 0
        %1925 = vmatpush1.bf16.msra.mxu0 0
        %1926 = vmatprep.subr.bf16.mxu0 0
        %1927 = vmatpush1.bf16.msra.mxu0 0
        %1928 = vmatprep.mubr.bf16.mxu0 0
        %1929 = vmatmul.mubr.bf16.gmra.mrb[0].mxu0 %v1894
        %v1930 = vpop.f32.mrb[0].mxu0
        %v1931 = vadd.f32 0.0, %v1930
        %v1932 = vpop.f32.mrb[0].mxu0
        %v1933 = vpop.f32.mrb[0].mxu0
        %v1934 = vpop.f32.mrb[0].mxu0
        %1935 = vdwg.mxu0
        %v1940 = vunpack.c.l.b16 %v1769
        %v1941 = vunpack.c.l.b16 %v1770
        %v1942 = vunpack.c.l.b16 %v1771
        %v1943 = vunpack.c.l.b16 %v1772
        %v1944 = vpack.c.b16 %v1941, %v1940
        %v1945 = vpack.c.b16 %v1943, %v1942
        %v1949 = vsel %vm906, %v1767, 0
        %1951 = vmatprep.subr.bf16.mxu0 0
        %1952 = vmatpush1.bf16.msra.mxu0 %v1944
        %1953 = vmatprep.subr.bf16.mxu0 0
        %1954 = vmatpush1.bf16.msra.mxu0 %v1945
        %1955 = vmatprep.subr.bf16.mxu0 0
        %1956 = vmatpush1.bf16.msra.mxu0 0
        %1957 = vmatprep.subr.bf16.mxu0 0
        %1958 = vmatpush1.bf16.msra.mxu0 0
        %1959 = vmatprep.subr.bf16.mxu0 0
        %1960 = vmatpush1.bf16.msra.mxu0 0
        %1961 = vmatprep.subr.bf16.mxu0 0
        %1962 = vmatpush1.bf16.msra.mxu0 0
        %1963 = vmatprep.subr.bf16.mxu0 0
        %1964 = vmatpush1.bf16.msra.mxu0 0
        %1965 = vmatprep.subr.bf16.mxu0 0
        %1966 = vmatpush1.bf16.msra.mxu0 0
        %1967 = vmatprep.subr.bf16.mxu0 0
        %1968 = vmatpush1.bf16.msra.mxu0 0
        %1969 = vmatprep.subr.bf16.mxu0 0
        %1970 = vmatpush1.bf16.msra.mxu0 0
        %1971 = vmatprep.subr.bf16.mxu0 0
        %1972 = vmatpush1.bf16.msra.mxu0 0
        %1973 = vmatprep.subr.bf16.mxu0 0
        %1974 = vmatpush1.bf16.msra.mxu0 0
        %1975 = vmatprep.subr.bf16.mxu0 0
        %1976 = vmatpush1.bf16.msra.mxu0 0
        %1977 = vmatprep.subr.bf16.mxu0 0
        %1978 = vmatpush1.bf16.msra.mxu0 0
        %1979 = vmatprep.subr.bf16.mxu0 0
        %1980 = vmatpush1.bf16.msra.mxu0 0
        %1981 = vmatprep.subr.bf16.mxu0 0
        %1982 = vmatpush1.bf16.msra.mxu0 0
        %1983 = vmatprep.mubr.bf16.mxu0 0
        %1984 = vmatmul.mubr.bf16.gmra.mrb[0].mxu0 %v1949
        %v1985 = vpop.f32.mrb[0].mxu0
        %v1986 = vadd.f32 %v1931, %v1985
        %v1987 = vpop.f32.mrb[0].mxu0
        %v1988 = vpop.f32.mrb[0].mxu0
        %v1989 = vpop.f32.mrb[0].mxu0
        %1990 = vdwg.mxu0
        %s1991 = scalar_lea.vmem %s11, 1
        %v1992 = vld [vmem:[%s1991] sm:$0x1]
        %v1994 = vlaneseq
        %v1995 = vshrl.u32 %v1994, 7
        %v1996 = vsub.s32 0, %v1995
        %v1997 = vrot.slane %v1992, %v1996
        %v1999 = vadd.f32 %v1986, %v1997
        %v2000 = vadd.f32 %v1583, %v1999
        %s2001 = scalar_lea.vmem %s12, 1
        %v2002 = vld [vmem:[%s2001] sm:$0x1]
        %s2003 = scalar_lea.vmem %s13, 1
        %v2004 = vld [vmem:[%s2003] sm:$0x1]
        %v2005 = vsel %vm906, %v2000, 0.0
        %2006 = vadd.xlane.f32.xlu0 %v2005
        %v2007 = vpop.xlane.xlu0 %2006
        %v2008 = vmul.f32 %v2007, %v910
        %v2009 = vsub.f32 %v2000, %v2008
        %v2010 = vmul.f32 %v2009, %v2009
        %v2011 = vsel %vm906, %v2010, 0.0
        %2012 = vadd.xlane.f32.xlu0 %v2011
        %v2013 = vpop.xlane.xlu0 %2012
        %v2014 = vmul.f32 %v2013, %v910
        %v2015 = vadd.f32 %v2014, 1e-12
        %v2016 = vrsqrt.pop %v2015
        %v2017 = vmul.f32 %v2009, %v2016
        %v2019 = vlaneseq
        %v2020 = vshrl.u32 %v2019, 7
        %v2021 = vsub.s32 0, %v2020
        %v2022 = vrot.slane %v2002, %v2021
        %v2024 = vmul.f32 %v2017, %v2022
        %v2026 = vlaneseq
        %v2027 = vshrl.u32 %v2026, 7
        %v2028 = vsub.s32 0, %v2027
        %v2029 = vrot.slane %v2004, %v2028
        %v2031 = vadd.f32 %v2024, %v2029
        %v2032 = vpack.c.bf16 %v2031, %v2031
        %s2033 = scalar_lea.vmem [#allocation8], 16
        %v2034 = vld [vmem:[%s2033] sm:$0xf]
        %v2035 = vld [vmem:[%s2033 + $0x4] sm:$0xf]
        %v2036 = vld [vmem:[%s2033 + $0x8] sm:$0xf]
        %v2037 = vld [vmem:[%s2033 + $0xc] sm:$0xf]
        %s2038 = scalar_lea.vmem %s15, 1
        %v2039 = vld [vmem:[%s2038] sm:$0x1]
        %v2041 = vlaneseq
        %v2042 = vshrl.u32 %v2041, 7
        %v2043 = vsub.s32 0, %v2042
        %v2044 = vrot.slane %v2039, %v2043
        %v2050 = vunpack.c.l.b16 %v2034
        %v2051 = vunpack.c.l.b16 %v2035
        %v2052 = vunpack.c.l.b16 %v2036
        %v2053 = vunpack.c.l.b16 %v2037
        %v2054 = vpack.c.b16 %v2051, %v2050
        %v2055 = vpack.c.b16 %v2053, %v2052
        %v2059 = vsel %vm906, %v2032, 0
        %2061 = vmatprep.subr.bf16.mxu0 0
        %2062 = vmatpush1.bf16.msra.mxu0 %v2054
        %2063 = vmatprep.subr.bf16.mxu0 0
        %2064 = vmatpush1.bf16.msra.mxu0 %v2055
        %2065 = vmatprep.subr.bf16.mxu0 0
        %2066 = vmatpush1.bf16.msra.mxu0 0
        %2067 = vmatprep.subr.bf16.mxu0 0
        %2068 = vmatpush1.bf16.msra.mxu0 0
        %2069 = vmatprep.subr.bf16.mxu0 0
        %2070 = vmatpush1.bf16.msra.mxu0 0
        %2071 = vmatprep.subr.bf16.mxu0 0
        %2072 = vmatpush1.bf16.msra.mxu0 0
        %2073 = vmatprep.subr.bf16.mxu0 0
        %2074 = vmatpush1.bf16.msra.mxu0 0
        %2075 = vmatprep.subr.bf16.mxu0 0
        %2076 = vmatpush1.bf16.msra.mxu0 0
        %2077 = vmatprep.subr.bf16.mxu0 0
        %2078 = vmatpush1.bf16.msra.mxu0 0
        %2079 = vmatprep.subr.bf16.mxu0 0
        %2080 = vmatpush1.bf16.msra.mxu0 0
        %2081 = vmatprep.subr.bf16.mxu0 0
        %2082 = vmatpush1.bf16.msra.mxu0 0
        %2083 = vmatprep.subr.bf16.mxu0 0
        %2084 = vmatpush1.bf16.msra.mxu0 0
        %2085 = vmatprep.subr.bf16.mxu0 0
        %2086 = vmatpush1.bf16.msra.mxu0 0
        %2087 = vmatprep.subr.bf16.mxu0 0
        %2088 = vmatpush1.bf16.msra.mxu0 0
        %2089 = vmatprep.subr.bf16.mxu0 0
        %2090 = vmatpush1.bf16.msra.mxu0 0
        %2091 = vmatprep.subr.bf16.mxu0 0
        %2092 = vmatpush1.bf16.msra.mxu0 0
        %2093 = vmatprep.mubr.bf16.mxu0 0
        %2094 = vmatmul.mubr.bf16.gmra.mrb[0].mxu0 %v2059
        %v2095 = vpop.f32.mrb[0].mxu0
        %v2096 = vadd.f32 %v2044, %v2095
        %v2097 = vpop.f32.mrb[0].mxu0
        %v2098 = vpop.f32.mrb[0].mxu0
        %v2099 = vpop.f32.mrb[0].mxu0
        %2100 = vdwg.mxu0
        %v2101 = vmul.f32 %v2096, %v2096
        %v2102 = vmul.f32 %v2096, %v2101
        %v2103 = vmul.f32 %v2102, 0.044715
        %v2104 = vadd.f32 %v2096, %v2103
        %v2105 = vmul.f32 %v2104, 0.7978846
        %v2106 = vtanh.pop %v2105
        %v2107 = vadd.f32 %v2106, 1.0
        %v2108 = vmul.f32 %v2107, 0.5
        %v2109 = vmul.f32 %v2096, %v2108
        %v2110 = vpack.c.bf16 %v2109, %v2109
        %s2111 = scalar_lea.vmem %s16, 32
        %v2112 = vld [vmem:[%s2111] sm:$0xf]
        %v2113 = vld [vmem:[%s2111 + $0x4] sm:$0xf]
        %v2114 = vld [vmem:[%s2111 + $0x8] sm:$0xf]
        %v2115 = vld [vmem:[%s2111 + $0xc] sm:$0xf]
        %v2116 = vld [vmem:[%s2111 + $0x10] sm:$0xf]
        %v2117 = vld [vmem:[%s2111 + $0x14] sm:$0xf]
        %v2118 = vld [vmem:[%s2111 + $0x18] sm:$0xf]
        %v2119 = vld [vmem:[%s2111 + $0x1c] sm:$0xf]
        %s2120 = scalar_lea.vmem %s17, 1
        %v2121 = vld [vmem:[%s2120] sm:$0x1]
        %v2123 = vlaneseq
        %v2124 = vshrl.u32 %v2123, 7
        %v2125 = vsub.s32 0, %v2124
        %v2126 = vrot.slane %v2121, %v2125
        %v2136 = vunpack.c.l.b16 %v2112
        %v2137 = vunpack.c.l.b16 %v2113
        %v2138 = vunpack.c.l.b16 %v2114
        %v2139 = vunpack.c.l.b16 %v2115
        %v2140 = vunpack.c.l.b16 %v2116
        %v2141 = vunpack.c.l.b16 %v2117
        %v2142 = vunpack.c.l.b16 %v2118
        %v2143 = vunpack.c.l.b16 %v2119
        %v2144 = vpack.c.b16 %v2137, %v2136
        %v2145 = vpack.c.b16 %v2139, %v2138
        %v2146 = vpack.c.b16 %v2141, %v2140
        %v2147 = vpack.c.b16 %v2143, %v2142
        %v2153 = vsel %vm1510, %v2110, 0
        %2155 = vmatprep.subr.bf16.mxu0 0
        %2156 = vmatpush1.bf16.msra.mxu0 %v2144
        %2157 = vmatprep.subr.bf16.mxu0 0
        %2158 = vmatpush1.bf16.msra.mxu0 %v2145
        %2159 = vmatprep.subr.bf16.mxu0 0
        %2160 = vmatpush1.bf16.msra.mxu0 %v2146
        %2161 = vmatprep.subr.bf16.mxu0 0
        %2162 = vmatpush1.bf16.msra.mxu0 %v2147
        %2163 = vmatprep.subr.bf16.mxu0 0
        %2164 = vmatpush1.bf16.msra.mxu0 0
        %2165 = vmatprep.subr.bf16.mxu0 0
        %2166 = vmatpush1.bf16.msra.mxu0 0
        %2167 = vmatprep.subr.bf16.mxu0 0
        %2168 = vmatpush1.bf16.msra.mxu0 0
        %2169 = vmatprep.subr.bf16.mxu0 0
        %2170 = vmatpush1.bf16.msra.mxu0 0
        %2171 = vmatprep.subr.bf16.mxu0 0
        %2172 = vmatpush1.bf16.msra.mxu0 0
        %2173 = vmatprep.subr.bf16.mxu0 0
        %2174 = vmatpush1.bf16.msra.mxu0 0
        %2175 = vmatprep.subr.bf16.mxu0 0
        %2176 = vmatpush1.bf16.msra.mxu0 0
        %2177 = vmatprep.subr.bf16.mxu0 0
        %2178 = vmatpush1.bf16.msra.mxu0 0
        %2179 = vmatprep.subr.bf16.mxu0 0
        %2180 = vmatpush1.bf16.msra.mxu0 0
        %2181 = vmatprep.subr.bf16.mxu0 0
        %2182 = vmatpush1.bf16.msra.mxu0 0
        %2183 = vmatprep.subr.bf16.mxu0 0
        %2184 = vmatpush1.bf16.msra.mxu0 0
        %2185 = vmatprep.subr.bf16.mxu0 0
        %2186 = vmatpush1.bf16.msra.mxu0 0
        %2187 = vmatprep.mubr.bf16.mxu0 0
        %2188 = vmatmul.mubr.bf16.gmra.mrb[0].mxu0 %v2153
        %v2189 = vpop.f32.mrb[0].mxu0
        %v2190 = vadd.f32 %v2126, %v2189
        %v2191 = vpop.f32.mrb[0].mxu0
        %v2192 = vpop.f32.mrb[0].mxu0
        %v2193 = vpop.f32.mrb[0].mxu0
        %2194 = vdwg.mxu0
        %v2195 = vadd.f32 %v2031, %v2190
        %s2196 = scalar_lea.vmem %s18, 1
        %v2197 = vld [vmem:[%s2196] sm:$0x1]
        %s2198 = scalar_lea.vmem %s19, 1
        %v2199 = vld [vmem:[%s2198] sm:$0x1]
        %v2200 = vsel %vm906, %v2195, 0.0
        %2201 = vadd.xlane.f32.xlu0 %v2200
        %v2202 = vpop.xlane.xlu0 %2201
        %v2203 = vmul.f32 %v2202, %v910
        %v2204 = vsub.f32 %v2195, %v2203
        %v2205 = vmul.f32 %v2204, %v2204
        %v2206 = vsel %vm906, %v2205, 0.0
        %2207 = vadd.xlane.f32.xlu0 %v2206
        %v2208 = vpop.xlane.xlu0 %2207
        %v2209 = vmul.f32 %v2208, %v910
        %v2210 = vadd.f32 %v2209, 1e-12
        %v2211 = vrsqrt.pop %v2210
        %v2212 = vmul.f32 %v2204, %v2211
        %v2214 = vlaneseq
        %v2215 = vshrl.u32 %v2214, 7
        %v2216 = vsub.s32 0, %v2215
        %v2217 = vrot.slane %v2197, %v2216
        %v2219 = vmul.f32 %v2212, %v2217
        %v2221 = vlaneseq
        %v2222 = vshrl.u32 %v2221, 7
        %v2223 = vsub.s32 0, %v2222
        %v2224 = vrot.slane %v2199, %v2223
        %v2226 = vadd.f32 %v2219, %v2224
        %v2227 = vpack.c.bf16 %v2226, %v2226
        %v2228 = vld [vmem:[%s20] sm:$0xf]
        %v2229 = vld [vmem:[%s20 + $0x4] sm:$0xf]
        %v2230 = vld [vmem:[%s20 + $0x8] sm:$0xf]
        %v2231 = vld [vmem:[%s20 + $0xc] sm:$0xf]
        %v2232 = vld [vmem:[%s21] sm:$0x1]
        %v2237 = vunpack.c.l.b16 %v2228
        %v2238 = vunpack.c.l.b16 %v2229
        %v2239 = vunpack.c.l.b16 %v2230
        %v2240 = vunpack.c.l.b16 %v2231
        %v2241 = vpack.c.b16 %v2238, %v2237
        %v2242 = vpack.c.b16 %v2240, %v2239
        %v2246 = vsel %vm906, %v2227, 0
        %2248 = vmatprep.subr.bf16.mxu0 0
        %2249 = vmatpush1.bf16.msra.mxu0 %v2241
        %2250 = vmatprep.subr.bf16.mxu0 0
        %2251 = vmatpush1.bf16.msra.mxu0 %v2242
        %2252 = vmatprep.subr.bf16.mxu0 0
        %2253 = vmatpush1.bf16.msra.mxu0 0
        %2254 = vmatprep.subr.bf16.mxu0 0
        %2255 = vmatpush1.bf16.msra.mxu0 0
        %2256 = vmatprep.subr.bf16.mxu0 0
        %2257 = vmatpush1.bf16.msra.mxu0 0
        %2258 = vmatprep.subr.bf16.mxu0 0
        %2259 = vmatpush1.bf16.msra.mxu0 0
        %2260 = vmatprep.subr.bf16.mxu0 0
        %2261 = vmatpush1.bf16.msra.mxu0 0
        %2262 = vmatprep.subr.bf16.mxu0 0
        %2263 = vmatpush1.bf16.msra.mxu0 0
        %2264 = vmatprep.subr.bf16.mxu0 0
        %2265 = vmatpush1.bf16.msra.mxu0 0
        %2266 = vmatprep.subr.bf16.mxu0 0
        %2267 = vmatpush1.bf16.msra.mxu0 0
        %2268 = vmatprep.subr.bf16.mxu0 0
        %2269 = vmatpush1.bf16.msra.mxu0 0
        %2270 = vmatprep.subr.bf16.mxu0 0
        %2271 = vmatpush1.bf16.msra.mxu0 0
        %2272 = vmatprep.subr.bf16.mxu0 0
        %2273 = vmatpush1.bf16.msra.mxu0 0
        %2274 = vmatprep.subr.bf16.mxu0 0
        %2275 = vmatpush1.bf16.msra.mxu0 0
        %2276 = vmatprep.subr.bf16.mxu0 0
        %2277 = vmatpush1.bf16.msra.mxu0 0
        %2278 = vmatprep.subr.bf16.mxu0 0
        %2279 = vmatpush1.bf16.msra.mxu0 0
        %2280 = vmatprep.mubr.bf16.mxu0 0
        %2281 = vmatmul.mubr.bf16.gmra.mrb[0].mxu0 %v2246
        %v2282 = vpop.f32.mrb[0].mxu0
        %v2283 = vadd.f32 %v2232, %v2282
        %v2284 = vpop.f32.mrb[0].mxu0
        %v2285 = vpop.f32.mrb[0].mxu0
        %v2286 = vpop.f32.mrb[0].mxu0
        %2287 = vdwg.mxu0
        %2288 = vst [vmem:[%s754] sm:$0x1] %v2283
        %s2289 = sand.u32 %s524, 1
        %s2290 = scalar_lea.sflag [#allocation4], %s2289
        %s2291 = sand.u32 %s524, 1
        %s2292 = scalar_lea.vmem [#allocation10], %s2291
        // Predicated region
        $region125: #{_lambda_.1} parent=107 // pred_check
          %p2293 = pneg %p534
        $region126: #{_lambda_.1} parent=107 // pred_check_branch
          %2295 = sbr.rel (%p2293) target = $region128
        $region127: #{_lambda_.1} parent=107 // pred_region
          %s2297 = ssub.s32 16, 16
          %2298 = vsyncadd %s2290, %s2297
          %s2299 = smul.addr %s39, 16
          %s2300 = scalar_lea.hbm %s22, %s2299
          %s2302 = sshll.u32 %s2292, 4
          %s2303 = int_to_ptr.vmem [resolvable:$true] %s2302
          %2305 = dma.vmem_to_hbm [thread:$0]  %s2303, 16, %s2300, %s2290
        $region128: #{_lambda_.1} parent=107 // pred_fallthru
          _
      $region108: #{_lambda_.1} parent=5 // pred_fallthru
        _
      %p2306 = scmp.le.s32.totalorder 2, %s34
      // Predicated region
      $region129: #{_lambda_.1} parent=5 // pred_check
        %p2307 = pneg %p2306
      $region130: #{_lambda_.1} parent=5 // pred_check_branch
        %2309 = sbr.rel (%p2307) target = $region132
      $region131: #{_lambda_.1} parent=5 // pred_region
        %s2310 = ssub.s32 %s34, 2
        // Predicated region
        $region133: #{_lambda_.1} parent=131 // pred_check
          %p2311 = pneg %p540
        $region134: #{_lambda_.1} parent=131 // pred_check_branch
          %2313 = sbr.rel (%p2311) target = $region136
        $region135: #{_lambda_.1} parent=131 // pred_region
          %s2314 = sand.u32 %s525, 1
          %s2315 = scalar_lea.sflag [#allocation4], %s2314
          %s2316 = sand.u32 %s525, 1
          %s2317 = scalar_lea.vmem [#allocation10], %s2316
          %2318 = dma.done %s2315, 16
        $region136: #{_lambda_.1} parent=131 // pred_fallthru
          _
      $region132: #{_lambda_.1} parent=5 // pred_fallthru
        _
    $region6: #{_lambda_.1} parent=1 // loop_footer
      %s38 = sadd.s32 1, %s34
    $region7: #{_lambda_.1} parent=1 // loop_footer_branch
      %33 = sbr.rel target = $region3
    $region8: #{_lambda_.1} parent=1 // loop_exit
      _
    %2319 = vsyncpa [#allocation3], 1
    %s2320 = scalar_lea.sflag [#allocation3], 1
    %2321 = vsyncpa %s2320, 1
    %2322 = vsyncpa [#allocation6], 1
    %2323 = vsyncpa [#allocation9], 1
    %2324 = vsyncpa [#allocation4], 1
    %s2325 = scalar_lea.sflag [#allocation4], 1
    %2326 = vsyncpa %s2325, 1

</llo_original>
